<compile_context>
chip_gen: v7x
topology: tpu7x:2x2x1
jax: 0.10.0
libtpu: 0.0.40
codegen_flags: <defaults>
</compile_context>

<pallas_src>
import functools

import numpy as np
import jax
import jax.numpy as jnp
from jax.experimental import pallas as pl
from jax.experimental.pallas import tpu as pltpu


def _round_up(v, m):
    return (v + m - 1) // m * m


def _make_kernel(HW, Cpad, Cout8):
    inv_hw = 1.0 / HW

    def kernel(p_ref, wc_ref, bc_ref, wg_ref, bg_ref, wfc1_ref, wfc2_ref,
               sat_ref, o_ref):
        # ---- three dilated 3x3 convs: one bf16 MXU matmul, f32 accumulate ----
        y = jnp.dot(p_ref[0], wc_ref[...],
                    preferred_element_type=jnp.float32)          # (HW, 3*Cpad)
        edge_all = jnp.maximum(y + bc_ref[...], 0.0)             # bias + ReLU
        edge_x = edge_all[:, 0 * Cpad:1 * Cpad]                  # vreg-aligned
        edge_y = edge_all[:, 1 * Cpad:2 * Cpad]
        edge_z = edge_all[:, 2 * Cpad:3 * Cpad]

        # ---- 1x1 gating conv + 3-way softmax (single exp over 3-lane slab) ----
        g = jnp.dot(edge_all, wg_ref[...],
                    preferred_element_type=jnp.float32) + bg_ref[...]   # (HW, 8)
        g3 = g[:, 0:3]
        gm = jnp.maximum(jnp.maximum(g[:, 0:1], g[:, 1:2]), g[:, 2:3])  # (HW, 1)
        e = jnp.exp(g3 - gm)                                            # one EUP pass
        inv_den = pl.reciprocal(e[:, 0:1] + e[:, 1:2] + e[:, 2:3], approx=True)
        enhanced = (e[:, 0:1] * edge_x + e[:, 1:2] * edge_y
                    + e[:, 2:3] * edge_z) * inv_den               # (HW, Cpad), >= 0

        # ---- CBAM channel attention (padded lanes stay exactly zero) ----
        avg_c = jnp.sum(enhanced, axis=0, keepdims=True) * inv_hw       # (1, Cpad)
        max_c = jnp.max(enhanced, axis=0, keepdims=True)                # (1, Cpad)
        pooled = jnp.concatenate([avg_c, max_c], axis=0)                # (2, Cpad)
        hid = jnp.maximum(
            jnp.dot(pooled, wfc1_ref[...], preferred_element_type=jnp.float32), 0.0)
        zz = jnp.dot(hid, wfc2_ref[...], preferred_element_type=jnp.float32)
        ca = pl.reciprocal(1.0 + jnp.exp(-(zz[0:1, :] + zz[1:2, :])), approx=True)
        out1 = enhanced * ca                                            # (HW, Cpad), >= 0

        # ---- single XLU transpose to channel-major for the rest ----
        out1_t = jnp.transpose(out1)                                    # (Cpad, HW)

        # ---- CBAM spatial attention: fused lane-dense bf16 matmul ----
        # Channel mean: 1/Cout is folded into sat (padded rows are zero so the
        # sum is exact).  Channel max over the zero padded rows is only safe
        # because out1 >= 0 (ReLU * softmax * sigmoid) -- keep that invariant.
        sum_s = jnp.sum(out1_t, axis=0, keepdims=True)                  # (1, HW)
        max_s = jnp.max(out1_t, axis=0, keepdims=True)                  # (1, HW)
        pooled_s = jnp.concatenate([sum_s, max_s], axis=1).astype(jnp.bfloat16)
        sa_lin = jnp.dot(pooled_s, sat_ref[...],
                         preferred_element_type=jnp.float32)            # (1, HW)
        sa = pl.reciprocal(1.0 + jnp.exp(-sa_lin), approx=True)         # sigmoid

        # channel-major unmasked store: (Cout8, HW), no 4x write amplification
        o_ref[0] = (out1_t[:Cout8, :] * sa).astype(o_ref.dtype)

    return kernel


def _spatial_operator(w7, H, W):
    """Dense (HW, HW) operator applying a 7x7 conv tap-set w7 with padding=3."""
    HW = H * W
    op = np.zeros((HW, HW), np.float32)
    for ky in range(7):
        for kx in range(7):
            wv = float(w7[ky, kx])
            for h in range(H):
                hh = h + ky - 3
                if hh < 0 or hh >= H:
                    continue
                for w in range(W):
                    ww = w + kx - 3
                    if 0 <= ww < W:
                        op[h * W + w, hh * W + ww] += wv
    return op


def init_params(key, in_channels, out_channels, ratio=16):
    """Deterministic synthetic parameters, stored in PyTorch (OIHW) layout."""
    cr = max(out_channels // ratio, 1)
    keys = jax.random.split(key, 11)

    def nrm(k, shape, scale=0.1):
        return (scale * jax.random.normal(k, shape)).astype(jnp.float32)

    return {
        "w1": nrm(keys[0], (out_channels, in_channels, 3, 3)),
        "b1": nrm(keys[1], (out_channels,)),
        "w2": nrm(keys[2], (out_channels, in_channels, 3, 3)),
        "b2": nrm(keys[3], (out_channels,)),
        "w3": nrm(keys[4], (out_channels, in_channels, 3, 3)),
        "b3": nrm(keys[5], (out_channels,)),
        "wg": nrm(keys[6], (3, out_channels * 3, 1, 1)),
        "bg": nrm(keys[7], (3,)),
        "wfc1": nrm(keys[8], (cr, out_channels, 1, 1)),
        "wfc2": nrm(keys[9], (out_channels, cr, 1, 1)),
        "wsa": nrm(keys[10], (1, 2, 7, 7)),
    }


def pack_params(params, in_channels, out_channels, H, W):
    """One-time host-side packing of PyTorch-layout weights into kernel layouts."""
    Cin, Cout = in_channels, out_channels
    Cpad = _round_up(Cout, 128)            # lane-dense channel padding
    Cr = params["wfc1"].shape[0]
    Crp = _round_up(Cr, 8)
    K = 27 * Cin                           # 3 dilations x 9 taps x Cin
    Kpad = _round_up(K, 128)               # MXU-friendly contraction depth

    p = {k: np.asarray(v, np.float32) for k, v in params.items()}

    # block-diagonal im2col weight (zero-padded to Cpad output lanes, Kpad depth)
    wc = np.zeros((Kpad, 3 * Cpad), np.float32)
    bc = np.zeros((1, 3 * Cpad), np.float32)
    for i, (wk, bk) in enumerate((("w1", "b1"), ("w2", "b2"), ("w3", "b3"))):
        wpack = np.transpose(p[wk], (2, 3, 1, 0)).reshape(9 * Cin, Cout)
        wc[i * 9 * Cin:(i + 1) * 9 * Cin, i * Cpad:i * Cpad + Cout] = wpack
        bc[0, i * Cpad:i * Cpad + Cout] = p[bk]

    wg2 = p["wg"][:, :, 0, 0]              # (3, 3*Cout)
    wg = np.zeros((3 * Cpad, 8), np.float32)
    for i in range(3):
        wg[i * Cpad:i * Cpad + Cout, 0:3] = wg2[:, i * Cout:(i + 1) * Cout].T
    bg = np.zeros((1, 8), np.float32)
    bg[0, 0:3] = p["bg"]

    wfc1 = np.zeros((Cpad, Crp), np.float32)
    wfc1[:Cout, :Cr] = p["wfc1"][:, :, 0, 0].T
    wfc2 = np.zeros((Crp, Cpad), np.float32)
    wfc2[:Cr, :Cout] = p["wfc2"][:, :, 0, 0].T

    # 7x7 spatial-attention conv as a fused transposed dense operator:
    #   sa_lin_row = [sum_s | max_s] (1, 2HW) @ [la.T/Cout ; lm.T] (2HW, HW)
    la = _spatial_operator(p["wsa"][0, 0], H, W)
    lm = _spatial_operator(p["wsa"][0, 1], H, W)
    sat = np.concatenate([la.T / float(Cout), lm.T], axis=0)   # (2*HW, HW)

    return {
        "wc": jnp.asarray(wc, jnp.bfloat16),
        "bc": jnp.asarray(bc),
        "wg": jnp.asarray(wg),
        "bg": jnp.asarray(bg),
        "wfc1": jnp.asarray(wfc1),
        "wfc2": jnp.asarray(wfc2),
        "sat": jnp.asarray(sat, jnp.bfloat16),
    }


@functools.partial(jax.jit, static_argnames=("cout",))
def adaptive_edge_connector(x_nchw, packed, *, cout):
    """Pallas forward pass.  x_nchw: (B, Cin, H, W) f32 -> (B, Cout, H, W) f32."""
    B, Cin, H, W = x_nchw.shape
    HW = H * W
    Kpad = packed["wc"].shape[0]
    Cpad = packed["wc"].shape[1] // 3
    Cout8 = _round_up(cout, 8)
    K = 27 * Cin

    # ---- glue: bf16 im2col patches (covers dilation/padding 1, 2, 3) ----
    x = jnp.transpose(x_nchw, (0, 2, 3, 1)).astype(jnp.bfloat16)        # NHWC bf16
    x_pad = jnp.pad(x, ((0, 0), (3, 3), (3, 3), (0, 0)))                # (B, H+6, W+6, Cin)
    slabs = []
    for d in (1, 2, 3):
        for ky in range(3):
            for kx in range(3):
                oy = 3 + (ky - 1) * d
                ox = 3 + (kx - 1) * d
                slabs.append(x_pad[:, oy:oy + H, ox:ox + W, :])
    patches = jnp.concatenate(slabs, axis=-1).reshape(B, HW, K)
    patches = jnp.pad(patches, ((0, 0), (0, 0), (0, Kpad - K)))          # (B, HW, Kpad)

    kernel = _make_kernel(HW, Cpad, Cout8)

    def fullmap(arr):
        nd = arr.ndim
        return pl.BlockSpec(arr.shape, lambda b, _nd=nd: (0,) * _nd)

    out = pl.pallas_call(
        kernel,
        out_shape=jax.ShapeDtypeStruct((B, Cout8, HW), jnp.float32),
        grid_spec=pltpu.PrefetchScalarGridSpec(
            num_scalar_prefetch=0,
            grid=(B,),
            in_specs=[
                pl.BlockSpec((1, HW, Kpad), lambda b: (b, 0, 0)),
                fullmap(packed["wc"]), fullmap(packed["bc"]),
                fullmap(packed["wg"]), fullmap(packed["bg"]),
                fullmap(packed["wfc1"]), fullmap(packed["wfc2"]),
                fullmap(packed["sat"]),
            ],
            out_specs=pl.BlockSpec((1, Cout8, HW), lambda b: (b, 0, 0)),
        ),
        compiler_params=pltpu.CompilerParams(
            dimension_semantics=("parallel",),
            vmem_limit_bytes=64 * 1024 * 1024),
    )(patches, packed["wc"], packed["bc"], packed["wg"], packed["bg"],
      packed["wfc1"], packed["wfc2"], packed["sat"])

    # channel-major kernel output -> NCHW needs only an (almost) free reshape
    return out[:, :cout, :].reshape(B, cout, H, W)


# ---------------- pure-JAX reference (for verification only) ----------------
def reference_forward(x, p):
    hp = jax.lax.Precision.HIGHEST

    def conv(x, w, b, dilation, padding):
        y = jax.lax.conv_general_dilated(
            x, w, window_strides=(1, 1),
            padding=((padding, padding), (padding, padding)),
            rhs_dilation=(dilation, dilation),
            dimension_numbers=("NCHW", "OIHW", "NCHW"),
            precision=hp)
        if b is not None:
            y = y + b[None, :, None, None]
        return y

    ex = jax.nn.relu(conv(x, p["w1"], p["b1"], 1, 1))
    ey = jax.nn.relu(conv(x, p["w2"], p["b2"], 2, 2))
    ez = jax.nn.relu(conv(x, p["w3"], p["b3"], 3, 3))
    comb = jnp.concatenate([ex, ey, ez], axis=1)
    gates = jax.nn.softmax(conv(comb, p["wg"], p["bg"], 1, 0), axis=1)
    enhanced = gates[:, 0:1] * ex + gates[:, 1:2] * ey + gates[:, 2:3] * ez

    avg = jnp.mean(enhanced, axis=(2, 3), keepdims=True)
    mx = jnp.max(enhanced, axis=(2, 3), keepdims=True)

    def mlp(v):
        h = jax.nn.relu(conv(v, p["wfc1"], None, 1, 0))
        return conv(h, p["wfc2"], None, 1, 0)

    ca = jax.nn.sigmoid(mlp(avg) + mlp(mx))
    out1 = ca * enhanced
    avg_s = jnp.mean(out1, axis=1, keepdims=True)
    max_s = jnp.max(out1, axis=1, keepdims=True)
    cat = jnp.concatenate([avg_s, max_s], axis=1)
    sa = jax.nn.sigmoid(conv(cat, p["wsa"], None, 1, 3))
    return sa * out1


if __name__ == "__main__":
    B, Cin, H, W = 2, 4, 16, 16
    Cout = 32  # >= ratio(=16) so ChannelAttention hidden width = Cout // 16 = 2

    key = jax.random.PRNGKey(0)
    kx, kp = jax.random.split(key)
    x = jax.random.normal(kx, (B, Cin, H, W), dtype=jnp.float32)
    params = init_params(kp, Cin, Cout, ratio=16)

    # one-time, host-side weight packing (hoisted out of the jitted forward)
    packed = pack_params(params, Cin, Cout, H, W)

    out = adaptive_edge_connector(x, packed, cout=Cout)
    out = jax.block_until_ready(out)

    ref = jax.block_until_ready(reference_forward(x, params))
    assert out.shape == (B, Cout, H, W), out.shape
    max_err = float(jnp.max(jnp.abs(out - ref)))
    assert max_err < 2e-2, f"max abs error vs reference: {max_err}"

    print("KERNEL_OK")
</pallas_src>

<mosaic_0001>
module attributes {stable_mosaic.version = 11 : i64} {
  func.func @kernel(%arg0: i32, %arg1: memref<1x256x128xbf16, #tpu.memory_space<vmem>>, %arg2: memref<128x384xbf16, #tpu.memory_space<vmem>>, %arg3: memref<1x384xf32, #tpu.memory_space<vmem>>, %arg4: memref<384x8xf32, #tpu.memory_space<vmem>>, %arg5: memref<1x8xf32, #tpu.memory_space<vmem>>, %arg6: memref<128x8xf32, #tpu.memory_space<vmem>>, %arg7: memref<8x128xf32, #tpu.memory_space<vmem>>, %arg8: memref<512x256xbf16, #tpu.memory_space<vmem>>, %arg9: memref<1x32x256xf32, #tpu.memory_space<vmem>>) attributes {dimension_semantics = [#tpu.dimension_semantics<parallel>], iteration_bounds = array<i64: 2>, scalar_prefetch = 0 : i64, scratch_operands = 0 : i64, tpu.core_type = #tpu.core_type<tc>, window_params = [{transform_indices = @transform_0, window_bounds = array<i64: 1, 256, 128>}, {pipeline_mode = #tpu.pipeline_mode<synchronous>, transform_indices = @transform_1, window_bounds = array<i64: 128, 384>}, {pipeline_mode = #tpu.pipeline_mode<synchronous>, transform_indices = @transform_2, window_bounds = array<i64: 1, 384>}, {pipeline_mode = #tpu.pipeline_mode<synchronous>, transform_indices = @transform_3, window_bounds = array<i64: 384, 8>}, {pipeline_mode = #tpu.pipeline_mode<synchronous>, transform_indices = @transform_4, window_bounds = array<i64: 1, 8>}, {pipeline_mode = #tpu.pipeline_mode<synchronous>, transform_indices = @transform_5, window_bounds = array<i64: 128, 8>}, {pipeline_mode = #tpu.pipeline_mode<synchronous>, transform_indices = @transform_6, window_bounds = array<i64: 8, 128>}, {pipeline_mode = #tpu.pipeline_mode<synchronous>, transform_indices = @transform_7, window_bounds = array<i64: 512, 256>}, {transform_indices = @transform_8, window_bounds = array<i64: 1, 32, 256>}]} {
    %c0 = arith.constant 0 : index
    %c0_0 = arith.constant 0 : index
    %c0_1 = arith.constant 0 : index
    %0 = vector.load %arg1[%c0, %c0_0, %c0_1] : memref<1x256x128xbf16, #tpu.memory_space<vmem>>, vector<1x256x128xbf16>
    %1 = vector.shape_cast %0 : vector<1x256x128xbf16> to vector<256x128xbf16>
    %c0_2 = arith.constant 0 : index
    %c0_3 = arith.constant 0 : index
    %2 = vector.load %arg2[%c0_2, %c0_3] : memref<128x384xbf16, #tpu.memory_space<vmem>>, vector<128x384xbf16>
    %cst = arith.constant dense<0.000000e+00> : vector<256x384xf32>
    %3 = tpu.matmul %1, %2, %cst {dimension_numbers = #tpu.dot_dimension_numbers<[1], [0], [0], [1], [0, 0, 1, 1], [], []>} : vector<256x128xbf16>, vector<128x384xbf16>, vector<256x384xf32> -> vector<256x384xf32>
    %c0_4 = arith.constant 0 : index
    %c0_5 = arith.constant 0 : index
    %4 = vector.load %arg3[%c0_4, %c0_5] : memref<1x384xf32, #tpu.memory_space<vmem>>, vector<1x384xf32>
    %5 = vector.broadcast %4 : vector<1x384xf32> to vector<256x384xf32>
    %6 = arith.addf %3, %5 : vector<256x384xf32>
    %cst_6 = arith.constant 0.000000e+00 : f32
    %7 = vector.broadcast %cst_6 : f32 to vector<256x384xf32>
    %8 = arith.maximumf %6, %7 : vector<256x384xf32>
    %9 = vector.extract_strided_slice %8 {offsets = [0, 0], sizes = [256, 128], strides = [1, 1]} : vector<256x384xf32> to vector<256x128xf32>
    %10 = vector.extract_strided_slice %8 {offsets = [0, 128], sizes = [256, 128], strides = [1, 1]} : vector<256x384xf32> to vector<256x128xf32>
    %11 = vector.extract_strided_slice %8 {offsets = [0, 256], sizes = [256, 128], strides = [1, 1]} : vector<256x384xf32> to vector<256x128xf32>
    %c0_7 = arith.constant 0 : index
    %c0_8 = arith.constant 0 : index
    %12 = vector.load %arg4[%c0_7, %c0_8] : memref<384x8xf32, #tpu.memory_space<vmem>>, vector<384x8xf32>
    %cst_9 = arith.constant dense<0.000000e+00> : vector<256x8xf32>
    %13 = tpu.matmul %8, %12, %cst_9 {dimension_numbers = #tpu.dot_dimension_numbers<[1], [0], [0], [1], [0, 0, 1, 1], [], []>} : vector<256x384xf32>, vector<384x8xf32>, vector<256x8xf32> -> vector<256x8xf32>
    %c0_10 = arith.constant 0 : index
    %c0_11 = arith.constant 0 : index
    %14 = vector.load %arg5[%c0_10, %c0_11] : memref<1x8xf32, #tpu.memory_space<vmem>>, vector<1x8xf32>
    %15 = vector.broadcast %14 : vector<1x8xf32> to vector<256x8xf32>
    %16 = arith.addf %13, %15 : vector<256x8xf32>
    %17 = vector.extract_strided_slice %16 {offsets = [0, 0], sizes = [256, 3], strides = [1, 1]} : vector<256x8xf32> to vector<256x3xf32>
    %18 = vector.extract_strided_slice %16 {offsets = [0, 0], sizes = [256, 1], strides = [1, 1]} : vector<256x8xf32> to vector<256x1xf32>
    %19 = vector.extract_strided_slice %16 {offsets = [0, 1], sizes = [256, 1], strides = [1, 1]} : vector<256x8xf32> to vector<256x1xf32>
    %20 = arith.maximumf %18, %19 : vector<256x1xf32>
    %21 = vector.extract_strided_slice %16 {offsets = [0, 2], sizes = [256, 1], strides = [1, 1]} : vector<256x8xf32> to vector<256x1xf32>
    %22 = arith.maximumf %20, %21 : vector<256x1xf32>
    %23 = vector.broadcast %22 : vector<256x1xf32> to vector<256x3xf32>
    %24 = arith.subf %17, %23 : vector<256x3xf32>
    %25 = math.exp %24 : vector<256x3xf32>
    %26 = vector.extract_strided_slice %25 {offsets = [0, 0], sizes = [256, 1], strides = [1, 1]} : vector<256x3xf32> to vector<256x1xf32>
    %27 = vector.extract_strided_slice %25 {offsets = [0, 1], sizes = [256, 1], strides = [1, 1]} : vector<256x3xf32> to vector<256x1xf32>
    %28 = arith.addf %26, %27 : vector<256x1xf32>
    %29 = vector.extract_strided_slice %25 {offsets = [0, 2], sizes = [256, 1], strides = [1, 1]} : vector<256x3xf32> to vector<256x1xf32>
    %30 = arith.addf %28, %29 : vector<256x1xf32>
    %31 = tpu.reciprocal %30 {approx = true} : vector<256x1xf32> -> vector<256x1xf32>
    %32 = vector.extract_strided_slice %25 {offsets = [0, 0], sizes = [256, 1], strides = [1, 1]} : vector<256x3xf32> to vector<256x1xf32>
    %33 = vector.broadcast %32 : vector<256x1xf32> to vector<256x128xf32>
    %34 = arith.mulf %33, %9 : vector<256x128xf32>
    %35 = vector.extract_strided_slice %25 {offsets = [0, 1], sizes = [256, 1], strides = [1, 1]} : vector<256x3xf32> to vector<256x1xf32>
    %36 = vector.broadcast %35 : vector<256x1xf32> to vector<256x128xf32>
    %37 = arith.mulf %36, %10 : vector<256x128xf32>
    %38 = arith.addf %34, %37 : vector<256x128xf32>
    %39 = vector.extract_strided_slice %25 {offsets = [0, 2], sizes = [256, 1], strides = [1, 1]} : vector<256x3xf32> to vector<256x1xf32>
    %40 = vector.broadcast %39 : vector<256x1xf32> to vector<256x128xf32>
    %41 = arith.mulf %40, %11 : vector<256x128xf32>
    %42 = arith.addf %38, %41 : vector<256x128xf32>
    %43 = vector.broadcast %31 : vector<256x1xf32> to vector<256x128xf32>
    %44 = arith.mulf %42, %43 : vector<256x128xf32>
    %cst_12 = arith.constant dense<0.000000e+00> : vector<128xf32>
    %45 = vector.multi_reduction <add>, %44, %cst_12 [0] : vector<256x128xf32> to vector<128xf32>
    %46 = vector.shape_cast %45 : vector<128xf32> to vector<1x128xf32>
    %cst_13 = arith.constant 3.906250e-03 : f32
    %47 = vector.broadcast %cst_13 : f32 to vector<1x128xf32>
    %48 = arith.mulf %46, %47 : vector<1x128xf32>
    %cst_14 = arith.constant dense<0xFF800000> : vector<128xf32>
    %49 = vector.multi_reduction <maximumf>, %44, %cst_14 [0] : vector<256x128xf32> to vector<128xf32>
    %50 = vector.shape_cast %49 : vector<128xf32> to vector<1x128xf32>
    %51 = tpu.concatenate %48, %50 in 0 : vector<1x128xf32>, vector<1x128xf32> -> vector<2x128xf32>
    %c0_15 = arith.constant 0 : index
    %c0_16 = arith.constant 0 : index
    %52 = vector.load %arg6[%c0_15, %c0_16] : memref<128x8xf32, #tpu.memory_space<vmem>>, vector<128x8xf32>
    %cst_17 = arith.constant dense<0.000000e+00> : vector<2x8xf32>
    %53 = tpu.matmul %51, %52, %cst_17 {dimension_numbers = #tpu.dot_dimension_numbers<[1], [0], [0], [1], [0, 0, 1, 1], [], []>} : vector<2x128xf32>, vector<128x8xf32>, vector<2x8xf32> -> vector<2x8xf32>
    %cst_18 = arith.constant 0.000000e+00 : f32
    %54 = vector.broadcast %cst_18 : f32 to vector<2x8xf32>
    %55 = arith.maximumf %53, %54 : vector<2x8xf32>
    %c0_19 = arith.constant 0 : index
    %c0_20 = arith.constant 0 : index
    %56 = vector.load %arg7[%c0_19, %c0_20] : memref<8x128xf32, #tpu.memory_space<vmem>>, vector<8x128xf32>
    %cst_21 = arith.constant dense<0.000000e+00> : vector<2x128xf32>
    %57 = tpu.matmul %55, %56, %cst_21 {dimension_numbers = #tpu.dot_dimension_numbers<[1], [0], [0], [1], [0, 0, 1, 1], [], []>} : vector<2x8xf32>, vector<8x128xf32>, vector<2x128xf32> -> vector<2x128xf32>
    %58 = vector.extract_strided_slice %57 {offsets = [0, 0], sizes = [1, 128], strides = [1, 1]} : vector<2x128xf32> to vector<1x128xf32>
    %59 = vector.extract_strided_slice %57 {offsets = [1, 0], sizes = [1, 128], strides = [1, 1]} : vector<2x128xf32> to vector<1x128xf32>
    %60 = arith.addf %58, %59 : vector<1x128xf32>
    %cst_22 = arith.constant 0.000000e+00 : f32
    %61 = vector.broadcast %cst_22 : f32 to vector<1x128xf32>
    %62 = arith.subf %61, %60 : vector<1x128xf32>
    %63 = math.exp %62 : vector<1x128xf32>
    %cst_23 = arith.constant 1.000000e+00 : f32
    %64 = vector.broadcast %cst_23 : f32 to vector<1x128xf32>
    %65 = arith.addf %64, %63 : vector<1x128xf32>
    %66 = tpu.reciprocal %65 {approx = true} : vector<1x128xf32> -> vector<1x128xf32>
    %67 = vector.broadcast %66 : vector<1x128xf32> to vector<256x128xf32>
    %68 = arith.mulf %44, %67 : vector<256x128xf32>
    %69 = tpu.transpose %68, [1, 0] : vector<256x128xf32> -> vector<128x256xf32>
    %cst_24 = arith.constant dense<0.000000e+00> : vector<256xf32>
    %70 = vector.multi_reduction <add>, %69, %cst_24 [0] : vector<128x256xf32> to vector<256xf32>
    %71 = vector.shape_cast %70 : vector<256xf32> to vector<1x256xf32>
    %cst_25 = arith.constant dense<0xFF800000> : vector<256xf32>
    %72 = vector.multi_reduction <maximumf>, %69, %cst_25 [0] : vector<128x256xf32> to vector<256xf32>
    %73 = vector.shape_cast %72 : vector<256xf32> to vector<1x256xf32>
    %74 = tpu.concatenate %71, %73 in 1 : vector<1x256xf32>, vector<1x256xf32> -> vector<1x512xf32>
    %75 = arith.truncf %74 : vector<1x512xf32> to vector<1x512xbf16>
    %c0_26 = arith.constant 0 : index
    %c0_27 = arith.constant 0 : index
    %76 = vector.load %arg8[%c0_26, %c0_27] : memref<512x256xbf16, #tpu.memory_space<vmem>>, vector<512x256xbf16>
    %cst_28 = arith.constant dense<0.000000e+00> : vector<1x256xf32>
    %77 = tpu.matmul %75, %76, %cst_28 {dimension_numbers = #tpu.dot_dimension_numbers<[1], [0], [0], [1], [0, 0, 1, 1], [], []>} : vector<1x512xbf16>, vector<512x256xbf16>, vector<1x256xf32> -> vector<1x256xf32>
    %cst_29 = arith.constant 0.000000e+00 : f32
    %78 = vector.broadcast %cst_29 : f32 to vector<1x256xf32>
    %79 = arith.subf %78, %77 : vector<1x256xf32>
    %80 = math.exp %79 : vector<1x256xf32>
    %cst_30 = arith.constant 1.000000e+00 : f32
    %81 = vector.broadcast %cst_30 : f32 to vector<1x256xf32>
    %82 = arith.addf %81, %80 : vector<1x256xf32>
    %83 = tpu.reciprocal %82 {approx = true} : vector<1x256xf32> -> vector<1x256xf32>
    %84 = vector.extract_strided_slice %69 {offsets = [0, 0], sizes = [32, 256], strides = [1, 1]} : vector<128x256xf32> to vector<32x256xf32>
    %85 = vector.broadcast %83 : vector<1x256xf32> to vector<32x256xf32>
    %86 = arith.mulf %84, %85 : vector<32x256xf32>
    %c0_31 = arith.constant 0 : index
    %c0_32 = arith.constant 0 : index
    %c0_33 = arith.constant 0 : index
    %87 = vector.load %arg9[%c0_31, %c0_32, %c0_33] : memref<1x32x256xf32, #tpu.memory_space<vmem>>, vector<1x32x256xf32>
    %88 = vector.shape_cast %87 : vector<1x32x256xf32> to vector<32x256xf32>
    %89 = vector.shape_cast %86 : vector<32x256xf32> to vector<1x32x256xf32>
    tpu.vector_store %arg9[%c0_31, %c0_32, %c0_33], %89 {strides = array<i32>} : memref<1x32x256xf32, #tpu.memory_space<vmem>>, vector<1x32x256xf32>,
    return
  }
  func.func @transform_0(%arg0: i32) -> (i32, i32, i32) {
    %c0_i32 = arith.constant 0 : i32
    %c0_i32_0 = arith.constant 0 : i32
    %c0_i32_1 = arith.constant 0 : i32
    return %arg0, %c0_i32, %c0_i32_0 : i32, i32, i32
  }
  func.func @transform_1(%arg0: i32) -> (i32, i32) {
    %c0_i32 = arith.constant 0 : i32
    %c0_i32_0 = arith.constant 0 : i32
    %c0_i32_1 = arith.constant 0 : i32
    return %c0_i32, %c0_i32_0 : i32, i32
  }
  func.func @transform_2(%arg0: i32) -> (i32, i32) {
    %c0_i32 = arith.constant 0 : i32
    %c0_i32_0 = arith.constant 0 : i32
    %c0_i32_1 = arith.constant 0 : i32
    return %c0_i32, %c0_i32_0 : i32, i32
  }
  func.func @transform_3(%arg0: i32) -> (i32, i32) {
    %c0_i32 = arith.constant 0 : i32
    %c0_i32_0 = arith.constant 0 : i32
    %c0_i32_1 = arith.constant 0 : i32
    return %c0_i32, %c0_i32_0 : i32, i32
  }
  func.func @transform_4(%arg0: i32) -> (i32, i32) {
    %c0_i32 = arith.constant 0 : i32
    %c0_i32_0 = arith.constant 0 : i32
    %c0_i32_1 = arith.constant 0 : i32
    return %c0_i32, %c0_i32_0 : i32, i32
  }
  func.func @transform_5(%arg0: i32) -> (i32, i32) {
    %c0_i32 = arith.constant 0 : i32
    %c0_i32_0 = arith.constant 0 : i32
    %c0_i32_1 = arith.constant 0 : i32
    return %c0_i32, %c0_i32_0 : i32, i32
  }
  func.func @transform_6(%arg0: i32) -> (i32, i32) {
    %c0_i32 = arith.constant 0 : i32
    %c0_i32_0 = arith.constant 0 : i32
    %c0_i32_1 = arith.constant 0 : i32
    return %c0_i32, %c0_i32_0 : i32, i32
  }
  func.func @transform_7(%arg0: i32) -> (i32, i32) {
    %c0_i32 = arith.constant 0 : i32
    %c0_i32_0 = arith.constant 0 : i32
    %c0_i32_1 = arith.constant 0 : i32
    return %c0_i32, %c0_i32_0 : i32, i32
  }
  func.func @transform_8(%arg0: i32) -> (i32, i32, i32) {
    %c0_i32 = arith.constant 0 : i32
    %c0_i32_0 = arith.constant 0 : i32
    %c0_i32_1 = arith.constant 0 : i32
    return %arg0, %c0_i32, %c0_i32_0 : i32, i32, i32
  }
}

</mosaic_0001>

<llo_original>
// kernel: adaptive_edge_connector.1
$region0: #{adaptive_edge_connector.1}
  #allocation0 [shape = 'u32[]', space=smem, size = 0x4, offset = 0x4, fixed_abs, tag = 'smem constant byte address 0x4 - core index']
  #allocation1 [shape = 'u32[144,128]{1,0:T(1,128)}', space=vmem, size = 0x12000, scoped, tag = 'internal scratch']
  %s0 = inlined_call_operand.hbm [shape: bf16[2,256,128], index: 0, kind: input, shape index: {}]
  %s1 = inlined_call_operand.hbm [shape: bf16[128,384], index: 1, kind: input, shape index: {}]
  %s2 = inlined_call_operand.hbm [shape: f32[1,384], index: 2, kind: input, shape index: {}]
  %s3 = inlined_call_operand.hbm [shape: f32[384,8], index: 3, kind: input, shape index: {}]
  %s4 = inlined_call_operand.hbm [shape: f32[1,8], index: 4, kind: input, shape index: {}]
  %s5 = inlined_call_operand.hbm [shape: f32[128,8], index: 5, kind: input, shape index: {}]
  %s6 = inlined_call_operand.hbm [shape: f32[8,128], index: 6, kind: input, shape index: {}]
  %s7 = inlined_call_operand.hbm [shape: bf16[512,256], index: 7, kind: input, shape index: {}]
  %s8 = inlined_call_operand.hbm [shape: f32[2,32,256], index: 8, kind: output, shape index: {}]
  %s9 = sld [smem:[#allocation0]]
  $region97: #{adaptive_edge_connector.1} parent=0
    _
  %s11 = ssub.s32 1, %s9
  %s12 = scalar_select 0, %s11, %s9
  $region1: #{adaptive_edge_connector.1} parent=0
    #allocation2 [shape = 'u8[131072]{0}', space=vmem, size = 0x20000, scoped, tag = 'input window, operand 0']
    #allocation3 [shape = 's32[2]{0}', space=sflag, size = 0x8, scoped, tag = 'scoped memory for adaptive_edge_connector.1']
    #allocation4 [shape = 's32[2]{0}', space=sflag, size = 0x8, scoped, tag = 'scoped memory for adaptive_edge_connector.1']
    #allocation5 [shape = 'u8[98304]{0}', space=vmem, size = 0x18000, scoped, tag = 'input window, operand 1, single buffered']
    #allocation6 [shape = 's32[1]{0}', space=sflag, size = 0x4, scoped, tag = 'scoped memory for adaptive_edge_connector.1']
    #allocation7 [shape = 'u8[1536]{0}', space=vmem, size = 0x800, scoped, tag = 'input window, operand 2, single buffered']
    #allocation8 [shape = 'u8[196608]{0}', space=vmem, size = 0x30000, scoped, tag = 'input window, operand 3, single buffered']
    #allocation9 [shape = 's32[1]{0}', space=sflag, size = 0x4, scoped, tag = 'scoped memory for adaptive_edge_connector.1']
    #allocation10 [shape = 'u8[512]{0}', space=vmem, size = 0x400, scoped, tag = 'input window, operand 4, single buffered']
    #allocation11 [shape = 'u8[65536]{0}', space=vmem, size = 0x10000, scoped, tag = 'input window, operand 5, single buffered']
    #allocation12 [shape = 's32[1]{0}', space=sflag, size = 0x4, scoped, tag = 'scoped memory for adaptive_edge_connector.1']
    #allocation13 [shape = 'u8[4096]{0}', space=vmem, size = 0x1000, scoped, tag = 'input window, operand 6, single buffered']
    #allocation14 [shape = 'u8[262144]{0}', space=vmem, size = 0x40000, scoped, tag = 'input window, operand 7, single buffered']
    #allocation15 [shape = 's32[1]{0}', space=sflag, size = 0x4, scoped, tag = 'scoped memory for adaptive_edge_connector.1']
    #allocation16 [shape = 'u8[65536]{0}', space=vmem, size = 0x10000, scoped, tag = 'output window, operand 0']
    %13 = vsyncpa [#allocation3], 0
    %s14 = scalar_lea.sflag [#allocation3], 1
    %15 = vsyncpa %s14, 0
    %16 = vsyncpa [#allocation6], 0
    %17 = vsyncpa [#allocation9], 0
    %18 = vsyncpa [#allocation12], 0
    %19 = vsyncpa [#allocation15], 0
    %20 = vsyncpa [#allocation4], 0
    %s21 = scalar_lea.sflag [#allocation4], 1
    %22 = vsyncpa %s21, 0
    loop: start=0, step=1, limit=4
    $region2: #{adaptive_edge_connector.1} parent=1 // loop_pre_header
      _
    $region3: #{adaptive_edge_connector.1} parent=1 // loop_header
      %s24 = sphi 0, %s28
      %p25 = scmp.ge.s32.totalorder %s24, 4
      %s34 = sphi 0, %s36
      %s37 = sphi 0, %s34
      %s38 = sphi 0, %s37
      %s54 = sphi 0, %s38
      %s58 = sphi 0, %s58
      %s60 = sphi 0, %s58
      %s61 = sphi 0, %s60
      %s75 = sphi 0, %s61
      %s79 = sphi 0, %s79
      %s81 = sphi 0, %s79
      %s82 = sphi 0, %s81
      %s96 = sphi 0, %s82
      %s100 = sphi 0, %s100
      %s102 = sphi 0, %s100
      %s103 = sphi 0, %s102
      %s117 = sphi 0, %s103
      %s121 = sphi 0, %s121
      %s123 = sphi 0, %s121
      %s124 = sphi 0, %s123
      %s138 = sphi 0, %s124
      %s142 = sphi 0, %s142
      %s144 = sphi 0, %s142
      %s145 = sphi 0, %s144
      %s159 = sphi 0, %s145
      %s163 = sphi 0, %s163
      %s165 = sphi 0, %s163
      %s166 = sphi 0, %s165
      %s180 = sphi 0, %s166
      %s184 = sphi 0, %s184
      %s186 = sphi 0, %s184
      %s187 = sphi 0, %s186
      %s201 = sphi 0, %s187
      %s207 = sphi 0, %s209
      %s210 = sphi 0, %s207
      %s211 = sphi 0, %s210
      %s227 = sphi 0, %s211
    $region4: #{adaptive_edge_connector.1} parent=1 // loop_header_branch
      %27 = sbr.rel (%p25) target = $region8
    $region5: #{adaptive_edge_connector.1} parent=1 // loop_body
      %s29 = ssub.s32 %s24, 1
      %s30 = ssub.s32 %s24, 2
      %s31 = sadd.s32 %s24, 1
      %s32 = ssub.s32 %s24, %s31
      %p33 = scmp.eq.s32.totalorder %s32, 0
      %s35 = sadd.s32 %s34, 1
      %s36 = scalar_select %p33, %s34, %s35
      %p39 = pneg %p33
      %p40 = scmp.eq.s32.totalorder %s24, 1
      %p41 = por %p39, %p40
      %p42 = scmp.ne.s32.totalorder %s34, %s37
      %p43 = scmp.eq.s32.totalorder %s24, 0
      %p44 = por %p42, %p43
      %p45 = scmp.ne.s32.totalorder %s34, %s37
      %p46 = scmp.eq.s32.totalorder %s29, 1
      %p47 = por %p45, %p46
      %p48 = scmp.ne.s32.totalorder %s37, %s38
      %p49 = scmp.eq.s32.totalorder %s29, 0
      %p50 = por %p48, %p49
      %p51 = scmp.ne.s32.totalorder %s37, %s38
      %p52 = scmp.eq.s32.totalorder %s30, 1
      %p53 = por %p51, %p52
      %p55 = scmp.ne.s32.totalorder %s38, %s54
      %p56 = scmp.eq.s32.totalorder %s30, 0
      %p57 = por %p55, %p56
      %s59 = sadd.s32 %s58, 1
      %p62 = scmp.eq.s32.totalorder %s24, 1
      %p63 = scmp.ne.s32.totalorder %s58, %s60
      %p64 = scmp.eq.s32.totalorder %s24, 0
      %p65 = por %p63, %p64
      %p66 = scmp.ne.s32.totalorder %s58, %s60
      %p67 = scmp.eq.s32.totalorder %s29, 1
      %p68 = por %p66, %p67
      %p69 = scmp.ne.s32.totalorder %s60, %s61
      %p70 = scmp.eq.s32.totalorder %s29, 0
      %p71 = por %p69, %p70
      %p72 = scmp.ne.s32.totalorder %s60, %s61
      %p73 = scmp.eq.s32.totalorder %s30, 1
      %p74 = por %p72, %p73
      %p76 = scmp.ne.s32.totalorder %s61, %s75
      %p77 = scmp.eq.s32.totalorder %s30, 0
      %p78 = por %p76, %p77
      %s80 = sadd.s32 %s79, 1
      %p83 = scmp.eq.s32.totalorder %s24, 1
      %p84 = scmp.ne.s32.totalorder %s79, %s81
      %p85 = scmp.eq.s32.totalorder %s24, 0
      %p86 = por %p84, %p85
      %p87 = scmp.ne.s32.totalorder %s79, %s81
      %p88 = scmp.eq.s32.totalorder %s29, 1
      %p89 = por %p87, %p88
      %p90 = scmp.ne.s32.totalorder %s81, %s82
      %p91 = scmp.eq.s32.totalorder %s29, 0
      %p92 = por %p90, %p91
      %p93 = scmp.ne.s32.totalorder %s81, %s82
      %p94 = scmp.eq.s32.totalorder %s30, 1
      %p95 = por %p93, %p94
      %p97 = scmp.ne.s32.totalorder %s82, %s96
      %p98 = scmp.eq.s32.totalorder %s30, 0
      %p99 = por %p97, %p98
      %s101 = sadd.s32 %s100, 1
      %p104 = scmp.eq.s32.totalorder %s24, 1
      %p105 = scmp.ne.s32.totalorder %s100, %s102
      %p106 = scmp.eq.s32.totalorder %s24, 0
      %p107 = por %p105, %p106
      %p108 = scmp.ne.s32.totalorder %s100, %s102
      %p109 = scmp.eq.s32.totalorder %s29, 1
      %p110 = por %p108, %p109
      %p111 = scmp.ne.s32.totalorder %s102, %s103
      %p112 = scmp.eq.s32.totalorder %s29, 0
      %p113 = por %p111, %p112
      %p114 = scmp.ne.s32.totalorder %s102, %s103
      %p115 = scmp.eq.s32.totalorder %s30, 1
      %p116 = por %p114, %p115
      %p118 = scmp.ne.s32.totalorder %s103, %s117
      %p119 = scmp.eq.s32.totalorder %s30, 0
      %p120 = por %p118, %p119
      %s122 = sadd.s32 %s121, 1
      %p125 = scmp.eq.s32.totalorder %s24, 1
      %p126 = scmp.ne.s32.totalorder %s121, %s123
      %p127 = scmp.eq.s32.totalorder %s24, 0
      %p128 = por %p126, %p127
      %p129 = scmp.ne.s32.totalorder %s121, %s123
      %p130 = scmp.eq.s32.totalorder %s29, 1
      %p131 = por %p129, %p130
      %p132 = scmp.ne.s32.totalorder %s123, %s124
      %p133 = scmp.eq.s32.totalorder %s29, 0
      %p134 = por %p132, %p133
      %p135 = scmp.ne.s32.totalorder %s123, %s124
      %p136 = scmp.eq.s32.totalorder %s30, 1
      %p137 = por %p135, %p136
      %p139 = scmp.ne.s32.totalorder %s124, %s138
      %p140 = scmp.eq.s32.totalorder %s30, 0
      %p141 = por %p139, %p140
      %s143 = sadd.s32 %s142, 1
      %p146 = scmp.eq.s32.totalorder %s24, 1
      %p147 = scmp.ne.s32.totalorder %s142, %s144
      %p148 = scmp.eq.s32.totalorder %s24, 0
      %p149 = por %p147, %p148
      %p150 = scmp.ne.s32.totalorder %s142, %s144
      %p151 = scmp.eq.s32.totalorder %s29, 1
      %p152 = por %p150, %p151
      %p153 = scmp.ne.s32.totalorder %s144, %s145
      %p154 = scmp.eq.s32.totalorder %s29, 0
      %p155 = por %p153, %p154
      %p156 = scmp.ne.s32.totalorder %s144, %s145
      %p157 = scmp.eq.s32.totalorder %s30, 1
      %p158 = por %p156, %p157
      %p160 = scmp.ne.s32.totalorder %s145, %s159
      %p161 = scmp.eq.s32.totalorder %s30, 0
      %p162 = por %p160, %p161
      %s164 = sadd.s32 %s163, 1
      %p167 = scmp.eq.s32.totalorder %s24, 1
      %p168 = scmp.ne.s32.totalorder %s163, %s165
      %p169 = scmp.eq.s32.totalorder %s24, 0
      %p170 = por %p168, %p169
      %p171 = scmp.ne.s32.totalorder %s163, %s165
      %p172 = scmp.eq.s32.totalorder %s29, 1
      %p173 = por %p171, %p172
      %p174 = scmp.ne.s32.totalorder %s165, %s166
      %p175 = scmp.eq.s32.totalorder %s29, 0
      %p176 = por %p174, %p175
      %p177 = scmp.ne.s32.totalorder %s165, %s166
      %p178 = scmp.eq.s32.totalorder %s30, 1
      %p179 = por %p177, %p178
      %p181 = scmp.ne.s32.totalorder %s166, %s180
      %p182 = scmp.eq.s32.totalorder %s30, 0
      %p183 = por %p181, %p182
      %s185 = sadd.s32 %s184, 1
      %p188 = scmp.eq.s32.totalorder %s24, 1
      %p189 = scmp.ne.s32.totalorder %s184, %s186
      %p190 = scmp.eq.s32.totalorder %s24, 0
      %p191 = por %p189, %p190
      %p192 = scmp.ne.s32.totalorder %s184, %s186
      %p193 = scmp.eq.s32.totalorder %s29, 1
      %p194 = por %p192, %p193
      %p195 = scmp.ne.s32.totalorder %s186, %s187
      %p196 = scmp.eq.s32.totalorder %s29, 0
      %p197 = por %p195, %p196
      %p198 = scmp.ne.s32.totalorder %s186, %s187
      %p199 = scmp.eq.s32.totalorder %s30, 1
      %p200 = por %p198, %p199
      %p202 = scmp.ne.s32.totalorder %s187, %s201
      %p203 = scmp.eq.s32.totalorder %s30, 0
      %p204 = por %p202, %p203
      %s205 = ssub.s32 %s24, %s31
      %p206 = scmp.eq.s32.totalorder %s205, 0
      %s208 = sadd.s32 %s207, 1
      %s209 = scalar_select %p206, %s207, %s208
      %p212 = pneg %p206
      %p213 = scmp.eq.s32.totalorder %s24, 1
      %p214 = por %p212, %p213
      %p215 = scmp.ne.s32.totalorder %s207, %s210
      %p216 = scmp.eq.s32.totalorder %s24, 0
      %p217 = por %p215, %p216
      %p218 = scmp.ne.s32.totalorder %s207, %s210
      %p219 = scmp.eq.s32.totalorder %s29, 1
      %p220 = por %p218, %p219
      %p221 = scmp.ne.s32.totalorder %s210, %s211
      %p222 = scmp.eq.s32.totalorder %s29, 0
      %p223 = por %p221, %p222
      %p224 = scmp.ne.s32.totalorder %s210, %s211
      %p225 = scmp.eq.s32.totalorder %s30, 1
      %p226 = por %p224, %p225
      %p228 = scmp.ne.s32.totalorder %s211, %s227
      %p229 = scmp.eq.s32.totalorder %s30, 0
      %p230 = por %p228, %p229
      %p231 = scmp.le.s32.totalorder 1, %s24
      %p232 = scmp.lt.s32.totalorder %s24, 3
      %p233 = pnand %p231, %p232
      %p234 = pneg %p233
      // Predicated region
      $region9: #{adaptive_edge_connector.1} parent=5 // pred_check
        _
      $region10: #{adaptive_edge_connector.1} parent=5 // pred_check_branch
        %236 = sbr.rel (%p233) target = $region12
      $region11: #{adaptive_edge_connector.1} parent=5 // pred_region
        %s237 = ssub.s32 %s24, 1
        // Predicated region
        $region13: #{adaptive_edge_connector.1} parent=11 // pred_check
          %p238 = pneg %p71
        $region14: #{adaptive_edge_connector.1} parent=11 // pred_check_branch
          %240 = sbr.rel (%p238) target = $region16
        $region15: #{adaptive_edge_connector.1} parent=11 // pred_region
          %s242 = ssub.s32 3072, 3072
          %243 = vsyncadd [#allocation6], %s242
          %s244 = sshll.u32 [#allocation5], 4
          %s245 = int_to_ptr.vmem [resolvable:$true] %s244
          %250 = dma.hbm_to_vmem [thread:$0]  %s1, 3072, %s245, [#allocation6], 192, 192, 12
        $region16: #{adaptive_edge_connector.1} parent=11 // pred_fallthru
          _
        // Predicated region
        $region17: #{adaptive_edge_connector.1} parent=11 // pred_check
          %p251 = pneg %p92
        $region18: #{adaptive_edge_connector.1} parent=11 // pred_check_branch
          %253 = sbr.rel (%p251) target = $region20
        $region19: #{adaptive_edge_connector.1} parent=11 // pred_region
          %s255 = ssub.s32 48, 48
          %256 = vsyncadd [#allocation6], %s255
          %s258 = sshll.u32 [#allocation7], 4
          %s259 = int_to_ptr.vmem [resolvable:$true] %s258
          %261 = dma.hbm_to_vmem [thread:$0]  %s2, 48, %s259, [#allocation6]
        $region20: #{adaptive_edge_connector.1} parent=11 // pred_fallthru
          _
        // Predicated region
        $region21: #{adaptive_edge_connector.1} parent=11 // pred_check
          %p262 = pneg %p113
        $region22: #{adaptive_edge_connector.1} parent=11 // pred_check_branch
          %264 = sbr.rel (%p262) target = $region24
        $region23: #{adaptive_edge_connector.1} parent=11 // pred_region
          %s266 = ssub.s32 6144, 6144
          %267 = vsyncadd [#allocation9], %s266
          %s268 = sshll.u32 [#allocation8], 4
          %s269 = int_to_ptr.vmem [resolvable:$true] %s268
          %274 = dma.hbm_to_vmem [thread:$0]  %s3, 6144, %s269, [#allocation9], 128, 128, 8
        $region24: #{adaptive_edge_connector.1} parent=11 // pred_fallthru
          _
        // Predicated region
        $region25: #{adaptive_edge_connector.1} parent=11 // pred_check
          %p275 = pneg %p134
        $region26: #{adaptive_edge_connector.1} parent=11 // pred_check_branch
          %277 = sbr.rel (%p275) target = $region28
        $region27: #{adaptive_edge_connector.1} parent=11 // pred_region
          %s279 = ssub.s32 16, 16
          %280 = vsyncadd [#allocation9], %s279
          %s282 = sshll.u32 [#allocation10], 4
          %s283 = int_to_ptr.vmem [resolvable:$true] %s282
          %285 = dma.hbm_to_vmem [thread:$0]  %s4, 16, %s283, [#allocation9]
        $region28: #{adaptive_edge_connector.1} parent=11 // pred_fallthru
          _
        // Predicated region
        $region29: #{adaptive_edge_connector.1} parent=11 // pred_check
          %p286 = pneg %p155
        $region30: #{adaptive_edge_connector.1} parent=11 // pred_check_branch
          %288 = sbr.rel (%p286) target = $region32
        $region31: #{adaptive_edge_connector.1} parent=11 // pred_region
          %s290 = ssub.s32 2048, 2048
          %291 = vsyncadd [#allocation12], %s290
          %s292 = sshll.u32 [#allocation11], 4
          %s293 = int_to_ptr.vmem [resolvable:$true] %s292
          %298 = dma.hbm_to_vmem [thread:$0]  %s5, 2048, %s293, [#allocation12], 128, 128, 8
        $region32: #{adaptive_edge_connector.1} parent=11 // pred_fallthru
          _
        // Predicated region
        $region33: #{adaptive_edge_connector.1} parent=11 // pred_check
          %p299 = pneg %p176
        $region34: #{adaptive_edge_connector.1} parent=11 // pred_check_branch
          %301 = sbr.rel (%p299) target = $region36
        $region35: #{adaptive_edge_connector.1} parent=11 // pred_region
          %s303 = ssub.s32 128, 128
          %304 = vsyncadd [#allocation12], %s303
          %s306 = sshll.u32 [#allocation13], 4
          %s307 = int_to_ptr.vmem [resolvable:$true] %s306
          %309 = dma.hbm_to_vmem [thread:$0]  %s6, 128, %s307, [#allocation12]
        $region36: #{adaptive_edge_connector.1} parent=11 // pred_fallthru
          _
        // Predicated region
        $region37: #{adaptive_edge_connector.1} parent=11 // pred_check
          %p310 = pneg %p197
        $region38: #{adaptive_edge_connector.1} parent=11 // pred_check_branch
          %312 = sbr.rel (%p310) target = $region40
        $region39: #{adaptive_edge_connector.1} parent=11 // pred_region
          %s314 = ssub.s32 8192, 8192
          %315 = vsyncadd [#allocation15], %s314
          %s316 = sshll.u32 [#allocation14], 4
          %s317 = int_to_ptr.vmem [resolvable:$true] %s316
          %322 = dma.hbm_to_vmem [thread:$0]  %s7, 8192, %s317, [#allocation15], 128, 128, 8
        $region40: #{adaptive_edge_connector.1} parent=11 // pred_fallthru
          _
      $region12: #{adaptive_edge_connector.1} parent=5 // pred_fallthru
        _
      %p323 = scmp.lt.s32.totalorder %s24, 2
      // Predicated region
      $region41: #{adaptive_edge_connector.1} parent=5 // pred_check
        %p324 = pneg %p323
      $region42: #{adaptive_edge_connector.1} parent=5 // pred_check_branch
        %326 = sbr.rel (%p324) target = $region44
      $region43: #{adaptive_edge_connector.1} parent=5 // pred_region
        // Predicated region
        $region45: #{adaptive_edge_connector.1} parent=43 // pred_check
          %p327 = pneg %p44
        $region46: #{adaptive_edge_connector.1} parent=43 // pred_check_branch
          %329 = sbr.rel (%p327) target = $region48
        $region47: #{adaptive_edge_connector.1} parent=43 // pred_region
          %s330 = sand.u32 %s34, 1
          %s331 = scalar_lea.sflag [#allocation3], %s330
          %s332 = sand.u32 %s34, 1
          %s333 = smul.addr %s332, 128
          %s334 = scalar_lea.vmem [#allocation2], %s333
          %s336 = ssub.s32 2048, 2048
          %337 = vsyncadd %s331, %s336
          %s338 = smul.addr %s24, 32
          %s339 = smul.addr %s338, 64
          %s340 = scalar_lea.hbm %s0, %s339
          %s341 = sshll.u32 %s334, 4
          %s342 = int_to_ptr.vmem [resolvable:$true] %s341
          %347 = dma.hbm_to_vmem [thread:$0]  %s340, 2048, %s342, %s331, 64, 64, 4
        $region48: #{adaptive_edge_connector.1} parent=43 // pred_fallthru
          _
      $region44: #{adaptive_edge_connector.1} parent=5 // pred_fallthru
        _
      %p348 = scmp.le.s32.totalorder 1, %s24
      %p349 = scmp.lt.s32.totalorder %s24, 3
      %p350 = pnand %p348, %p349
      %p351 = pneg %p350
      // Predicated region
      $region49: #{adaptive_edge_connector.1} parent=5 // pred_check
        _
      $region50: #{adaptive_edge_connector.1} parent=5 // pred_check_branch
        %353 = sbr.rel (%p350) target = $region52
      $region51: #{adaptive_edge_connector.1} parent=5 // pred_region
        %s354 = ssub.s32 %s24, 1
        %s355 = sand.u32 %s37, 1
        %s356 = scalar_lea.sflag [#allocation3], %s355
        %s357 = sand.u32 %s37, 1
        %s358 = smul.addr %s357, 128
        %s359 = scalar_lea.vmem [#allocation2], %s358
        // Predicated region
        $region53: #{adaptive_edge_connector.1} parent=51 // pred_check
          %p360 = pneg %p50
        $region54: #{adaptive_edge_connector.1} parent=51 // pred_check_branch
          %362 = sbr.rel (%p360) target = $region56
        $region55: #{adaptive_edge_connector.1} parent=51 // pred_region
          %363 = dma.done %s356, 2048
        $region56: #{adaptive_edge_connector.1} parent=51 // pred_fallthru
          _
        // Predicated region
        $region57: #{adaptive_edge_connector.1} parent=51 // pred_check
          %p364 = pneg %p71
        $region58: #{adaptive_edge_connector.1} parent=51 // pred_check_branch
          %366 = sbr.rel (%p364) target = $region60
        $region59: #{adaptive_edge_connector.1} parent=51 // pred_region
          %367 = dma.done [#allocation6], 3072
        $region60: #{adaptive_edge_connector.1} parent=51 // pred_fallthru
          _
        // Predicated region
        $region61: #{adaptive_edge_connector.1} parent=51 // pred_check
          %p368 = pneg %p92
        $region62: #{adaptive_edge_connector.1} parent=51 // pred_check_branch
          %370 = sbr.rel (%p368) target = $region64
        $region63: #{adaptive_edge_connector.1} parent=51 // pred_region
          %371 = dma.done [#allocation6], 48
        $region64: #{adaptive_edge_connector.1} parent=51 // pred_fallthru
          _
        // Predicated region
        $region65: #{adaptive_edge_connector.1} parent=51 // pred_check
          %p372 = pneg %p113
        $region66: #{adaptive_edge_connector.1} parent=51 // pred_check_branch
          %374 = sbr.rel (%p372) target = $region68
        $region67: #{adaptive_edge_connector.1} parent=51 // pred_region
          %375 = dma.done [#allocation9], 6144
        $region68: #{adaptive_edge_connector.1} parent=51 // pred_fallthru
          _
        // Predicated region
        $region69: #{adaptive_edge_connector.1} parent=51 // pred_check
          %p376 = pneg %p134
        $region70: #{adaptive_edge_connector.1} parent=51 // pred_check_branch
          %378 = sbr.rel (%p376) target = $region72
        $region71: #{adaptive_edge_connector.1} parent=51 // pred_region
          %379 = dma.done [#allocation9], 16
        $region72: #{adaptive_edge_connector.1} parent=51 // pred_fallthru
          _
        // Predicated region
        $region73: #{adaptive_edge_connector.1} parent=51 // pred_check
          %p380 = pneg %p155
        $region74: #{adaptive_edge_connector.1} parent=51 // pred_check_branch
          %382 = sbr.rel (%p380) target = $region76
        $region75: #{adaptive_edge_connector.1} parent=51 // pred_region
          %383 = dma.done [#allocation12], 2048
        $region76: #{adaptive_edge_connector.1} parent=51 // pred_fallthru
          _
        // Predicated region
        $region77: #{adaptive_edge_connector.1} parent=51 // pred_check
          %p384 = pneg %p176
        $region78: #{adaptive_edge_connector.1} parent=51 // pred_check_branch
          %386 = sbr.rel (%p384) target = $region80
        $region79: #{adaptive_edge_connector.1} parent=51 // pred_region
          %387 = dma.done [#allocation12], 128
        $region80: #{adaptive_edge_connector.1} parent=51 // pred_fallthru
          _
        // Predicated region
        $region81: #{adaptive_edge_connector.1} parent=51 // pred_check
          %p388 = pneg %p197
        $region82: #{adaptive_edge_connector.1} parent=51 // pred_check_branch
          %390 = sbr.rel (%p388) target = $region84
        $region83: #{adaptive_edge_connector.1} parent=51 // pred_region
          %391 = dma.done [#allocation15], 8192
        $region84: #{adaptive_edge_connector.1} parent=51 // pred_fallthru
          _
        %s392 = sand.u32 %s37, 1
        %s393 = scalar_lea.sflag [#allocation3], %s392
        %s394 = sand.u32 %s37, 1
        %s395 = smul.addr %s394, 128
        %s396 = scalar_lea.vmem [#allocation2], %s395
        %p397 = pneg %p50
        %p398 = pneg %p47
        %p399 = pneg %p71
        %p400 = pneg %p68
        %p401 = pneg %p92
        %p402 = pneg %p89
        %p403 = pneg %p113
        %p404 = pneg %p110
        %p405 = pneg %p134
        %p406 = pneg %p131
        %p407 = pneg %p155
        %p408 = pneg %p152
        %p409 = pneg %p176
        %p410 = pneg %p173
        %p411 = pneg %p197
        %p412 = pneg %p194
        %p413 = pneg %p223
        %p414 = pneg %p220
        %s415 = sand.u32 %s210, 1
        %s416 = scalar_lea.sflag [#allocation4], %s415
        %s417 = sand.u32 %s210, 1
        %s418 = smul.addr %s417, 64
        %s419 = scalar_lea.vmem [#allocation16], %s418
        %v421 = vld [vmem:[%s359] sm:$0xf]
        %v422 = vld [vmem:[%s359 + $0x4] sm:$0xf]
        %v423 = vld [vmem:[%s359 + $0x8] sm:$0xf]
        %v424 = vld [vmem:[%s359 + $0xc] sm:$0xf]
        %v425 = vld [vmem:[%s359 + $0x10] sm:$0xf]
        %v426 = vld [vmem:[%s359 + $0x14] sm:$0xf]
        %v427 = vld [vmem:[%s359 + $0x18] sm:$0xf]
        %v428 = vld [vmem:[%s359 + $0x1c] sm:$0xf]
        %v429 = vld [vmem:[%s359 + $0x20] sm:$0xf]
        %v430 = vld [vmem:[%s359 + $0x24] sm:$0xf]
        %v431 = vld [vmem:[%s359 + $0x28] sm:$0xf]
        %v432 = vld [vmem:[%s359 + $0x2c] sm:$0xf]
        %v433 = vld [vmem:[%s359 + $0x30] sm:$0xf]
        %v434 = vld [vmem:[%s359 + $0x34] sm:$0xf]
        %v435 = vld [vmem:[%s359 + $0x38] sm:$0xf]
        %v436 = vld [vmem:[%s359 + $0x3c] sm:$0xf]
        %v437 = vld [vmem:[%s359 + $0x40] sm:$0xf]
        %v438 = vld [vmem:[%s359 + $0x44] sm:$0xf]
        %v439 = vld [vmem:[%s359 + $0x48] sm:$0xf]
        %v440 = vld [vmem:[%s359 + $0x4c] sm:$0xf]
        %v441 = vld [vmem:[%s359 + $0x50] sm:$0xf]
        %v442 = vld [vmem:[%s359 + $0x54] sm:$0xf]
        %v443 = vld [vmem:[%s359 + $0x58] sm:$0xf]
        %v444 = vld [vmem:[%s359 + $0x5c] sm:$0xf]
        %v445 = vld [vmem:[%s359 + $0x60] sm:$0xf]
        %v446 = vld [vmem:[%s359 + $0x64] sm:$0xf]
        %v447 = vld [vmem:[%s359 + $0x68] sm:$0xf]
        %v448 = vld [vmem:[%s359 + $0x6c] sm:$0xf]
        %v449 = vld [vmem:[%s359 + $0x70] sm:$0xf]
        %v450 = vld [vmem:[%s359 + $0x74] sm:$0xf]
        %v451 = vld [vmem:[%s359 + $0x78] sm:$0xf]
        %v452 = vld [vmem:[%s359 + $0x7c] sm:$0xf]
        %v453 = vld [vmem:[#allocation5] sm:$0xff]
        %v454 = vld [vmem:[#allocation5 + $0x8] sm:$0xf]
        %v455 = vld [vmem:[#allocation5 + $0xc] sm:$0xff]
        %v456 = vld [vmem:[#allocation5 + $0x14] sm:$0xf]
        %v457 = vld [vmem:[#allocation5 + $0x18] sm:$0xff]
        %v458 = vld [vmem:[#allocation5 + $0x20] sm:$0xf]
        %v459 = vld [vmem:[#allocation5 + $0x24] sm:$0xff]
        %v460 = vld [vmem:[#allocation5 + $0x2c] sm:$0xf]
        %v461 = vld [vmem:[#allocation5 + $0x30] sm:$0xff]
        %v462 = vld [vmem:[#allocation5 + $0x38] sm:$0xf]
        %v463 = vld [vmem:[#allocation5 + $0x3c] sm:$0xff]
        %v464 = vld [vmem:[#allocation5 + $0x44] sm:$0xf]
        %v465 = vld [vmem:[#allocation5 + $0x48] sm:$0xff]
        %v466 = vld [vmem:[#allocation5 + $0x50] sm:$0xf]
        %v467 = vld [vmem:[#allocation5 + $0x54] sm:$0xff]
        %v468 = vld [vmem:[#allocation5 + $0x5c] sm:$0xf]
        %v469 = vld [vmem:[#allocation5 + $0x60] sm:$0xff]
        %v470 = vld [vmem:[#allocation5 + $0x68] sm:$0xf]
        %v471 = vld [vmem:[#allocation5 + $0x6c] sm:$0xff]
        %v472 = vld [vmem:[#allocation5 + $0x74] sm:$0xf]
        %v473 = vld [vmem:[#allocation5 + $0x78] sm:$0xff]
        %v474 = vld [vmem:[#allocation5 + $0x80] sm:$0xf]
        %v475 = vld [vmem:[#allocation5 + $0x84] sm:$0xff]
        %v476 = vld [vmem:[#allocation5 + $0x8c] sm:$0xf]
        %v477 = vld [vmem:[#allocation5 + $0x90] sm:$0xff]
        %v478 = vld [vmem:[#allocation5 + $0x98] sm:$0xf]
        %v479 = vld [vmem:[#allocation5 + $0x9c] sm:$0xff]
        %v480 = vld [vmem:[#allocation5 + $0xa4] sm:$0xf]
        %v481 = vld [vmem:[#allocation5 + $0xa8] sm:$0xff]
        %v482 = vld [vmem:[#allocation5 + $0xb0] sm:$0xf]
        %v483 = vld [vmem:[#allocation5 + $0xb4] sm:$0xff]
        %v484 = vld [vmem:[#allocation5 + $0xbc] sm:$0xf]
        %v485 = vld [vmem:[#allocation7] sm:$0x7]
        %v487 = vlaneseq
        %v488 = vshrl.u32 %v487, 7
        %v489 = vsub.s32 0, %v488
        %v490 = vrot.slane %v485, %v489
        %v491 = vlaneseq
        %v492 = vshrl.u32 %v491, 7
        %v493 = vsub.s32 1, %v492
        %v494 = vrot.slane %v485, %v493
        %v495 = vlaneseq
        %v496 = vshrl.u32 %v495, 7
        %v497 = vsub.s32 2, %v496
        %v498 = vrot.slane %v485, %v497
        %v534 = vunpack.c.l.b16 %v421
        %v535 = vunpack.c.l.b16 %v422
        %v536 = vunpack.c.l.b16 %v423
        %v537 = vunpack.c.l.b16 %v424
        %v538 = vunpack.c.l.b16 %v425
        %v539 = vunpack.c.l.b16 %v426
        %v540 = vunpack.c.l.b16 %v427
        %v541 = vunpack.c.l.b16 %v428
        %v542 = vunpack.c.l.b16 %v429
        %v543 = vunpack.c.l.b16 %v430
        %v544 = vunpack.c.l.b16 %v431
        %v545 = vunpack.c.l.b16 %v432
        %v546 = vunpack.c.l.b16 %v433
        %v547 = vunpack.c.l.b16 %v434
        %v548 = vunpack.c.l.b16 %v435
        %v549 = vunpack.c.l.b16 %v436
        %v550 = vunpack.c.l.b16 %v437
        %v551 = vunpack.c.l.b16 %v438
        %v552 = vunpack.c.l.b16 %v439
        %v553 = vunpack.c.l.b16 %v440
        %v554 = vunpack.c.l.b16 %v441
        %v555 = vunpack.c.l.b16 %v442
        %v556 = vunpack.c.l.b16 %v443
        %v557 = vunpack.c.l.b16 %v444
        %v558 = vunpack.c.l.b16 %v445
        %v559 = vunpack.c.l.b16 %v446
        %v560 = vunpack.c.l.b16 %v447
        %v561 = vunpack.c.l.b16 %v448
        %v562 = vunpack.c.l.b16 %v449
        %v563 = vunpack.c.l.b16 %v450
        %v564 = vunpack.c.l.b16 %v451
        %v565 = vunpack.c.l.b16 %v452
        %v566 = vpack.c.b16 %v535, %v534
        %v567 = vpack.c.b16 %v537, %v536
        %v568 = vpack.c.b16 %v539, %v538
        %v569 = vpack.c.b16 %v541, %v540
        %v570 = vpack.c.b16 %v543, %v542
        %v571 = vpack.c.b16 %v545, %v544
        %v572 = vpack.c.b16 %v547, %v546
        %v573 = vpack.c.b16 %v549, %v548
        %v574 = vpack.c.b16 %v551, %v550
        %v575 = vpack.c.b16 %v553, %v552
        %v576 = vpack.c.b16 %v555, %v554
        %v577 = vpack.c.b16 %v557, %v556
        %v578 = vpack.c.b16 %v559, %v558
        %v579 = vpack.c.b16 %v561, %v560
        %v580 = vpack.c.b16 %v563, %v562
        %v581 = vpack.c.b16 %v565, %v564
        %v630 = vunpack.c.l.b16 %v453
        %v631 = vunpack.c.h.b16 %v453
        %v632 = vunpack.c.l.b16 %v454
        %v633 = vunpack.c.l.b16 %v455
        %v634 = vunpack.c.h.b16 %v455
        %v635 = vunpack.c.l.b16 %v456
        %v636 = vunpack.c.l.b16 %v457
        %v637 = vunpack.c.h.b16 %v457
        %v638 = vunpack.c.l.b16 %v458
        %v639 = vunpack.c.l.b16 %v459
        %v640 = vunpack.c.h.b16 %v459
        %v641 = vunpack.c.l.b16 %v460
        %v642 = vunpack.c.l.b16 %v461
        %v643 = vunpack.c.h.b16 %v461
        %v644 = vunpack.c.l.b16 %v462
        %v645 = vunpack.c.l.b16 %v463
        %v646 = vunpack.c.h.b16 %v463
        %v647 = vunpack.c.l.b16 %v464
        %v648 = vunpack.c.l.b16 %v465
        %v649 = vunpack.c.h.b16 %v465
        %v650 = vunpack.c.l.b16 %v466
        %v651 = vunpack.c.l.b16 %v467
        %v652 = vunpack.c.h.b16 %v467
        %v653 = vunpack.c.l.b16 %v468
        %v654 = vunpack.c.l.b16 %v469
        %v655 = vunpack.c.h.b16 %v469
        %v656 = vunpack.c.l.b16 %v470
        %v657 = vunpack.c.l.b16 %v471
        %v658 = vunpack.c.h.b16 %v471
        %v659 = vunpack.c.l.b16 %v472
        %v660 = vunpack.c.l.b16 %v473
        %v661 = vunpack.c.h.b16 %v473
        %v662 = vunpack.c.l.b16 %v474
        %v663 = vunpack.c.l.b16 %v475
        %v664 = vunpack.c.h.b16 %v475
        %v665 = vunpack.c.l.b16 %v476
        %v666 = vunpack.c.l.b16 %v477
        %v667 = vunpack.c.h.b16 %v477
        %v668 = vunpack.c.l.b16 %v478
        %v669 = vunpack.c.l.b16 %v479
        %v670 = vunpack.c.h.b16 %v479
        %v671 = vunpack.c.l.b16 %v480
        %v672 = vunpack.c.l.b16 %v481
        %v673 = vunpack.c.h.b16 %v481
        %v674 = vunpack.c.l.b16 %v482
        %v675 = vunpack.c.l.b16 %v483
        %v676 = vunpack.c.h.b16 %v483
        %v677 = vunpack.c.l.b16 %v484
        %v678 = vpack.c.b16 %v633, %v630
        %v679 = vpack.c.b16 %v634, %v631
        %v680 = vpack.c.b16 %v635, %v632
        %v681 = vpack.c.b16 %v639, %v636
        %v682 = vpack.c.b16 %v640, %v637
        %v683 = vpack.c.b16 %v641, %v638
        %v684 = vpack.c.b16 %v645, %v642
        %v685 = vpack.c.b16 %v646, %v643
        %v686 = vpack.c.b16 %v647, %v644
        %v687 = vpack.c.b16 %v651, %v648
        %v688 = vpack.c.b16 %v652, %v649
        %v689 = vpack.c.b16 %v653, %v650
        %v690 = vpack.c.b16 %v657, %v654
        %v691 = vpack.c.b16 %v658, %v655
        %v692 = vpack.c.b16 %v659, %v656
        %v693 = vpack.c.b16 %v663, %v660
        %v694 = vpack.c.b16 %v664, %v661
        %v695 = vpack.c.b16 %v665, %v662
        %v696 = vpack.c.b16 %v669, %v666
        %v697 = vpack.c.b16 %v670, %v667
        %v698 = vpack.c.b16 %v671, %v668
        %v699 = vpack.c.b16 %v675, %v672
        %v700 = vpack.c.b16 %v676, %v673
        %v701 = vpack.c.b16 %v677, %v674
        %726 = vmatprep.subr.bf16.mxu0 %v679
        %727 = vmatpush1.bf16.msra.mxu0 %v678
        %728 = vmatprep.subr.bf16.mxu0 %v682
        %729 = vmatpush1.bf16.msra.mxu0 %v681
        %730 = vmatprep.subr.bf16.mxu0 %v685
        %731 = vmatpush1.bf16.msra.mxu0 %v684
        %732 = vmatprep.subr.bf16.mxu0 %v688
        %733 = vmatpush1.bf16.msra.mxu0 %v687
        %734 = vmatprep.subr.bf16.mxu0 %v691
        %735 = vmatpush1.bf16.msra.mxu0 %v690
        %736 = vmatprep.subr.bf16.mxu0 %v694
        %737 = vmatpush1.bf16.msra.mxu0 %v693
        %738 = vmatprep.subr.bf16.mxu0 %v697
        %739 = vmatpush1.bf16.msra.mxu0 %v696
        %740 = vmatprep.subr.bf16.mxu0 %v700
        %741 = vmatpush1.bf16.msra.mxu0 %v699
        %742 = vmatprep.subr.bf16.mxu0 0
        %743 = vmatpush1.bf16.msra.mxu0 0
        %744 = vmatprep.subr.bf16.mxu0 0
        %745 = vmatpush1.bf16.msra.mxu0 0
        %746 = vmatprep.subr.bf16.mxu0 0
        %747 = vmatpush1.bf16.msra.mxu0 0
        %748 = vmatprep.subr.bf16.mxu0 0
        %749 = vmatpush1.bf16.msra.mxu0 0
        %750 = vmatprep.subr.bf16.mxu0 0
        %751 = vmatpush1.bf16.msra.mxu0 0
        %752 = vmatprep.subr.bf16.mxu0 0
        %753 = vmatpush1.bf16.msra.mxu0 0
        %754 = vmatprep.subr.bf16.mxu0 0
        %755 = vmatpush1.bf16.msra.mxu0 0
        %756 = vmatprep.subr.bf16.mxu0 0
        %757 = vmatpush1.bf16.msra.mxu0 0
        %758 = vmatprep.mubr.bf16.mxu0 0
        %759 = vmatmul.mubr.bf16.gmra.mrb[0].mxu0 %v566
        %v760 = vpop.f32.mrb[0].mxu0
        %v761 = vadd.f32 %v490, %v760
        %v762 = vpop.f32.mrb[0].mxu0
        %v763 = vadd.f32 %v494, %v762
        %v764 = vpop.f32.mrb[0].mxu0
        %v765 = vadd.f32 %v490, %v764
        %v766 = vpop.f32.mrb[0].mxu0
        %v767 = vadd.f32 %v494, %v766
        %768 = vmatprep.mubr.bf16.mxu0 0
        %769 = vmatmul.mubr.bf16.gmra.mrb[0].mxu0 %v567
        %v770 = vpop.f32.mrb[0].mxu0
        %v771 = vadd.f32 %v490, %v770
        %v772 = vpop.f32.mrb[0].mxu0
        %v773 = vadd.f32 %v494, %v772
        %v774 = vpop.f32.mrb[0].mxu0
        %v775 = vadd.f32 %v490, %v774
        %v776 = vpop.f32.mrb[0].mxu0
        %v777 = vadd.f32 %v494, %v776
        %778 = vmatprep.mubr.bf16.mxu0 0
        %779 = vmatmul.mubr.bf16.gmra.mrb[0].mxu0 %v568
        %v780 = vpop.f32.mrb[0].mxu0
        %v781 = vadd.f32 %v490, %v780
        %v782 = vpop.f32.mrb[0].mxu0
        %v783 = vadd.f32 %v494, %v782
        %v784 = vpop.f32.mrb[0].mxu0
        %v785 = vadd.f32 %v490, %v784
        %v786 = vpop.f32.mrb[0].mxu0
        %v787 = vadd.f32 %v494, %v786
        %788 = vmatprep.mubr.bf16.mxu0 0
        %789 = vmatmul.mubr.bf16.gmra.mrb[0].mxu0 %v569
        %v790 = vpop.f32.mrb[0].mxu0
        %v791 = vadd.f32 %v490, %v790
        %v792 = vpop.f32.mrb[0].mxu0
        %v793 = vadd.f32 %v494, %v792
        %v794 = vpop.f32.mrb[0].mxu0
        %v795 = vadd.f32 %v490, %v794
        %v796 = vpop.f32.mrb[0].mxu0
        %v797 = vadd.f32 %v494, %v796
        %798 = vmatprep.mubr.bf16.mxu0 0
        %799 = vmatmul.mubr.bf16.gmra.mrb[0].mxu0 %v570
        %v800 = vpop.f32.mrb[0].mxu0
        %v801 = vadd.f32 %v490, %v800
        %v802 = vpop.f32.mrb[0].mxu0
        %v803 = vadd.f32 %v494, %v802
        %v804 = vpop.f32.mrb[0].mxu0
        %v805 = vadd.f32 %v490, %v804
        %v806 = vpop.f32.mrb[0].mxu0
        %v807 = vadd.f32 %v494, %v806
        %808 = vmatprep.mubr.bf16.mxu0 0
        %809 = vmatmul.mubr.bf16.gmra.mrb[0].mxu0 %v571
        %v810 = vpop.f32.mrb[0].mxu0
        %v811 = vadd.f32 %v490, %v810
        %v812 = vpop.f32.mrb[0].mxu0
        %v813 = vadd.f32 %v494, %v812
        %v814 = vpop.f32.mrb[0].mxu0
        %v815 = vadd.f32 %v490, %v814
        %v816 = vpop.f32.mrb[0].mxu0
        %v817 = vadd.f32 %v494, %v816
        %818 = vmatprep.mubr.bf16.mxu0 0
        %819 = vmatmul.mubr.bf16.gmra.mrb[0].mxu0 %v572
        %v820 = vpop.f32.mrb[0].mxu0
        %v821 = vadd.f32 %v490, %v820
        %v822 = vpop.f32.mrb[0].mxu0
        %v823 = vadd.f32 %v494, %v822
        %v824 = vpop.f32.mrb[0].mxu0
        %v825 = vadd.f32 %v490, %v824
        %v826 = vpop.f32.mrb[0].mxu0
        %v827 = vadd.f32 %v494, %v826
        %828 = vmatprep.mubr.bf16.mxu0 0
        %829 = vmatmul.mubr.bf16.gmra.mrb[0].mxu0 %v573
        %v830 = vpop.f32.mrb[0].mxu0
        %v831 = vadd.f32 %v490, %v830
        %v832 = vpop.f32.mrb[0].mxu0
        %v833 = vadd.f32 %v494, %v832
        %v834 = vpop.f32.mrb[0].mxu0
        %v835 = vadd.f32 %v490, %v834
        %v836 = vpop.f32.mrb[0].mxu0
        %v837 = vadd.f32 %v494, %v836
        %838 = vmatprep.mubr.bf16.mxu0 0
        %839 = vmatmul.mubr.bf16.gmra.mrb[0].mxu0 %v574
        %v840 = vpop.f32.mrb[0].mxu0
        %v841 = vadd.f32 %v490, %v840
        %v842 = vpop.f32.mrb[0].mxu0
        %v843 = vadd.f32 %v494, %v842
        %v844 = vpop.f32.mrb[0].mxu0
        %v845 = vadd.f32 %v490, %v844
        %v846 = vpop.f32.mrb[0].mxu0
        %v847 = vadd.f32 %v494, %v846
        %848 = vmatprep.mubr.bf16.mxu0 0
        %849 = vmatmul.mubr.bf16.gmra.mrb[0].mxu0 %v575
        %v850 = vpop.f32.mrb[0].mxu0
        %v851 = vadd.f32 %v490, %v850
        %v852 = vpop.f32.mrb[0].mxu0
        %v853 = vadd.f32 %v494, %v852
        %v854 = vpop.f32.mrb[0].mxu0
        %v855 = vadd.f32 %v490, %v854
        %v856 = vpop.f32.mrb[0].mxu0
        %v857 = vadd.f32 %v494, %v856
        %858 = vmatprep.mubr.bf16.mxu0 0
        %859 = vmatmul.mubr.bf16.gmra.mrb[0].mxu0 %v576
        %v860 = vpop.f32.mrb[0].mxu0
        %v861 = vadd.f32 %v490, %v860
        %v862 = vpop.f32.mrb[0].mxu0
        %v863 = vadd.f32 %v494, %v862
        %v864 = vpop.f32.mrb[0].mxu0
        %v865 = vadd.f32 %v490, %v864
        %v866 = vpop.f32.mrb[0].mxu0
        %v867 = vadd.f32 %v494, %v866
        %868 = vmatprep.mubr.bf16.mxu0 0
        %869 = vmatmul.mubr.bf16.gmra.mrb[0].mxu0 %v577
        %v870 = vpop.f32.mrb[0].mxu0
        %v871 = vadd.f32 %v490, %v870
        %v872 = vpop.f32.mrb[0].mxu0
        %v873 = vadd.f32 %v494, %v872
        %v874 = vpop.f32.mrb[0].mxu0
        %v875 = vadd.f32 %v490, %v874
        %v876 = vpop.f32.mrb[0].mxu0
        %v877 = vadd.f32 %v494, %v876
        %878 = vmatprep.mubr.bf16.mxu0 0
        %879 = vmatmul.mubr.bf16.gmra.mrb[0].mxu0 %v578
        %v880 = vpop.f32.mrb[0].mxu0
        %v881 = vadd.f32 %v490, %v880
        %v882 = vpop.f32.mrb[0].mxu0
        %v883 = vadd.f32 %v494, %v882
        %v884 = vpop.f32.mrb[0].mxu0
        %v885 = vadd.f32 %v490, %v884
        %v886 = vpop.f32.mrb[0].mxu0
        %v887 = vadd.f32 %v494, %v886
        %888 = vmatprep.mubr.bf16.mxu0 0
        %889 = vmatmul.mubr.bf16.gmra.mrb[0].mxu0 %v579
        %v890 = vpop.f32.mrb[0].mxu0
        %v891 = vadd.f32 %v490, %v890
        %v892 = vpop.f32.mrb[0].mxu0
        %v893 = vadd.f32 %v494, %v892
        %v894 = vpop.f32.mrb[0].mxu0
        %v895 = vadd.f32 %v490, %v894
        %v896 = vpop.f32.mrb[0].mxu0
        %v897 = vadd.f32 %v494, %v896
        %898 = vmatprep.mubr.bf16.mxu0 0
        %899 = vmatmul.mubr.bf16.gmra.mrb[0].mxu0 %v580
        %v900 = vpop.f32.mrb[0].mxu0
        %v901 = vadd.f32 %v490, %v900
        %v902 = vpop.f32.mrb[0].mxu0
        %v903 = vadd.f32 %v494, %v902
        %v904 = vpop.f32.mrb[0].mxu0
        %v905 = vadd.f32 %v490, %v904
        %v906 = vpop.f32.mrb[0].mxu0
        %v907 = vadd.f32 %v494, %v906
        %908 = vmatprep.mubr.bf16.mxu0 0
        %909 = vmatmul.mubr.bf16.gmra.mrb[0].mxu0 %v581
        %v910 = vpop.f32.mrb[0].mxu0
        %v911 = vadd.f32 %v490, %v910
        %v912 = vpop.f32.mrb[0].mxu0
        %v913 = vadd.f32 %v494, %v912
        %v914 = vpop.f32.mrb[0].mxu0
        %v915 = vadd.f32 %v490, %v914
        %v916 = vpop.f32.mrb[0].mxu0
        %v917 = vadd.f32 %v494, %v916
        %918 = vdwg.mxu0
        %919 = vmatprep.subr.bf16.mxu0 0
        %920 = vmatpush1.bf16.msra.mxu0 %v680
        %921 = vmatprep.subr.bf16.mxu0 0
        %922 = vmatpush1.bf16.msra.mxu0 %v683
        %923 = vmatprep.subr.bf16.mxu0 0
        %924 = vmatpush1.bf16.msra.mxu0 %v686
        %925 = vmatprep.subr.bf16.mxu0 0
        %926 = vmatpush1.bf16.msra.mxu0 %v689
        %927 = vmatprep.subr.bf16.mxu0 0
        %928 = vmatpush1.bf16.msra.mxu0 %v692
        %929 = vmatprep.subr.bf16.mxu0 0
        %930 = vmatpush1.bf16.msra.mxu0 %v695
        %931 = vmatprep.subr.bf16.mxu0 0
        %932 = vmatpush1.bf16.msra.mxu0 %v698
        %933 = vmatprep.subr.bf16.mxu0 0
        %934 = vmatpush1.bf16.msra.mxu0 %v701
        %935 = vmatprep.subr.bf16.mxu0 0
        %936 = vmatpush1.bf16.msra.mxu0 0
        %937 = vmatprep.subr.bf16.mxu0 0
        %938 = vmatpush1.bf16.msra.mxu0 0
        %939 = vmatprep.subr.bf16.mxu0 0
        %940 = vmatpush1.bf16.msra.mxu0 0
        %941 = vmatprep.subr.bf16.mxu0 0
        %942 = vmatpush1.bf16.msra.mxu0 0
        %943 = vmatprep.subr.bf16.mxu0 0
        %944 = vmatpush1.bf16.msra.mxu0 0
        %945 = vmatprep.subr.bf16.mxu0 0
        %946 = vmatpush1.bf16.msra.mxu0 0
        %947 = vmatprep.subr.bf16.mxu0 0
        %948 = vmatpush1.bf16.msra.mxu0 0
        %949 = vmatprep.subr.bf16.mxu0 0
        %950 = vmatpush1.bf16.msra.mxu0 0
        %951 = vmatprep.mubr.bf16.mxu0 0
        %952 = vmatmul.mubr.bf16.gmra.mrb[0].mxu0 %v566
        %v953 = vpop.f32.mrb[0].mxu0
        %v954 = vadd.f32 %v498, %v953
        %v955 = vpop.f32.mrb[0].mxu0
        %v956 = vpop.f32.mrb[0].mxu0
        %v957 = vadd.f32 %v498, %v956
        %v958 = vpop.f32.mrb[0].mxu0
        %959 = vmatprep.mubr.bf16.mxu0 0
        %960 = vmatmul.mubr.bf16.gmra.mrb[0].mxu0 %v567
        %v961 = vpop.f32.mrb[0].mxu0
        %v962 = vadd.f32 %v498, %v961
        %v963 = vpop.f32.mrb[0].mxu0
        %v964 = vpop.f32.mrb[0].mxu0
        %v965 = vadd.f32 %v498, %v964
        %v966 = vpop.f32.mrb[0].mxu0
        %967 = vmatprep.mubr.bf16.mxu0 0
        %968 = vmatmul.mubr.bf16.gmra.mrb[0].mxu0 %v568
        %v969 = vpop.f32.mrb[0].mxu0
        %v970 = vadd.f32 %v498, %v969
        %v971 = vpop.f32.mrb[0].mxu0
        %v972 = vpop.f32.mrb[0].mxu0
        %v973 = vadd.f32 %v498, %v972
        %v974 = vpop.f32.mrb[0].mxu0
        %975 = vmatprep.mubr.bf16.mxu0 0
        %976 = vmatmul.mubr.bf16.gmra.mrb[0].mxu0 %v569
        %v977 = vpop.f32.mrb[0].mxu0
        %v978 = vadd.f32 %v498, %v977
        %v979 = vpop.f32.mrb[0].mxu0
        %v980 = vpop.f32.mrb[0].mxu0
        %v981 = vadd.f32 %v498, %v980
        %v982 = vpop.f32.mrb[0].mxu0
        %983 = vmatprep.mubr.bf16.mxu0 0
        %984 = vmatmul.mubr.bf16.gmra.mrb[0].mxu0 %v570
        %v985 = vpop.f32.mrb[0].mxu0
        %v986 = vadd.f32 %v498, %v985
        %v987 = vpop.f32.mrb[0].mxu0
        %v988 = vpop.f32.mrb[0].mxu0
        %v989 = vadd.f32 %v498, %v988
        %v990 = vpop.f32.mrb[0].mxu0
        %991 = vmatprep.mubr.bf16.mxu0 0
        %992 = vmatmul.mubr.bf16.gmra.mrb[0].mxu0 %v571
        %v993 = vpop.f32.mrb[0].mxu0
        %v994 = vadd.f32 %v498, %v993
        %v995 = vpop.f32.mrb[0].mxu0
        %v996 = vpop.f32.mrb[0].mxu0
        %v997 = vadd.f32 %v498, %v996
        %v998 = vpop.f32.mrb[0].mxu0
        %999 = vmatprep.mubr.bf16.mxu0 0
        %1000 = vmatmul.mubr.bf16.gmra.mrb[0].mxu0 %v572
        %v1001 = vpop.f32.mrb[0].mxu0
        %v1002 = vadd.f32 %v498, %v1001
        %v1003 = vpop.f32.mrb[0].mxu0
        %v1004 = vpop.f32.mrb[0].mxu0
        %v1005 = vadd.f32 %v498, %v1004
        %v1006 = vpop.f32.mrb[0].mxu0
        %1007 = vmatprep.mubr.bf16.mxu0 0
        %1008 = vmatmul.mubr.bf16.gmra.mrb[0].mxu0 %v573
        %v1009 = vpop.f32.mrb[0].mxu0
        %v1010 = vadd.f32 %v498, %v1009
        %v1011 = vpop.f32.mrb[0].mxu0
        %v1012 = vpop.f32.mrb[0].mxu0
        %v1013 = vadd.f32 %v498, %v1012
        %v1014 = vpop.f32.mrb[0].mxu0
        %1015 = vmatprep.mubr.bf16.mxu0 0
        %1016 = vmatmul.mubr.bf16.gmra.mrb[0].mxu0 %v574
        %v1017 = vpop.f32.mrb[0].mxu0
        %v1018 = vadd.f32 %v498, %v1017
        %v1019 = vpop.f32.mrb[0].mxu0
        %v1020 = vpop.f32.mrb[0].mxu0
        %v1021 = vadd.f32 %v498, %v1020
        %v1022 = vpop.f32.mrb[0].mxu0
        %1023 = vmatprep.mubr.bf16.mxu0 0
        %1024 = vmatmul.mubr.bf16.gmra.mrb[0].mxu0 %v575
        %v1025 = vpop.f32.mrb[0].mxu0
        %v1026 = vadd.f32 %v498, %v1025
        %v1027 = vpop.f32.mrb[0].mxu0
        %v1028 = vpop.f32.mrb[0].mxu0
        %v1029 = vadd.f32 %v498, %v1028
        %v1030 = vpop.f32.mrb[0].mxu0
        %1031 = vmatprep.mubr.bf16.mxu0 0
        %1032 = vmatmul.mubr.bf16.gmra.mrb[0].mxu0 %v576
        %v1033 = vpop.f32.mrb[0].mxu0
        %v1034 = vadd.f32 %v498, %v1033
        %v1035 = vpop.f32.mrb[0].mxu0
        %v1036 = vpop.f32.mrb[0].mxu0
        %v1037 = vadd.f32 %v498, %v1036
        %v1038 = vpop.f32.mrb[0].mxu0
        %1039 = vmatprep.mubr.bf16.mxu0 0
        %1040 = vmatmul.mubr.bf16.gmra.mrb[0].mxu0 %v577
        %v1041 = vpop.f32.mrb[0].mxu0
        %v1042 = vadd.f32 %v498, %v1041
        %v1043 = vpop.f32.mrb[0].mxu0
        %v1044 = vpop.f32.mrb[0].mxu0
        %v1045 = vadd.f32 %v498, %v1044
        %v1046 = vpop.f32.mrb[0].mxu0
        %1047 = vmatprep.mubr.bf16.mxu0 0
        %1048 = vmatmul.mubr.bf16.gmra.mrb[0].mxu0 %v578
        %v1049 = vpop.f32.mrb[0].mxu0
        %v1050 = vadd.f32 %v498, %v1049
        %v1051 = vpop.f32.mrb[0].mxu0
        %v1052 = vpop.f32.mrb[0].mxu0
        %v1053 = vadd.f32 %v498, %v1052
        %v1054 = vpop.f32.mrb[0].mxu0
        %1055 = vmatprep.mubr.bf16.mxu0 0
        %1056 = vmatmul.mubr.bf16.gmra.mrb[0].mxu0 %v579
        %v1057 = vpop.f32.mrb[0].mxu0
        %v1058 = vadd.f32 %v498, %v1057
        %v1059 = vpop.f32.mrb[0].mxu0
        %v1060 = vpop.f32.mrb[0].mxu0
        %v1061 = vadd.f32 %v498, %v1060
        %v1062 = vpop.f32.mrb[0].mxu0
        %1063 = vmatprep.mubr.bf16.mxu0 0
        %1064 = vmatmul.mubr.bf16.gmra.mrb[0].mxu0 %v580
        %v1065 = vpop.f32.mrb[0].mxu0
        %v1066 = vadd.f32 %v498, %v1065
        %v1067 = vpop.f32.mrb[0].mxu0
        %v1068 = vpop.f32.mrb[0].mxu0
        %v1069 = vadd.f32 %v498, %v1068
        %v1070 = vpop.f32.mrb[0].mxu0
        %1071 = vmatprep.mubr.bf16.mxu0 0
        %1072 = vmatmul.mubr.bf16.gmra.mrb[0].mxu0 %v581
        %v1073 = vpop.f32.mrb[0].mxu0
        %v1074 = vadd.f32 %v498, %v1073
        %v1075 = vpop.f32.mrb[0].mxu0
        %v1076 = vpop.f32.mrb[0].mxu0
        %v1077 = vadd.f32 %v498, %v1076
        %v1078 = vpop.f32.mrb[0].mxu0
        %1079 = vdwg.mxu0
        %v1080 = vmax.f32 %v761, 0.0
        %v1081 = vmax.f32 %v763, 0.0
        %v1082 = vmax.f32 %v954, 0.0
        %v1083 = vmax.f32 %v765, 0.0
        %v1084 = vmax.f32 %v767, 0.0
        %v1085 = vmax.f32 %v957, 0.0
        %v1086 = vmax.f32 %v771, 0.0
        %v1087 = vmax.f32 %v773, 0.0
        %v1088 = vmax.f32 %v962, 0.0
        %v1089 = vmax.f32 %v775, 0.0
        %v1090 = vmax.f32 %v777, 0.0
        %v1091 = vmax.f32 %v965, 0.0
        %v1092 = vmax.f32 %v781, 0.0
        %v1093 = vmax.f32 %v783, 0.0
        %v1094 = vmax.f32 %v970, 0.0
        %v1095 = vmax.f32 %v785, 0.0
        %v1096 = vmax.f32 %v787, 0.0
        %v1097 = vmax.f32 %v973, 0.0
        %v1098 = vmax.f32 %v791, 0.0
        %v1099 = vmax.f32 %v793, 0.0
        %v1100 = vmax.f32 %v978, 0.0
        %v1101 = vmax.f32 %v795, 0.0
        %v1102 = vmax.f32 %v797, 0.0
        %v1103 = vmax.f32 %v981, 0.0
        %v1104 = vmax.f32 %v801, 0.0
        %v1105 = vmax.f32 %v803, 0.0
        %v1106 = vmax.f32 %v986, 0.0
        %v1107 = vmax.f32 %v805, 0.0
        %v1108 = vmax.f32 %v807, 0.0
        %v1109 = vmax.f32 %v989, 0.0
        %v1110 = vmax.f32 %v811, 0.0
        %v1111 = vmax.f32 %v813, 0.0
        %v1112 = vmax.f32 %v994, 0.0
        %v1113 = vmax.f32 %v815, 0.0
        %v1114 = vmax.f32 %v817, 0.0
        %v1115 = vmax.f32 %v997, 0.0
        %v1116 = vmax.f32 %v821, 0.0
        %v1117 = vmax.f32 %v823, 0.0
        %v1118 = vmax.f32 %v1002, 0.0
        %v1119 = vmax.f32 %v825, 0.0
        %v1120 = vmax.f32 %v827, 0.0
        %v1121 = vmax.f32 %v1005, 0.0
        %v1122 = vmax.f32 %v831, 0.0
        %v1123 = vmax.f32 %v833, 0.0
        %v1124 = vmax.f32 %v1010, 0.0
        %v1125 = vmax.f32 %v835, 0.0
        %v1126 = vmax.f32 %v837, 0.0
        %v1127 = vmax.f32 %v1013, 0.0
        %v1128 = vmax.f32 %v841, 0.0
        %v1129 = vmax.f32 %v843, 0.0
        %v1130 = vmax.f32 %v1018, 0.0
        %v1131 = vmax.f32 %v845, 0.0
        %v1132 = vmax.f32 %v847, 0.0
        %v1133 = vmax.f32 %v1021, 0.0
        %v1134 = vmax.f32 %v851, 0.0
        %v1135 = vmax.f32 %v853, 0.0
        %v1136 = vmax.f32 %v1026, 0.0
        %v1137 = vmax.f32 %v855, 0.0
        %v1138 = vmax.f32 %v857, 0.0
        %v1139 = vmax.f32 %v1029, 0.0
        %v1140 = vmax.f32 %v861, 0.0
        %v1141 = vmax.f32 %v863, 0.0
        %v1142 = vmax.f32 %v1034, 0.0
        %v1143 = vmax.f32 %v865, 0.0
        %v1144 = vmax.f32 %v867, 0.0
        %v1145 = vmax.f32 %v1037, 0.0
        %v1146 = vmax.f32 %v871, 0.0
        %v1147 = vmax.f32 %v873, 0.0
        %v1148 = vmax.f32 %v1042, 0.0
        %v1149 = vmax.f32 %v875, 0.0
        %v1150 = vmax.f32 %v877, 0.0
        %v1151 = vmax.f32 %v1045, 0.0
        %v1152 = vmax.f32 %v881, 0.0
        %v1153 = vmax.f32 %v883, 0.0
        %v1154 = vmax.f32 %v1050, 0.0
        %v1155 = vmax.f32 %v885, 0.0
        %v1156 = vmax.f32 %v887, 0.0
        %v1157 = vmax.f32 %v1053, 0.0
        %v1158 = vmax.f32 %v891, 0.0
        %v1159 = vmax.f32 %v893, 0.0
        %v1160 = vmax.f32 %v1058, 0.0
        %v1161 = vmax.f32 %v895, 0.0
        %v1162 = vmax.f32 %v897, 0.0
        %v1163 = vmax.f32 %v1061, 0.0
        %v1164 = vmax.f32 %v901, 0.0
        %v1165 = vmax.f32 %v903, 0.0
        %v1166 = vmax.f32 %v1066, 0.0
        %v1167 = vmax.f32 %v905, 0.0
        %v1168 = vmax.f32 %v907, 0.0
        %v1169 = vmax.f32 %v1069, 0.0
        %v1170 = vmax.f32 %v911, 0.0
        %v1171 = vmax.f32 %v913, 0.0
        %v1172 = vmax.f32 %v1074, 0.0
        %v1173 = vmax.f32 %v915, 0.0
        %v1174 = vmax.f32 %v917, 0.0
        %v1175 = vmax.f32 %v1077, 0.0
        %v1176 = vld [vmem:[#allocation8] sm:$0xff]
        %v1177 = vld [vmem:[#allocation8 + $0x8] sm:$0xff]
        %v1178 = vld [vmem:[#allocation8 + $0x10] sm:$0xff]
        %v1179 = vld [vmem:[#allocation8 + $0x18] sm:$0xff]
        %v1180 = vld [vmem:[#allocation8 + $0x20] sm:$0xff]
        %v1181 = vld [vmem:[#allocation8 + $0x28] sm:$0xff]
        %v1182 = vld [vmem:[#allocation8 + $0x30] sm:$0xff]
        %v1183 = vld [vmem:[#allocation8 + $0x38] sm:$0xff]
        %v1184 = vld [vmem:[#allocation8 + $0x40] sm:$0xff]
        %v1185 = vld [vmem:[#allocation8 + $0x48] sm:$0xff]
        %v1186 = vld [vmem:[#allocation8 + $0x50] sm:$0xff]
        %v1187 = vld [vmem:[#allocation8 + $0x58] sm:$0xff]
        %v1188 = vld [vmem:[#allocation8 + $0x60] sm:$0xff]
        %v1189 = vld [vmem:[#allocation8 + $0x68] sm:$0xff]
        %v1190 = vld [vmem:[#allocation8 + $0x70] sm:$0xff]
        %v1191 = vld [vmem:[#allocation8 + $0x78] sm:$0xff]
        %v1192 = vld [vmem:[#allocation8 + $0x80] sm:$0xff]
        %v1193 = vld [vmem:[#allocation8 + $0x88] sm:$0xff]
        %v1194 = vld [vmem:[#allocation8 + $0x90] sm:$0xff]
        %v1195 = vld [vmem:[#allocation8 + $0x98] sm:$0xff]
        %v1196 = vld [vmem:[#allocation8 + $0xa0] sm:$0xff]
        %v1197 = vld [vmem:[#allocation8 + $0xa8] sm:$0xff]
        %v1198 = vld [vmem:[#allocation8 + $0xb0] sm:$0xff]
        %v1199 = vld [vmem:[#allocation8 + $0xb8] sm:$0xff]
        %v1200 = vld [vmem:[#allocation8 + $0xc0] sm:$0xff]
        %v1201 = vld [vmem:[#allocation8 + $0xc8] sm:$0xff]
        %v1202 = vld [vmem:[#allocation8 + $0xd0] sm:$0xff]
        %v1203 = vld [vmem:[#allocation8 + $0xd8] sm:$0xff]
        %v1204 = vld [vmem:[#allocation8 + $0xe0] sm:$0xff]
        %v1205 = vld [vmem:[#allocation8 + $0xe8] sm:$0xff]
        %v1206 = vld [vmem:[#allocation8 + $0xf0] sm:$0xff]
        %v1207 = vld [vmem:[#allocation8 + $0xf8] sm:$0xff]
        %v1208 = vld [vmem:[#allocation8 + $0x100] sm:$0xff]
        %v1209 = vld [vmem:[#allocation8 + $0x108] sm:$0xff]
        %v1210 = vld [vmem:[#allocation8 + $0x110] sm:$0xff]
        %v1211 = vld [vmem:[#allocation8 + $0x118] sm:$0xff]
        %v1212 = vld [vmem:[#allocation8 + $0x120] sm:$0xff]
        %v1213 = vld [vmem:[#allocation8 + $0x128] sm:$0xff]
        %v1214 = vld [vmem:[#allocation8 + $0x130] sm:$0xff]
        %v1215 = vld [vmem:[#allocation8 + $0x138] sm:$0xff]
        %v1216 = vld [vmem:[#allocation8 + $0x140] sm:$0xff]
        %v1217 = vld [vmem:[#allocation8 + $0x148] sm:$0xff]
        %v1218 = vld [vmem:[#allocation8 + $0x150] sm:$0xff]
        %v1219 = vld [vmem:[#allocation8 + $0x158] sm:$0xff]
        %v1220 = vld [vmem:[#allocation8 + $0x160] sm:$0xff]
        %v1221 = vld [vmem:[#allocation8 + $0x168] sm:$0xff]
        %v1222 = vld [vmem:[#allocation8 + $0x170] sm:$0xff]
        %v1223 = vld [vmem:[#allocation8 + $0x178] sm:$0xff]
        %v1224 = vld [vmem:[#allocation10] sm:$0x1]
        %v1226 = vlaneseq
        %v1227 = vshrl.u32 %v1226, 7
        %v1228 = vsub.s32 0, %v1227
        %v1229 = vrot.slane %v1224, %v1228
        %1231 = vmatprep.subr.mxu0 0.0
        %1232 = vmatpush1.msra.mxu0 %v1176
        %1233 = vmatprep.subr.mxu0 0.0
        %1234 = vmatpush1.msra.mxu0 %v1177
        %1235 = vmatprep.subr.mxu0 0.0
        %1236 = vmatpush1.msra.mxu0 %v1178
        %1237 = vmatprep.subr.mxu0 0.0
        %1238 = vmatpush1.msra.mxu0 %v1179
        %1239 = vmatprep.subr.mxu0 0.0
        %1240 = vmatpush1.msra.mxu0 %v1180
        %1241 = vmatprep.subr.mxu0 0.0
        %1242 = vmatpush1.msra.mxu0 %v1181
        %1243 = vmatprep.subr.mxu0 0.0
        %1244 = vmatpush1.msra.mxu0 %v1182
        %1245 = vmatprep.subr.mxu0 0.0
        %1246 = vmatpush1.msra.mxu0 %v1183
        %1247 = vmatprep.subr.mxu0 0.0
        %1248 = vmatpush1.msra.mxu0 %v1184
        %1249 = vmatprep.subr.mxu0 0.0
        %1250 = vmatpush1.msra.mxu0 %v1185
        %1251 = vmatprep.subr.mxu0 0.0
        %1252 = vmatpush1.msra.mxu0 %v1186
        %1253 = vmatprep.subr.mxu0 0.0
        %1254 = vmatpush1.msra.mxu0 %v1187
        %1255 = vmatprep.subr.mxu0 0.0
        %1256 = vmatpush1.msra.mxu0 %v1188
        %1257 = vmatprep.subr.mxu0 0.0
        %1258 = vmatpush1.msra.mxu0 %v1189
        %1259 = vmatprep.subr.mxu0 0.0
        %1260 = vmatpush1.msra.mxu0 %v1190
        %1261 = vmatprep.subr.mxu0 0.0
        %1262 = vmatpush1.msra.mxu0 %v1191
        %1263 = vmatprep.subr.mxu0 0.0
        %1264 = vmatpush1.msra.mxu0 %v1192
        %1265 = vmatprep.subr.mxu0 0.0
        %1266 = vmatpush1.msra.mxu0 %v1193
        %1267 = vmatprep.subr.mxu0 0.0
        %1268 = vmatpush1.msra.mxu0 %v1194
        %1269 = vmatprep.subr.mxu0 0.0
        %1270 = vmatpush1.msra.mxu0 %v1195
        %1271 = vmatprep.subr.mxu0 0.0
        %1272 = vmatpush1.msra.mxu0 %v1196
        %1273 = vmatprep.subr.mxu0 0.0
        %1274 = vmatpush1.msra.mxu0 %v1197
        %1275 = vmatprep.subr.mxu0 0.0
        %1276 = vmatpush1.msra.mxu0 %v1198
        %1277 = vmatprep.subr.mxu0 0.0
        %1278 = vmatpush1.msra.mxu0 %v1199
        %1279 = vmatprep.subr.mxu0 0.0
        %1280 = vmatpush1.msra.mxu0 %v1200
        %1281 = vmatprep.subr.mxu0 0.0
        %1282 = vmatpush1.msra.mxu0 %v1201
        %1283 = vmatprep.subr.mxu0 0.0
        %1284 = vmatpush1.msra.mxu0 %v1202
        %1285 = vmatprep.subr.mxu0 0.0
        %1286 = vmatpush1.msra.mxu0 %v1203
        %1287 = vmatprep.subr.mxu0 0.0
        %1288 = vmatpush1.msra.mxu0 %v1204
        %1289 = vmatprep.subr.mxu0 0.0
        %1290 = vmatpush1.msra.mxu0 %v1205
        %1291 = vmatprep.subr.mxu0 0.0
        %1292 = vmatpush1.msra.mxu0 %v1206
        %1293 = vmatprep.subr.mxu0 0.0
        %1294 = vmatpush1.msra.mxu0 %v1207
        %1295 = vmatprep.mubr.f32.mxu0 %v1081
        %1296 = vmatmul.mubr.f32.gmra.mrb[0].mxu0 %v1080
        %v1297 = vpop.f32.mrb[0].mxu0
        %v1298 = vadd.f32 %v1229, %v1297
        %v1299 = vpop.f32.mrb[0].mxu0
        %1300 = vmatprep.mubr.f32.mxu0 %v1084
        %1301 = vmatmul.mubr.f32.gmra.mrb[0].mxu0 %v1083
        %v1302 = vpop.f32.mrb[0].mxu0
        %v1303 = vadd.f32 %v1229, %v1302
        %v1304 = vpop.f32.mrb[0].mxu0
        %1305 = vmatprep.mubr.f32.mxu0 %v1087
        %1306 = vmatmul.mubr.f32.gmra.mrb[0].mxu0 %v1086
        %v1307 = vpop.f32.mrb[0].mxu0
        %v1308 = vadd.f32 %v1229, %v1307
        %v1309 = vpop.f32.mrb[0].mxu0
        %1310 = vmatprep.mubr.f32.mxu0 %v1090
        %1311 = vmatmul.mubr.f32.gmra.mrb[0].mxu0 %v1089
        %v1312 = vpop.f32.mrb[0].mxu0
        %v1313 = vadd.f32 %v1229, %v1312
        %v1314 = vpop.f32.mrb[0].mxu0
        %1315 = vmatprep.mubr.f32.mxu0 %v1093
        %1316 = vmatmul.mubr.f32.gmra.mrb[0].mxu0 %v1092
        %v1317 = vpop.f32.mrb[0].mxu0
        %v1318 = vadd.f32 %v1229, %v1317
        %v1319 = vpop.f32.mrb[0].mxu0
        %1320 = vmatprep.mubr.f32.mxu0 %v1096
        %1321 = vmatmul.mubr.f32.gmra.mrb[0].mxu0 %v1095
        %v1322 = vpop.f32.mrb[0].mxu0
        %v1323 = vadd.f32 %v1229, %v1322
        %v1324 = vpop.f32.mrb[0].mxu0
        %1325 = vmatprep.mubr.f32.mxu0 %v1099
        %1326 = vmatmul.mubr.f32.gmra.mrb[0].mxu0 %v1098
        %v1327 = vpop.f32.mrb[0].mxu0
        %v1328 = vadd.f32 %v1229, %v1327
        %v1329 = vpop.f32.mrb[0].mxu0
        %1330 = vmatprep.mubr.f32.mxu0 %v1102
        %1331 = vmatmul.mubr.f32.gmra.mrb[0].mxu0 %v1101
        %v1332 = vpop.f32.mrb[0].mxu0
        %v1333 = vadd.f32 %v1229, %v1332
        %v1334 = vpop.f32.mrb[0].mxu0
        %1335 = vmatprep.mubr.f32.mxu0 %v1105
        %1336 = vmatmul.mubr.f32.gmra.mrb[0].mxu0 %v1104
        %v1337 = vpop.f32.mrb[0].mxu0
        %v1338 = vadd.f32 %v1229, %v1337
        %v1339 = vpop.f32.mrb[0].mxu0
        %1340 = vmatprep.mubr.f32.mxu0 %v1108
        %1341 = vmatmul.mubr.f32.gmra.mrb[0].mxu0 %v1107
        %v1342 = vpop.f32.mrb[0].mxu0
        %v1343 = vadd.f32 %v1229, %v1342
        %v1344 = vpop.f32.mrb[0].mxu0
        %1345 = vmatprep.mubr.f32.mxu0 %v1111
        %1346 = vmatmul.mubr.f32.gmra.mrb[0].mxu0 %v1110
        %v1347 = vpop.f32.mrb[0].mxu0
        %v1348 = vadd.f32 %v1229, %v1347
        %v1349 = vpop.f32.mrb[0].mxu0
        %1350 = vmatprep.mubr.f32.mxu0 %v1114
        %1351 = vmatmul.mubr.f32.gmra.mrb[0].mxu0 %v1113
        %v1352 = vpop.f32.mrb[0].mxu0
        %v1353 = vadd.f32 %v1229, %v1352
        %v1354 = vpop.f32.mrb[0].mxu0
        %1355 = vmatprep.mubr.f32.mxu0 %v1117
        %1356 = vmatmul.mubr.f32.gmra.mrb[0].mxu0 %v1116
        %v1357 = vpop.f32.mrb[0].mxu0
        %v1358 = vadd.f32 %v1229, %v1357
        %v1359 = vpop.f32.mrb[0].mxu0
        %1360 = vmatprep.mubr.f32.mxu0 %v1120
        %1361 = vmatmul.mubr.f32.gmra.mrb[0].mxu0 %v1119
        %v1362 = vpop.f32.mrb[0].mxu0
        %v1363 = vadd.f32 %v1229, %v1362
        %v1364 = vpop.f32.mrb[0].mxu0
        %1365 = vmatprep.mubr.f32.mxu0 %v1123
        %1366 = vmatmul.mubr.f32.gmra.mrb[0].mxu0 %v1122
        %v1367 = vpop.f32.mrb[0].mxu0
        %v1368 = vadd.f32 %v1229, %v1367
        %v1369 = vpop.f32.mrb[0].mxu0
        %1370 = vmatprep.mubr.f32.mxu0 %v1126
        %1371 = vmatmul.mubr.f32.gmra.mrb[0].mxu0 %v1125
        %v1372 = vpop.f32.mrb[0].mxu0
        %v1373 = vadd.f32 %v1229, %v1372
        %v1374 = vpop.f32.mrb[0].mxu0
        %1375 = vmatprep.mubr.f32.mxu0 %v1129
        %1376 = vmatmul.mubr.f32.gmra.mrb[0].mxu0 %v1128
        %v1377 = vpop.f32.mrb[0].mxu0
        %v1378 = vadd.f32 %v1229, %v1377
        %v1379 = vpop.f32.mrb[0].mxu0
        %1380 = vmatprep.mubr.f32.mxu0 %v1132
        %1381 = vmatmul.mubr.f32.gmra.mrb[0].mxu0 %v1131
        %v1382 = vpop.f32.mrb[0].mxu0
        %v1383 = vadd.f32 %v1229, %v1382
        %v1384 = vpop.f32.mrb[0].mxu0
        %1385 = vmatprep.mubr.f32.mxu0 %v1135
        %1386 = vmatmul.mubr.f32.gmra.mrb[0].mxu0 %v1134
        %v1387 = vpop.f32.mrb[0].mxu0
        %v1388 = vadd.f32 %v1229, %v1387
        %v1389 = vpop.f32.mrb[0].mxu0
        %1390 = vmatprep.mubr.f32.mxu0 %v1138
        %1391 = vmatmul.mubr.f32.gmra.mrb[0].mxu0 %v1137
        %v1392 = vpop.f32.mrb[0].mxu0
        %v1393 = vadd.f32 %v1229, %v1392
        %v1394 = vpop.f32.mrb[0].mxu0
        %1395 = vmatprep.mubr.f32.mxu0 %v1141
        %1396 = vmatmul.mubr.f32.gmra.mrb[0].mxu0 %v1140
        %v1397 = vpop.f32.mrb[0].mxu0
        %v1398 = vadd.f32 %v1229, %v1397
        %v1399 = vpop.f32.mrb[0].mxu0
        %1400 = vmatprep.mubr.f32.mxu0 %v1144
        %1401 = vmatmul.mubr.f32.gmra.mrb[0].mxu0 %v1143
        %v1402 = vpop.f32.mrb[0].mxu0
        %v1403 = vadd.f32 %v1229, %v1402
        %v1404 = vpop.f32.mrb[0].mxu0
        %1405 = vmatprep.mubr.f32.mxu0 %v1147
        %1406 = vmatmul.mubr.f32.gmra.mrb[0].mxu0 %v1146
        %v1407 = vpop.f32.mrb[0].mxu0
        %v1408 = vadd.f32 %v1229, %v1407
        %v1409 = vpop.f32.mrb[0].mxu0
        %1410 = vmatprep.mubr.f32.mxu0 %v1150
        %1411 = vmatmul.mubr.f32.gmra.mrb[0].mxu0 %v1149
        %v1412 = vpop.f32.mrb[0].mxu0
        %v1413 = vadd.f32 %v1229, %v1412
        %v1414 = vpop.f32.mrb[0].mxu0
        %1415 = vmatprep.mubr.f32.mxu0 %v1153
        %1416 = vmatmul.mubr.f32.gmra.mrb[0].mxu0 %v1152
        %v1417 = vpop.f32.mrb[0].mxu0
        %v1418 = vadd.f32 %v1229, %v1417
        %v1419 = vpop.f32.mrb[0].mxu0
        %1420 = vmatprep.mubr.f32.mxu0 %v1156
        %1421 = vmatmul.mubr.f32.gmra.mrb[0].mxu0 %v1155
        %v1422 = vpop.f32.mrb[0].mxu0
        %v1423 = vadd.f32 %v1229, %v1422
        %v1424 = vpop.f32.mrb[0].mxu0
        %1425 = vmatprep.mubr.f32.mxu0 %v1159
        %1426 = vmatmul.mubr.f32.gmra.mrb[0].mxu0 %v1158
        %v1427 = vpop.f32.mrb[0].mxu0
        %v1428 = vadd.f32 %v1229, %v1427
        %v1429 = vpop.f32.mrb[0].mxu0
        %1430 = vmatprep.mubr.f32.mxu0 %v1162
        %1431 = vmatmul.mubr.f32.gmra.mrb[0].mxu0 %v1161
        %v1432 = vpop.f32.mrb[0].mxu0
        %v1433 = vadd.f32 %v1229, %v1432
        %v1434 = vpop.f32.mrb[0].mxu0
        %1435 = vmatprep.mubr.f32.mxu0 %v1165
        %1436 = vmatmul.mubr.f32.gmra.mrb[0].mxu0 %v1164
        %v1437 = vpop.f32.mrb[0].mxu0
        %v1438 = vadd.f32 %v1229, %v1437
        %v1439 = vpop.f32.mrb[0].mxu0
        %1440 = vmatprep.mubr.f32.mxu0 %v1168
        %1441 = vmatmul.mubr.f32.gmra.mrb[0].mxu0 %v1167
        %v1442 = vpop.f32.mrb[0].mxu0
        %v1443 = vadd.f32 %v1229, %v1442
        %v1444 = vpop.f32.mrb[0].mxu0
        %1445 = vmatprep.mubr.f32.mxu0 %v1171
        %1446 = vmatmul.mubr.f32.gmra.mrb[0].mxu0 %v1170
        %v1447 = vpop.f32.mrb[0].mxu0
        %v1448 = vadd.f32 %v1229, %v1447
        %v1449 = vpop.f32.mrb[0].mxu0
        %1450 = vmatprep.mubr.f32.mxu0 %v1174
        %1451 = vmatmul.mubr.f32.gmra.mrb[0].mxu0 %v1173
        %v1452 = vpop.f32.mrb[0].mxu0
        %v1453 = vadd.f32 %v1229, %v1452
        %v1454 = vpop.f32.mrb[0].mxu0
        %1455 = vdwg.mxu0
        %1456 = vmatprep.subr.mxu0 0.0
        %1457 = vmatpush1.msra.mxu0 %v1208
        %1458 = vmatprep.subr.mxu0 0.0
        %1459 = vmatpush1.msra.mxu0 %v1209
        %1460 = vmatprep.subr.mxu0 0.0
        %1461 = vmatpush1.msra.mxu0 %v1210
        %1462 = vmatprep.subr.mxu0 0.0
        %1463 = vmatpush1.msra.mxu0 %v1211
        %1464 = vmatprep.subr.mxu0 0.0
        %1465 = vmatpush1.msra.mxu0 %v1212
        %1466 = vmatprep.subr.mxu0 0.0
        %1467 = vmatpush1.msra.mxu0 %v1213
        %1468 = vmatprep.subr.mxu0 0.0
        %1469 = vmatpush1.msra.mxu0 %v1214
        %1470 = vmatprep.subr.mxu0 0.0
        %1471 = vmatpush1.msra.mxu0 %v1215
        %1472 = vmatprep.subr.mxu0 0.0
        %1473 = vmatpush1.msra.mxu0 %v1216
        %1474 = vmatprep.subr.mxu0 0.0
        %1475 = vmatpush1.msra.mxu0 %v1217
        %1476 = vmatprep.subr.mxu0 0.0
        %1477 = vmatpush1.msra.mxu0 %v1218
        %1478 = vmatprep.subr.mxu0 0.0
        %1479 = vmatpush1.msra.mxu0 %v1219
        %1480 = vmatprep.subr.mxu0 0.0
        %1481 = vmatpush1.msra.mxu0 %v1220
        %1482 = vmatprep.subr.mxu0 0.0
        %1483 = vmatpush1.msra.mxu0 %v1221
        %1484 = vmatprep.subr.mxu0 0.0
        %1485 = vmatpush1.msra.mxu0 %v1222
        %1486 = vmatprep.subr.mxu0 0.0
        %1487 = vmatpush1.msra.mxu0 %v1223
        %1488 = vmatprep.subr.mxu0 0.0
        %1489 = vmatpush1.msra.mxu0 0.0
        %1490 = vmatprep.subr.mxu0 0.0
        %1491 = vmatpush1.msra.mxu0 0.0
        %1492 = vmatprep.subr.mxu0 0.0
        %1493 = vmatpush1.msra.mxu0 0.0
        %1494 = vmatprep.subr.mxu0 0.0
        %1495 = vmatpush1.msra.mxu0 0.0
        %1496 = vmatprep.subr.mxu0 0.0
        %1497 = vmatpush1.msra.mxu0 0.0
        %1498 = vmatprep.subr.mxu0 0.0
        %1499 = vmatpush1.msra.mxu0 0.0
        %1500 = vmatprep.subr.mxu0 0.0
        %1501 = vmatpush1.msra.mxu0 0.0
        %1502 = vmatprep.subr.mxu0 0.0
        %1503 = vmatpush1.msra.mxu0 0.0
        %1504 = vmatprep.subr.mxu0 0.0
        %1505 = vmatpush1.msra.mxu0 0.0
        %1506 = vmatprep.subr.mxu0 0.0
        %1507 = vmatpush1.msra.mxu0 0.0
        %1508 = vmatprep.subr.mxu0 0.0
        %1509 = vmatpush1.msra.mxu0 0.0
        %1510 = vmatprep.subr.mxu0 0.0
        %1511 = vmatpush1.msra.mxu0 0.0
        %1512 = vmatprep.subr.mxu0 0.0
        %1513 = vmatpush1.msra.mxu0 0.0
        %1514 = vmatprep.subr.mxu0 0.0
        %1515 = vmatpush1.msra.mxu0 0.0
        %1516 = vmatprep.subr.mxu0 0.0
        %1517 = vmatpush1.msra.mxu0 0.0
        %1518 = vmatprep.subr.mxu0 0.0
        %1519 = vmatpush1.msra.mxu0 0.0
        %1520 = vmatprep.mubr.f32.mxu0 0.0
        %1521 = vmatmul.mubr.f32.gmra.mrb[0].mxu0 %v1082
        %v1522 = vpop.f32.mrb[0].mxu0
        %v1523 = vadd.f32 %v1298, %v1522
        %v1524 = vpop.f32.mrb[0].mxu0
        %1525 = vmatprep.mubr.f32.mxu0 0.0
        %1526 = vmatmul.mubr.f32.gmra.mrb[0].mxu0 %v1085
        %v1527 = vpop.f32.mrb[0].mxu0
        %v1528 = vadd.f32 %v1303, %v1527
        %v1529 = vpop.f32.mrb[0].mxu0
        %1530 = vmatprep.mubr.f32.mxu0 0.0
        %1531 = vmatmul.mubr.f32.gmra.mrb[0].mxu0 %v1088
        %v1532 = vpop.f32.mrb[0].mxu0
        %v1533 = vadd.f32 %v1308, %v1532
        %v1534 = vpop.f32.mrb[0].mxu0
        %1535 = vmatprep.mubr.f32.mxu0 0.0
        %1536 = vmatmul.mubr.f32.gmra.mrb[0].mxu0 %v1091
        %v1537 = vpop.f32.mrb[0].mxu0
        %v1538 = vadd.f32 %v1313, %v1537
        %v1539 = vpop.f32.mrb[0].mxu0
        %1540 = vmatprep.mubr.f32.mxu0 0.0
        %1541 = vmatmul.mubr.f32.gmra.mrb[0].mxu0 %v1094
        %v1542 = vpop.f32.mrb[0].mxu0
        %v1543 = vadd.f32 %v1318, %v1542
        %v1544 = vpop.f32.mrb[0].mxu0
        %1545 = vmatprep.mubr.f32.mxu0 0.0
        %1546 = vmatmul.mubr.f32.gmra.mrb[0].mxu0 %v1097
        %v1547 = vpop.f32.mrb[0].mxu0
        %v1548 = vadd.f32 %v1323, %v1547
        %v1549 = vpop.f32.mrb[0].mxu0
        %1550 = vmatprep.mubr.f32.mxu0 0.0
        %1551 = vmatmul.mubr.f32.gmra.mrb[0].mxu0 %v1100
        %v1552 = vpop.f32.mrb[0].mxu0
        %v1553 = vadd.f32 %v1328, %v1552
        %v1554 = vpop.f32.mrb[0].mxu0
        %1555 = vmatprep.mubr.f32.mxu0 0.0
        %1556 = vmatmul.mubr.f32.gmra.mrb[0].mxu0 %v1103
        %v1557 = vpop.f32.mrb[0].mxu0
        %v1558 = vadd.f32 %v1333, %v1557
        %v1559 = vpop.f32.mrb[0].mxu0
        %1560 = vmatprep.mubr.f32.mxu0 0.0
        %1561 = vmatmul.mubr.f32.gmra.mrb[0].mxu0 %v1106
        %v1562 = vpop.f32.mrb[0].mxu0
        %v1563 = vadd.f32 %v1338, %v1562
        %v1564 = vpop.f32.mrb[0].mxu0
        %1565 = vmatprep.mubr.f32.mxu0 0.0
        %1566 = vmatmul.mubr.f32.gmra.mrb[0].mxu0 %v1109
        %v1567 = vpop.f32.mrb[0].mxu0
        %v1568 = vadd.f32 %v1343, %v1567
        %v1569 = vpop.f32.mrb[0].mxu0
        %1570 = vmatprep.mubr.f32.mxu0 0.0
        %1571 = vmatmul.mubr.f32.gmra.mrb[0].mxu0 %v1112
        %v1572 = vpop.f32.mrb[0].mxu0
        %v1573 = vadd.f32 %v1348, %v1572
        %v1574 = vpop.f32.mrb[0].mxu0
        %1575 = vmatprep.mubr.f32.mxu0 0.0
        %1576 = vmatmul.mubr.f32.gmra.mrb[0].mxu0 %v1115
        %v1577 = vpop.f32.mrb[0].mxu0
        %v1578 = vadd.f32 %v1353, %v1577
        %v1579 = vpop.f32.mrb[0].mxu0
        %1580 = vmatprep.mubr.f32.mxu0 0.0
        %1581 = vmatmul.mubr.f32.gmra.mrb[0].mxu0 %v1118
        %v1582 = vpop.f32.mrb[0].mxu0
        %v1583 = vadd.f32 %v1358, %v1582
        %v1584 = vpop.f32.mrb[0].mxu0
        %1585 = vmatprep.mubr.f32.mxu0 0.0
        %1586 = vmatmul.mubr.f32.gmra.mrb[0].mxu0 %v1121
        %v1587 = vpop.f32.mrb[0].mxu0
        %v1588 = vadd.f32 %v1363, %v1587
        %v1589 = vpop.f32.mrb[0].mxu0
        %1590 = vmatprep.mubr.f32.mxu0 0.0
        %1591 = vmatmul.mubr.f32.gmra.mrb[0].mxu0 %v1124
        %v1592 = vpop.f32.mrb[0].mxu0
        %v1593 = vadd.f32 %v1368, %v1592
        %v1594 = vpop.f32.mrb[0].mxu0
        %1595 = vmatprep.mubr.f32.mxu0 0.0
        %1596 = vmatmul.mubr.f32.gmra.mrb[0].mxu0 %v1127
        %v1597 = vpop.f32.mrb[0].mxu0
        %v1598 = vadd.f32 %v1373, %v1597
        %v1599 = vpop.f32.mrb[0].mxu0
        %1600 = vmatprep.mubr.f32.mxu0 0.0
        %1601 = vmatmul.mubr.f32.gmra.mrb[0].mxu0 %v1130
        %v1602 = vpop.f32.mrb[0].mxu0
        %v1603 = vadd.f32 %v1378, %v1602
        %v1604 = vpop.f32.mrb[0].mxu0
        %1605 = vmatprep.mubr.f32.mxu0 0.0
        %1606 = vmatmul.mubr.f32.gmra.mrb[0].mxu0 %v1133
        %v1607 = vpop.f32.mrb[0].mxu0
        %v1608 = vadd.f32 %v1383, %v1607
        %v1609 = vpop.f32.mrb[0].mxu0
        %1610 = vmatprep.mubr.f32.mxu0 0.0
        %1611 = vmatmul.mubr.f32.gmra.mrb[0].mxu0 %v1136
        %v1612 = vpop.f32.mrb[0].mxu0
        %v1613 = vadd.f32 %v1388, %v1612
        %v1614 = vpop.f32.mrb[0].mxu0
        %1615 = vmatprep.mubr.f32.mxu0 0.0
        %1616 = vmatmul.mubr.f32.gmra.mrb[0].mxu0 %v1139
        %v1617 = vpop.f32.mrb[0].mxu0
        %v1618 = vadd.f32 %v1393, %v1617
        %v1619 = vpop.f32.mrb[0].mxu0
        %1620 = vmatprep.mubr.f32.mxu0 0.0
        %1621 = vmatmul.mubr.f32.gmra.mrb[0].mxu0 %v1142
        %v1622 = vpop.f32.mrb[0].mxu0
        %v1623 = vadd.f32 %v1398, %v1622
        %v1624 = vpop.f32.mrb[0].mxu0
        %1625 = vmatprep.mubr.f32.mxu0 0.0
        %1626 = vmatmul.mubr.f32.gmra.mrb[0].mxu0 %v1145
        %v1627 = vpop.f32.mrb[0].mxu0
        %v1628 = vadd.f32 %v1403, %v1627
        %v1629 = vpop.f32.mrb[0].mxu0
        %1630 = vmatprep.mubr.f32.mxu0 0.0
        %1631 = vmatmul.mubr.f32.gmra.mrb[0].mxu0 %v1148
        %v1632 = vpop.f32.mrb[0].mxu0
        %v1633 = vadd.f32 %v1408, %v1632
        %v1634 = vpop.f32.mrb[0].mxu0
        %1635 = vmatprep.mubr.f32.mxu0 0.0
        %1636 = vmatmul.mubr.f32.gmra.mrb[0].mxu0 %v1151
        %v1637 = vpop.f32.mrb[0].mxu0
        %v1638 = vadd.f32 %v1413, %v1637
        %v1639 = vpop.f32.mrb[0].mxu0
        %1640 = vmatprep.mubr.f32.mxu0 0.0
        %1641 = vmatmul.mubr.f32.gmra.mrb[0].mxu0 %v1154
        %v1642 = vpop.f32.mrb[0].mxu0
        %v1643 = vadd.f32 %v1418, %v1642
        %v1644 = vpop.f32.mrb[0].mxu0
        %1645 = vmatprep.mubr.f32.mxu0 0.0
        %1646 = vmatmul.mubr.f32.gmra.mrb[0].mxu0 %v1157
        %v1647 = vpop.f32.mrb[0].mxu0
        %v1648 = vadd.f32 %v1423, %v1647
        %v1649 = vpop.f32.mrb[0].mxu0
        %1650 = vmatprep.mubr.f32.mxu0 0.0
        %1651 = vmatmul.mubr.f32.gmra.mrb[0].mxu0 %v1160
        %v1652 = vpop.f32.mrb[0].mxu0
        %v1653 = vadd.f32 %v1428, %v1652
        %v1654 = vpop.f32.mrb[0].mxu0
        %1655 = vmatprep.mubr.f32.mxu0 0.0
        %1656 = vmatmul.mubr.f32.gmra.mrb[0].mxu0 %v1163
        %v1657 = vpop.f32.mrb[0].mxu0
        %v1658 = vadd.f32 %v1433, %v1657
        %v1659 = vpop.f32.mrb[0].mxu0
        %1660 = vmatprep.mubr.f32.mxu0 0.0
        %1661 = vmatmul.mubr.f32.gmra.mrb[0].mxu0 %v1166
        %v1662 = vpop.f32.mrb[0].mxu0
        %v1663 = vadd.f32 %v1438, %v1662
        %v1664 = vpop.f32.mrb[0].mxu0
        %1665 = vmatprep.mubr.f32.mxu0 0.0
        %1666 = vmatmul.mubr.f32.gmra.mrb[0].mxu0 %v1169
        %v1667 = vpop.f32.mrb[0].mxu0
        %v1668 = vadd.f32 %v1443, %v1667
        %v1669 = vpop.f32.mrb[0].mxu0
        %1670 = vmatprep.mubr.f32.mxu0 0.0
        %1671 = vmatmul.mubr.f32.gmra.mrb[0].mxu0 %v1172
        %v1672 = vpop.f32.mrb[0].mxu0
        %v1673 = vadd.f32 %v1448, %v1672
        %v1674 = vpop.f32.mrb[0].mxu0
        %1675 = vmatprep.mubr.f32.mxu0 0.0
        %1676 = vmatmul.mubr.f32.gmra.mrb[0].mxu0 %v1175
        %v1677 = vpop.f32.mrb[0].mxu0
        %v1678 = vadd.f32 %v1453, %v1677
        %v1679 = vpop.f32.mrb[0].mxu0
        %1680 = vdwg.mxu0
        %1713 = vrot.lane.b32.xlu0 %v1523, 127
        %v1714 = vpop.permute.xlu0 %1713
        %1715 = vrot.lane.b32.xlu0 %v1528, 127
        %v1716 = vpop.permute.xlu0 %1715
        %1717 = vrot.lane.b32.xlu0 %v1533, 127
        %v1718 = vpop.permute.xlu0 %1717
        %1719 = vrot.lane.b32.xlu0 %v1538, 127
        %v1720 = vpop.permute.xlu0 %1719
        %1721 = vrot.lane.b32.xlu0 %v1543, 127
        %v1722 = vpop.permute.xlu0 %1721
        %1723 = vrot.lane.b32.xlu0 %v1548, 127
        %v1724 = vpop.permute.xlu0 %1723
        %1725 = vrot.lane.b32.xlu0 %v1553, 127
        %v1726 = vpop.permute.xlu0 %1725
        %1727 = vrot.lane.b32.xlu0 %v1558, 127
        %v1728 = vpop.permute.xlu0 %1727
        %1729 = vrot.lane.b32.xlu0 %v1563, 127
        %v1730 = vpop.permute.xlu0 %1729
        %1731 = vrot.lane.b32.xlu0 %v1568, 127
        %v1732 = vpop.permute.xlu0 %1731
        %1733 = vrot.lane.b32.xlu0 %v1573, 127
        %v1734 = vpop.permute.xlu0 %1733
        %1735 = vrot.lane.b32.xlu0 %v1578, 127
        %v1736 = vpop.permute.xlu0 %1735
        %1737 = vrot.lane.b32.xlu0 %v1583, 127
        %v1738 = vpop.permute.xlu0 %1737
        %1739 = vrot.lane.b32.xlu0 %v1588, 127
        %v1740 = vpop.permute.xlu0 %1739
        %1741 = vrot.lane.b32.xlu0 %v1593, 127
        %v1742 = vpop.permute.xlu0 %1741
        %1743 = vrot.lane.b32.xlu0 %v1598, 127
        %v1744 = vpop.permute.xlu0 %1743
        %1745 = vrot.lane.b32.xlu0 %v1603, 127
        %v1746 = vpop.permute.xlu0 %1745
        %1747 = vrot.lane.b32.xlu0 %v1608, 127
        %v1748 = vpop.permute.xlu0 %1747
        %1749 = vrot.lane.b32.xlu0 %v1613, 127
        %v1750 = vpop.permute.xlu0 %1749
        %1751 = vrot.lane.b32.xlu0 %v1618, 127
        %v1752 = vpop.permute.xlu0 %1751
        %1753 = vrot.lane.b32.xlu0 %v1623, 127
        %v1754 = vpop.permute.xlu0 %1753
        %1755 = vrot.lane.b32.xlu0 %v1628, 127
        %v1756 = vpop.permute.xlu0 %1755
        %1757 = vrot.lane.b32.xlu0 %v1633, 127
        %v1758 = vpop.permute.xlu0 %1757
        %1759 = vrot.lane.b32.xlu0 %v1638, 127
        %v1760 = vpop.permute.xlu0 %1759
        %1761 = vrot.lane.b32.xlu0 %v1643, 127
        %v1762 = vpop.permute.xlu0 %1761
        %1763 = vrot.lane.b32.xlu0 %v1648, 127
        %v1764 = vpop.permute.xlu0 %1763
        %1765 = vrot.lane.b32.xlu0 %v1653, 127
        %v1766 = vpop.permute.xlu0 %1765
        %1767 = vrot.lane.b32.xlu0 %v1658, 127
        %v1768 = vpop.permute.xlu0 %1767
        %1769 = vrot.lane.b32.xlu0 %v1663, 127
        %v1770 = vpop.permute.xlu0 %1769
        %1771 = vrot.lane.b32.xlu0 %v1668, 127
        %v1772 = vpop.permute.xlu0 %1771
        %1773 = vrot.lane.b32.xlu0 %v1673, 127
        %v1774 = vpop.permute.xlu0 %1773
        %1775 = vrot.lane.b32.xlu0 %v1678, 127
        %v1776 = vpop.permute.xlu0 %1775
        %v1809 = vmax.f32 %v1523, %v1714
        %v1810 = vmax.f32 %v1528, %v1716
        %v1811 = vmax.f32 %v1533, %v1718
        %v1812 = vmax.f32 %v1538, %v1720
        %v1813 = vmax.f32 %v1543, %v1722
        %v1814 = vmax.f32 %v1548, %v1724
        %v1815 = vmax.f32 %v1553, %v1726
        %v1816 = vmax.f32 %v1558, %v1728
        %v1817 = vmax.f32 %v1563, %v1730
        %v1818 = vmax.f32 %v1568, %v1732
        %v1819 = vmax.f32 %v1573, %v1734
        %v1820 = vmax.f32 %v1578, %v1736
        %v1821 = vmax.f32 %v1583, %v1738
        %v1822 = vmax.f32 %v1588, %v1740
        %v1823 = vmax.f32 %v1593, %v1742
        %v1824 = vmax.f32 %v1598, %v1744
        %v1825 = vmax.f32 %v1603, %v1746
        %v1826 = vmax.f32 %v1608, %v1748
        %v1827 = vmax.f32 %v1613, %v1750
        %v1828 = vmax.f32 %v1618, %v1752
        %v1829 = vmax.f32 %v1623, %v1754
        %v1830 = vmax.f32 %v1628, %v1756
        %v1831 = vmax.f32 %v1633, %v1758
        %v1832 = vmax.f32 %v1638, %v1760
        %v1833 = vmax.f32 %v1643, %v1762
        %v1834 = vmax.f32 %v1648, %v1764
        %v1835 = vmax.f32 %v1653, %v1766
        %v1836 = vmax.f32 %v1658, %v1768
        %v1837 = vmax.f32 %v1663, %v1770
        %v1838 = vmax.f32 %v1668, %v1772
        %v1839 = vmax.f32 %v1673, %v1774
        %v1840 = vmax.f32 %v1678, %v1776
        %1841 = vrot.lane.b32.xlu0 %v1523, 126
        %v1842 = vpop.permute.xlu0 %1841
        %1843 = vrot.lane.b32.xlu0 %v1528, 126
        %v1844 = vpop.permute.xlu0 %1843
        %1845 = vrot.lane.b32.xlu0 %v1533, 126
        %v1846 = vpop.permute.xlu0 %1845
        %1847 = vrot.lane.b32.xlu0 %v1538, 126
        %v1848 = vpop.permute.xlu0 %1847
        %1849 = vrot.lane.b32.xlu0 %v1543, 126
        %v1850 = vpop.permute.xlu0 %1849
        %1851 = vrot.lane.b32.xlu0 %v1548, 126
        %v1852 = vpop.permute.xlu0 %1851
        %1853 = vrot.lane.b32.xlu0 %v1553, 126
        %v1854 = vpop.permute.xlu0 %1853
        %1855 = vrot.lane.b32.xlu0 %v1558, 126
        %v1856 = vpop.permute.xlu0 %1855
        %1857 = vrot.lane.b32.xlu0 %v1563, 126
        %v1858 = vpop.permute.xlu0 %1857
        %1859 = vrot.lane.b32.xlu0 %v1568, 126
        %v1860 = vpop.permute.xlu0 %1859
        %1861 = vrot.lane.b32.xlu0 %v1573, 126
        %v1862 = vpop.permute.xlu0 %1861
        %1863 = vrot.lane.b32.xlu0 %v1578, 126
        %v1864 = vpop.permute.xlu0 %1863
        %1865 = vrot.lane.b32.xlu0 %v1583, 126
        %v1866 = vpop.permute.xlu0 %1865
        %1867 = vrot.lane.b32.xlu0 %v1588, 126
        %v1868 = vpop.permute.xlu0 %1867
        %1869 = vrot.lane.b32.xlu0 %v1593, 126
        %v1870 = vpop.permute.xlu0 %1869
        %1871 = vrot.lane.b32.xlu0 %v1598, 126
        %v1872 = vpop.permute.xlu0 %1871
        %1873 = vrot.lane.b32.xlu0 %v1603, 126
        %v1874 = vpop.permute.xlu0 %1873
        %1875 = vrot.lane.b32.xlu0 %v1608, 126
        %v1876 = vpop.permute.xlu0 %1875
        %1877 = vrot.lane.b32.xlu0 %v1613, 126
        %v1878 = vpop.permute.xlu0 %1877
        %1879 = vrot.lane.b32.xlu0 %v1618, 126
        %v1880 = vpop.permute.xlu0 %1879
        %1881 = vrot.lane.b32.xlu0 %v1623, 126
        %v1882 = vpop.permute.xlu0 %1881
        %1883 = vrot.lane.b32.xlu0 %v1628, 126
        %v1884 = vpop.permute.xlu0 %1883
        %1885 = vrot.lane.b32.xlu0 %v1633, 126
        %v1886 = vpop.permute.xlu0 %1885
        %1887 = vrot.lane.b32.xlu0 %v1638, 126
        %v1888 = vpop.permute.xlu0 %1887
        %1889 = vrot.lane.b32.xlu0 %v1643, 126
        %v1890 = vpop.permute.xlu0 %1889
        %1891 = vrot.lane.b32.xlu0 %v1648, 126
        %v1892 = vpop.permute.xlu0 %1891
        %1893 = vrot.lane.b32.xlu0 %v1653, 126
        %v1894 = vpop.permute.xlu0 %1893
        %1895 = vrot.lane.b32.xlu0 %v1658, 126
        %v1896 = vpop.permute.xlu0 %1895
        %1897 = vrot.lane.b32.xlu0 %v1663, 126
        %v1898 = vpop.permute.xlu0 %1897
        %1899 = vrot.lane.b32.xlu0 %v1668, 126
        %v1900 = vpop.permute.xlu0 %1899
        %1901 = vrot.lane.b32.xlu0 %v1673, 126
        %v1902 = vpop.permute.xlu0 %1901
        %1903 = vrot.lane.b32.xlu0 %v1678, 126
        %v1904 = vpop.permute.xlu0 %1903
        %v1937 = vmax.f32 %v1809, %v1842
        %v1938 = vmax.f32 %v1810, %v1844
        %v1939 = vmax.f32 %v1811, %v1846
        %v1940 = vmax.f32 %v1812, %v1848
        %v1941 = vmax.f32 %v1813, %v1850
        %v1942 = vmax.f32 %v1814, %v1852
        %v1943 = vmax.f32 %v1815, %v1854
        %v1944 = vmax.f32 %v1816, %v1856
        %v1945 = vmax.f32 %v1817, %v1858
        %v1946 = vmax.f32 %v1818, %v1860
        %v1947 = vmax.f32 %v1819, %v1862
        %v1948 = vmax.f32 %v1820, %v1864
        %v1949 = vmax.f32 %v1821, %v1866
        %v1950 = vmax.f32 %v1822, %v1868
        %v1951 = vmax.f32 %v1823, %v1870
        %v1952 = vmax.f32 %v1824, %v1872
        %v1953 = vmax.f32 %v1825, %v1874
        %v1954 = vmax.f32 %v1826, %v1876
        %v1955 = vmax.f32 %v1827, %v1878
        %v1956 = vmax.f32 %v1828, %v1880
        %v1957 = vmax.f32 %v1829, %v1882
        %v1958 = vmax.f32 %v1830, %v1884
        %v1959 = vmax.f32 %v1831, %v1886
        %v1960 = vmax.f32 %v1832, %v1888
        %v1961 = vmax.f32 %v1833, %v1890
        %v1962 = vmax.f32 %v1834, %v1892
        %v1963 = vmax.f32 %v1835, %v1894
        %v1964 = vmax.f32 %v1836, %v1896
        %v1965 = vmax.f32 %v1837, %v1898
        %v1966 = vmax.f32 %v1838, %v1900
        %v1967 = vmax.f32 %v1839, %v1902
        %v1968 = vmax.f32 %v1840, %v1904
        %1970 = vset.pattern.permute.xlu0 0
        %1971 = vperm.xlu0 %1970, %v1937
        %v1972 = vpop.permute.xlu0 %1971
        %1975 = vset.pattern.permute.xlu0 0
        %1976 = vperm.xlu0 %1975, %v1938
        %v1977 = vpop.permute.xlu0 %1976
        %1980 = vset.pattern.permute.xlu0 0
        %1981 = vperm.xlu0 %1980, %v1939
        %v1982 = vpop.permute.xlu0 %1981
        %1985 = vset.pattern.permute.xlu0 0
        %1986 = vperm.xlu0 %1985, %v1940
        %v1987 = vpop.permute.xlu0 %1986
        %1990 = vset.pattern.permute.xlu0 0
        %1991 = vperm.xlu0 %1990, %v1941
        %v1992 = vpop.permute.xlu0 %1991
        %1995 = vset.pattern.permute.xlu0 0
        %1996 = vperm.xlu0 %1995, %v1942
        %v1997 = vpop.permute.xlu0 %1996
        %2000 = vset.pattern.permute.xlu0 0
        %2001 = vperm.xlu0 %2000, %v1943
        %v2002 = vpop.permute.xlu0 %2001
        %2005 = vset.pattern.permute.xlu0 0
        %2006 = vperm.xlu0 %2005, %v1944
        %v2007 = vpop.permute.xlu0 %2006
        %2010 = vset.pattern.permute.xlu0 0
        %2011 = vperm.xlu0 %2010, %v1945
        %v2012 = vpop.permute.xlu0 %2011
        %2015 = vset.pattern.permute.xlu0 0
        %2016 = vperm.xlu0 %2015, %v1946
        %v2017 = vpop.permute.xlu0 %2016
        %2020 = vset.pattern.permute.xlu0 0
        %2021 = vperm.xlu0 %2020, %v1947
        %v2022 = vpop.permute.xlu0 %2021
        %2025 = vset.pattern.permute.xlu0 0
        %2026 = vperm.xlu0 %2025, %v1948
        %v2027 = vpop.permute.xlu0 %2026
        %2030 = vset.pattern.permute.xlu0 0
        %2031 = vperm.xlu0 %2030, %v1949
        %v2032 = vpop.permute.xlu0 %2031
        %2035 = vset.pattern.permute.xlu0 0
        %2036 = vperm.xlu0 %2035, %v1950
        %v2037 = vpop.permute.xlu0 %2036
        %2040 = vset.pattern.permute.xlu0 0
        %2041 = vperm.xlu0 %2040, %v1951
        %v2042 = vpop.permute.xlu0 %2041
        %2045 = vset.pattern.permute.xlu0 0
        %2046 = vperm.xlu0 %2045, %v1952
        %v2047 = vpop.permute.xlu0 %2046
        %2050 = vset.pattern.permute.xlu0 0
        %2051 = vperm.xlu0 %2050, %v1953
        %v2052 = vpop.permute.xlu0 %2051
        %2055 = vset.pattern.permute.xlu0 0
        %2056 = vperm.xlu0 %2055, %v1954
        %v2057 = vpop.permute.xlu0 %2056
        %2060 = vset.pattern.permute.xlu0 0
        %2061 = vperm.xlu0 %2060, %v1955
        %v2062 = vpop.permute.xlu0 %2061
        %2065 = vset.pattern.permute.xlu0 0
        %2066 = vperm.xlu0 %2065, %v1956
        %v2067 = vpop.permute.xlu0 %2066
        %2070 = vset.pattern.permute.xlu0 0
        %2071 = vperm.xlu0 %2070, %v1957
        %v2072 = vpop.permute.xlu0 %2071
        %2075 = vset.pattern.permute.xlu0 0
        %2076 = vperm.xlu0 %2075, %v1958
        %v2077 = vpop.permute.xlu0 %2076
        %2080 = vset.pattern.permute.xlu0 0
        %2081 = vperm.xlu0 %2080, %v1959
        %v2082 = vpop.permute.xlu0 %2081
        %2085 = vset.pattern.permute.xlu0 0
        %2086 = vperm.xlu0 %2085, %v1960
        %v2087 = vpop.permute.xlu0 %2086
        %2090 = vset.pattern.permute.xlu0 0
        %2091 = vperm.xlu0 %2090, %v1961
        %v2092 = vpop.permute.xlu0 %2091
        %2095 = vset.pattern.permute.xlu0 0
        %2096 = vperm.xlu0 %2095, %v1962
        %v2097 = vpop.permute.xlu0 %2096
        %2100 = vset.pattern.permute.xlu0 0
        %2101 = vperm.xlu0 %2100, %v1963
        %v2102 = vpop.permute.xlu0 %2101
        %2105 = vset.pattern.permute.xlu0 0
        %2106 = vperm.xlu0 %2105, %v1964
        %v2107 = vpop.permute.xlu0 %2106
        %2110 = vset.pattern.permute.xlu0 0
        %2111 = vperm.xlu0 %2110, %v1965
        %v2112 = vpop.permute.xlu0 %2111
        %2115 = vset.pattern.permute.xlu0 0
        %2116 = vperm.xlu0 %2115, %v1966
        %v2117 = vpop.permute.xlu0 %2116
        %2120 = vset.pattern.permute.xlu0 0
        %2121 = vperm.xlu0 %2120, %v1967
        %v2122 = vpop.permute.xlu0 %2121
        %2125 = vset.pattern.permute.xlu0 0
        %2126 = vperm.xlu0 %2125, %v1968
        %v2127 = vpop.permute.xlu0 %2126
        %v2129 = vsub.f32 %v1523, %v1972
        %v2130 = vsub.f32 %v1528, %v1977
        %v2131 = vsub.f32 %v1533, %v1982
        %v2132 = vsub.f32 %v1538, %v1987
        %v2133 = vsub.f32 %v1543, %v1992
        %v2134 = vsub.f32 %v1548, %v1997
        %v2135 = vsub.f32 %v1553, %v2002
        %v2136 = vsub.f32 %v1558, %v2007
        %v2137 = vsub.f32 %v1563, %v2012
        %v2138 = vsub.f32 %v1568, %v2017
        %v2139 = vsub.f32 %v1573, %v2022
        %v2140 = vsub.f32 %v1578, %v2027
        %v2141 = vsub.f32 %v1583, %v2032
        %v2142 = vsub.f32 %v1588, %v2037
        %v2143 = vsub.f32 %v1593, %v2042
        %v2144 = vsub.f32 %v1598, %v2047
        %v2145 = vsub.f32 %v1603, %v2052
        %v2146 = vsub.f32 %v1608, %v2057
        %v2147 = vsub.f32 %v1613, %v2062
        %v2148 = vsub.f32 %v1618, %v2067
        %v2149 = vsub.f32 %v1623, %v2072
        %v2150 = vsub.f32 %v1628, %v2077
        %v2151 = vsub.f32 %v1633, %v2082
        %v2152 = vsub.f32 %v1638, %v2087
        %v2153 = vsub.f32 %v1643, %v2092
        %v2154 = vsub.f32 %v1648, %v2097
        %v2155 = vsub.f32 %v1653, %v2102
        %v2156 = vsub.f32 %v1658, %v2107
        %v2157 = vsub.f32 %v1663, %v2112
        %v2158 = vsub.f32 %v1668, %v2117
        %v2159 = vsub.f32 %v1673, %v2122
        %v2160 = vsub.f32 %v1678, %v2127
        %v2161 = vmul.f32 %v2129, 1.442695
        %v2162 = vpow.pop %v2161
        %v2163 = vmul.f32 %v2130, 1.442695
        %v2164 = vpow.pop %v2163
        %v2165 = vmul.f32 %v2131, 1.442695
        %v2166 = vpow.pop %v2165
        %v2167 = vmul.f32 %v2132, 1.442695
        %v2168 = vpow.pop %v2167
        %v2169 = vmul.f32 %v2133, 1.442695
        %v2170 = vpow.pop %v2169
        %v2171 = vmul.f32 %v2134, 1.442695
        %v2172 = vpow.pop %v2171
        %v2173 = vmul.f32 %v2135, 1.442695
        %v2174 = vpow.pop %v2173
        %v2175 = vmul.f32 %v2136, 1.442695
        %v2176 = vpow.pop %v2175
        %v2177 = vmul.f32 %v2137, 1.442695
        %v2178 = vpow.pop %v2177
        %v2179 = vmul.f32 %v2138, 1.442695
        %v2180 = vpow.pop %v2179
        %v2181 = vmul.f32 %v2139, 1.442695
        %v2182 = vpow.pop %v2181
        %v2183 = vmul.f32 %v2140, 1.442695
        %v2184 = vpow.pop %v2183
        %v2185 = vmul.f32 %v2141, 1.442695
        %v2186 = vpow.pop %v2185
        %v2187 = vmul.f32 %v2142, 1.442695
        %v2188 = vpow.pop %v2187
        %v2189 = vmul.f32 %v2143, 1.442695
        %v2190 = vpow.pop %v2189
        %v2191 = vmul.f32 %v2144, 1.442695
        %v2192 = vpow.pop %v2191
        %v2193 = vmul.f32 %v2145, 1.442695
        %v2194 = vpow.pop %v2193
        %v2195 = vmul.f32 %v2146, 1.442695
        %v2196 = vpow.pop %v2195
        %v2197 = vmul.f32 %v2147, 1.442695
        %v2198 = vpow.pop %v2197
        %v2199 = vmul.f32 %v2148, 1.442695
        %v2200 = vpow.pop %v2199
        %v2201 = vmul.f32 %v2149, 1.442695
        %v2202 = vpow.pop %v2201
        %v2203 = vmul.f32 %v2150, 1.442695
        %v2204 = vpow.pop %v2203
        %v2205 = vmul.f32 %v2151, 1.442695
        %v2206 = vpow.pop %v2205
        %v2207 = vmul.f32 %v2152, 1.442695
        %v2208 = vpow.pop %v2207
        %v2209 = vmul.f32 %v2153, 1.442695
        %v2210 = vpow.pop %v2209
        %v2211 = vmul.f32 %v2154, 1.442695
        %v2212 = vpow.pop %v2211
        %v2213 = vmul.f32 %v2155, 1.442695
        %v2214 = vpow.pop %v2213
        %v2215 = vmul.f32 %v2156, 1.442695
        %v2216 = vpow.pop %v2215
        %v2217 = vmul.f32 %v2157, 1.442695
        %v2218 = vpow.pop %v2217
        %v2219 = vmul.f32 %v2158, 1.442695
        %v2220 = vpow.pop %v2219
        %v2221 = vmul.f32 %v2159, 1.442695
        %v2222 = vpow.pop %v2221
        %v2223 = vmul.f32 %v2160, 1.442695
        %v2224 = vpow.pop %v2223
        %2257 = vrot.lane.b32.xlu0 %v2162, 127
        %v2258 = vpop.permute.xlu0 %2257
        %2259 = vrot.lane.b32.xlu0 %v2164, 127
        %v2260 = vpop.permute.xlu0 %2259
        %2261 = vrot.lane.b32.xlu0 %v2166, 127
        %v2262 = vpop.permute.xlu0 %2261
        %2263 = vrot.lane.b32.xlu0 %v2168, 127
        %v2264 = vpop.permute.xlu0 %2263
        %2265 = vrot.lane.b32.xlu0 %v2170, 127
        %v2266 = vpop.permute.xlu0 %2265
        %2267 = vrot.lane.b32.xlu0 %v2172, 127
        %v2268 = vpop.permute.xlu0 %2267
        %2269 = vrot.lane.b32.xlu0 %v2174, 127
        %v2270 = vpop.permute.xlu0 %2269
        %2271 = vrot.lane.b32.xlu0 %v2176, 127
        %v2272 = vpop.permute.xlu0 %2271
        %2273 = vrot.lane.b32.xlu0 %v2178, 127
        %v2274 = vpop.permute.xlu0 %2273
        %2275 = vrot.lane.b32.xlu0 %v2180, 127
        %v2276 = vpop.permute.xlu0 %2275
        %2277 = vrot.lane.b32.xlu0 %v2182, 127
        %v2278 = vpop.permute.xlu0 %2277
        %2279 = vrot.lane.b32.xlu0 %v2184, 127
        %v2280 = vpop.permute.xlu0 %2279
        %2281 = vrot.lane.b32.xlu0 %v2186, 127
        %v2282 = vpop.permute.xlu0 %2281
        %2283 = vrot.lane.b32.xlu0 %v2188, 127
        %v2284 = vpop.permute.xlu0 %2283
        %2285 = vrot.lane.b32.xlu0 %v2190, 127
        %v2286 = vpop.permute.xlu0 %2285
        %2287 = vrot.lane.b32.xlu0 %v2192, 127
        %v2288 = vpop.permute.xlu0 %2287
        %2289 = vrot.lane.b32.xlu0 %v2194, 127
        %v2290 = vpop.permute.xlu0 %2289
        %2291 = vrot.lane.b32.xlu0 %v2196, 127
        %v2292 = vpop.permute.xlu0 %2291
        %2293 = vrot.lane.b32.xlu0 %v2198, 127
        %v2294 = vpop.permute.xlu0 %2293
        %2295 = vrot.lane.b32.xlu0 %v2200, 127
        %v2296 = vpop.permute.xlu0 %2295
        %2297 = vrot.lane.b32.xlu0 %v2202, 127
        %v2298 = vpop.permute.xlu0 %2297
        %2299 = vrot.lane.b32.xlu0 %v2204, 127
        %v2300 = vpop.permute.xlu0 %2299
        %2301 = vrot.lane.b32.xlu0 %v2206, 127
        %v2302 = vpop.permute.xlu0 %2301
        %2303 = vrot.lane.b32.xlu0 %v2208, 127
        %v2304 = vpop.permute.xlu0 %2303
        %2305 = vrot.lane.b32.xlu0 %v2210, 127
        %v2306 = vpop.permute.xlu0 %2305
        %2307 = vrot.lane.b32.xlu0 %v2212, 127
        %v2308 = vpop.permute.xlu0 %2307
        %2309 = vrot.lane.b32.xlu0 %v2214, 127
        %v2310 = vpop.permute.xlu0 %2309
        %2311 = vrot.lane.b32.xlu0 %v2216, 127
        %v2312 = vpop.permute.xlu0 %2311
        %2313 = vrot.lane.b32.xlu0 %v2218, 127
        %v2314 = vpop.permute.xlu0 %2313
        %2315 = vrot.lane.b32.xlu0 %v2220, 127
        %v2316 = vpop.permute.xlu0 %2315
        %2317 = vrot.lane.b32.xlu0 %v2222, 127
        %v2318 = vpop.permute.xlu0 %2317
        %2319 = vrot.lane.b32.xlu0 %v2224, 127
        %v2320 = vpop.permute.xlu0 %2319
        %v2353 = vadd.f32 %v2162, %v2258
        %v2354 = vadd.f32 %v2164, %v2260
        %v2355 = vadd.f32 %v2166, %v2262
        %v2356 = vadd.f32 %v2168, %v2264
        %v2357 = vadd.f32 %v2170, %v2266
        %v2358 = vadd.f32 %v2172, %v2268
        %v2359 = vadd.f32 %v2174, %v2270
        %v2360 = vadd.f32 %v2176, %v2272
        %v2361 = vadd.f32 %v2178, %v2274
        %v2362 = vadd.f32 %v2180, %v2276
        %v2363 = vadd.f32 %v2182, %v2278
        %v2364 = vadd.f32 %v2184, %v2280
        %v2365 = vadd.f32 %v2186, %v2282
        %v2366 = vadd.f32 %v2188, %v2284
        %v2367 = vadd.f32 %v2190, %v2286
        %v2368 = vadd.f32 %v2192, %v2288
        %v2369 = vadd.f32 %v2194, %v2290
        %v2370 = vadd.f32 %v2196, %v2292
        %v2371 = vadd.f32 %v2198, %v2294
        %v2372 = vadd.f32 %v2200, %v2296
        %v2373 = vadd.f32 %v2202, %v2298
        %v2374 = vadd.f32 %v2204, %v2300
        %v2375 = vadd.f32 %v2206, %v2302
        %v2376 = vadd.f32 %v2208, %v2304
        %v2377 = vadd.f32 %v2210, %v2306
        %v2378 = vadd.f32 %v2212, %v2308
        %v2379 = vadd.f32 %v2214, %v2310
        %v2380 = vadd.f32 %v2216, %v2312
        %v2381 = vadd.f32 %v2218, %v2314
        %v2382 = vadd.f32 %v2220, %v2316
        %v2383 = vadd.f32 %v2222, %v2318
        %v2384 = vadd.f32 %v2224, %v2320
        %2385 = vrot.lane.b32.xlu0 %v2162, 126
        %v2386 = vpop.permute.xlu0 %2385
        %2387 = vrot.lane.b32.xlu0 %v2164, 126
        %v2388 = vpop.permute.xlu0 %2387
        %2389 = vrot.lane.b32.xlu0 %v2166, 126
        %v2390 = vpop.permute.xlu0 %2389
        %2391 = vrot.lane.b32.xlu0 %v2168, 126
        %v2392 = vpop.permute.xlu0 %2391
        %2393 = vrot.lane.b32.xlu0 %v2170, 126
        %v2394 = vpop.permute.xlu0 %2393
        %2395 = vrot.lane.b32.xlu0 %v2172, 126
        %v2396 = vpop.permute.xlu0 %2395
        %2397 = vrot.lane.b32.xlu0 %v2174, 126
        %v2398 = vpop.permute.xlu0 %2397
        %2399 = vrot.lane.b32.xlu0 %v2176, 126
        %v2400 = vpop.permute.xlu0 %2399
        %2401 = vrot.lane.b32.xlu0 %v2178, 126
        %v2402 = vpop.permute.xlu0 %2401
        %2403 = vrot.lane.b32.xlu0 %v2180, 126
        %v2404 = vpop.permute.xlu0 %2403
        %2405 = vrot.lane.b32.xlu0 %v2182, 126
        %v2406 = vpop.permute.xlu0 %2405
        %2407 = vrot.lane.b32.xlu0 %v2184, 126
        %v2408 = vpop.permute.xlu0 %2407
        %2409 = vrot.lane.b32.xlu0 %v2186, 126
        %v2410 = vpop.permute.xlu0 %2409
        %2411 = vrot.lane.b32.xlu0 %v2188, 126
        %v2412 = vpop.permute.xlu0 %2411
        %2413 = vrot.lane.b32.xlu0 %v2190, 126
        %v2414 = vpop.permute.xlu0 %2413
        %2415 = vrot.lane.b32.xlu0 %v2192, 126
        %v2416 = vpop.permute.xlu0 %2415
        %2417 = vrot.lane.b32.xlu0 %v2194, 126
        %v2418 = vpop.permute.xlu0 %2417
        %2419 = vrot.lane.b32.xlu0 %v2196, 126
        %v2420 = vpop.permute.xlu0 %2419
        %2421 = vrot.lane.b32.xlu0 %v2198, 126
        %v2422 = vpop.permute.xlu0 %2421
        %2423 = vrot.lane.b32.xlu0 %v2200, 126
        %v2424 = vpop.permute.xlu0 %2423
        %2425 = vrot.lane.b32.xlu0 %v2202, 126
        %v2426 = vpop.permute.xlu0 %2425
        %2427 = vrot.lane.b32.xlu0 %v2204, 126
        %v2428 = vpop.permute.xlu0 %2427
        %2429 = vrot.lane.b32.xlu0 %v2206, 126
        %v2430 = vpop.permute.xlu0 %2429
        %2431 = vrot.lane.b32.xlu0 %v2208, 126
        %v2432 = vpop.permute.xlu0 %2431
        %2433 = vrot.lane.b32.xlu0 %v2210, 126
        %v2434 = vpop.permute.xlu0 %2433
        %2435 = vrot.lane.b32.xlu0 %v2212, 126
        %v2436 = vpop.permute.xlu0 %2435
        %2437 = vrot.lane.b32.xlu0 %v2214, 126
        %v2438 = vpop.permute.xlu0 %2437
        %2439 = vrot.lane.b32.xlu0 %v2216, 126
        %v2440 = vpop.permute.xlu0 %2439
        %2441 = vrot.lane.b32.xlu0 %v2218, 126
        %v2442 = vpop.permute.xlu0 %2441
        %2443 = vrot.lane.b32.xlu0 %v2220, 126
        %v2444 = vpop.permute.xlu0 %2443
        %2445 = vrot.lane.b32.xlu0 %v2222, 126
        %v2446 = vpop.permute.xlu0 %2445
        %2447 = vrot.lane.b32.xlu0 %v2224, 126
        %v2448 = vpop.permute.xlu0 %2447
        %v2481 = vadd.f32 %v2353, %v2386
        %v2482 = vadd.f32 %v2354, %v2388
        %v2483 = vadd.f32 %v2355, %v2390
        %v2484 = vadd.f32 %v2356, %v2392
        %v2485 = vadd.f32 %v2357, %v2394
        %v2486 = vadd.f32 %v2358, %v2396
        %v2487 = vadd.f32 %v2359, %v2398
        %v2488 = vadd.f32 %v2360, %v2400
        %v2489 = vadd.f32 %v2361, %v2402
        %v2490 = vadd.f32 %v2362, %v2404
        %v2491 = vadd.f32 %v2363, %v2406
        %v2492 = vadd.f32 %v2364, %v2408
        %v2493 = vadd.f32 %v2365, %v2410
        %v2494 = vadd.f32 %v2366, %v2412
        %v2495 = vadd.f32 %v2367, %v2414
        %v2496 = vadd.f32 %v2368, %v2416
        %v2497 = vadd.f32 %v2369, %v2418
        %v2498 = vadd.f32 %v2370, %v2420
        %v2499 = vadd.f32 %v2371, %v2422
        %v2500 = vadd.f32 %v2372, %v2424
        %v2501 = vadd.f32 %v2373, %v2426
        %v2502 = vadd.f32 %v2374, %v2428
        %v2503 = vadd.f32 %v2375, %v2430
        %v2504 = vadd.f32 %v2376, %v2432
        %v2505 = vadd.f32 %v2377, %v2434
        %v2506 = vadd.f32 %v2378, %v2436
        %v2507 = vadd.f32 %v2379, %v2438
        %v2508 = vadd.f32 %v2380, %v2440
        %v2509 = vadd.f32 %v2381, %v2442
        %v2510 = vadd.f32 %v2382, %v2444
        %v2511 = vadd.f32 %v2383, %v2446
        %v2512 = vadd.f32 %v2384, %v2448
        %v2513 = vrcp.pop %v2481
        %v2514 = vrcp.pop %v2482
        %v2515 = vrcp.pop %v2483
        %v2516 = vrcp.pop %v2484
        %v2517 = vrcp.pop %v2485
        %v2518 = vrcp.pop %v2486
        %v2519 = vrcp.pop %v2487
        %v2520 = vrcp.pop %v2488
        %v2521 = vrcp.pop %v2489
        %v2522 = vrcp.pop %v2490
        %v2523 = vrcp.pop %v2491
        %v2524 = vrcp.pop %v2492
        %v2525 = vrcp.pop %v2493
        %v2526 = vrcp.pop %v2494
        %v2527 = vrcp.pop %v2495
        %v2528 = vrcp.pop %v2496
        %v2529 = vrcp.pop %v2497
        %v2530 = vrcp.pop %v2498
        %v2531 = vrcp.pop %v2499
        %v2532 = vrcp.pop %v2500
        %v2533 = vrcp.pop %v2501
        %v2534 = vrcp.pop %v2502
        %v2535 = vrcp.pop %v2503
        %v2536 = vrcp.pop %v2504
        %v2537 = vrcp.pop %v2505
        %v2538 = vrcp.pop %v2506
        %v2539 = vrcp.pop %v2507
        %v2540 = vrcp.pop %v2508
        %v2541 = vrcp.pop %v2509
        %v2542 = vrcp.pop %v2510
        %v2543 = vrcp.pop %v2511
        %v2544 = vrcp.pop %v2512
        %2545 = vset.pattern.permute.xlu0 0
        %2546 = vperm.xlu0 %2545, %v2162
        %v2547 = vpop.permute.xlu0 %2546
        %2549 = vset.pattern.permute.xlu0 0
        %2550 = vperm.xlu0 %2549, %v2164
        %v2551 = vpop.permute.xlu0 %2550
        %2553 = vset.pattern.permute.xlu0 0
        %2554 = vperm.xlu0 %2553, %v2166
        %v2555 = vpop.permute.xlu0 %2554
        %2557 = vset.pattern.permute.xlu0 0
        %2558 = vperm.xlu0 %2557, %v2168
        %v2559 = vpop.permute.xlu0 %2558
        %2561 = vset.pattern.permute.xlu0 0
        %2562 = vperm.xlu0 %2561, %v2170
        %v2563 = vpop.permute.xlu0 %2562
        %2565 = vset.pattern.permute.xlu0 0
        %2566 = vperm.xlu0 %2565, %v2172
        %v2567 = vpop.permute.xlu0 %2566
        %2569 = vset.pattern.permute.xlu0 0
        %2570 = vperm.xlu0 %2569, %v2174
        %v2571 = vpop.permute.xlu0 %2570
        %2573 = vset.pattern.permute.xlu0 0
        %2574 = vperm.xlu0 %2573, %v2176
        %v2575 = vpop.permute.xlu0 %2574
        %2577 = vset.pattern.permute.xlu0 0
        %2578 = vperm.xlu0 %2577, %v2178
        %v2579 = vpop.permute.xlu0 %2578
        %2581 = vset.pattern.permute.xlu0 0
        %2582 = vperm.xlu0 %2581, %v2180
        %v2583 = vpop.permute.xlu0 %2582
        %2585 = vset.pattern.permute.xlu0 0
        %2586 = vperm.xlu0 %2585, %v2182
        %v2587 = vpop.permute.xlu0 %2586
        %2589 = vset.pattern.permute.xlu0 0
        %2590 = vperm.xlu0 %2589, %v2184
        %v2591 = vpop.permute.xlu0 %2590
        %2593 = vset.pattern.permute.xlu0 0
        %2594 = vperm.xlu0 %2593, %v2186
        %v2595 = vpop.permute.xlu0 %2594
        %2597 = vset.pattern.permute.xlu0 0
        %2598 = vperm.xlu0 %2597, %v2188
        %v2599 = vpop.permute.xlu0 %2598
        %2601 = vset.pattern.permute.xlu0 0
        %2602 = vperm.xlu0 %2601, %v2190
        %v2603 = vpop.permute.xlu0 %2602
        %2605 = vset.pattern.permute.xlu0 0
        %2606 = vperm.xlu0 %2605, %v2192
        %v2607 = vpop.permute.xlu0 %2606
        %2609 = vset.pattern.permute.xlu0 0
        %2610 = vperm.xlu0 %2609, %v2194
        %v2611 = vpop.permute.xlu0 %2610
        %2613 = vset.pattern.permute.xlu0 0
        %2614 = vperm.xlu0 %2613, %v2196
        %v2615 = vpop.permute.xlu0 %2614
        %2617 = vset.pattern.permute.xlu0 0
        %2618 = vperm.xlu0 %2617, %v2198
        %v2619 = vpop.permute.xlu0 %2618
        %2621 = vset.pattern.permute.xlu0 0
        %2622 = vperm.xlu0 %2621, %v2200
        %v2623 = vpop.permute.xlu0 %2622
        %2625 = vset.pattern.permute.xlu0 0
        %2626 = vperm.xlu0 %2625, %v2202
        %v2627 = vpop.permute.xlu0 %2626
        %2629 = vset.pattern.permute.xlu0 0
        %2630 = vperm.xlu0 %2629, %v2204
        %v2631 = vpop.permute.xlu0 %2630
        %2633 = vset.pattern.permute.xlu0 0
        %2634 = vperm.xlu0 %2633, %v2206
        %v2635 = vpop.permute.xlu0 %2634
        %2637 = vset.pattern.permute.xlu0 0
        %2638 = vperm.xlu0 %2637, %v2208
        %v2639 = vpop.permute.xlu0 %2638
        %2641 = vset.pattern.permute.xlu0 0
        %2642 = vperm.xlu0 %2641, %v2210
        %v2643 = vpop.permute.xlu0 %2642
        %2645 = vset.pattern.permute.xlu0 0
        %2646 = vperm.xlu0 %2645, %v2212
        %v2647 = vpop.permute.xlu0 %2646
        %2649 = vset.pattern.permute.xlu0 0
        %2650 = vperm.xlu0 %2649, %v2214
        %v2651 = vpop.permute.xlu0 %2650
        %2653 = vset.pattern.permute.xlu0 0
        %2654 = vperm.xlu0 %2653, %v2216
        %v2655 = vpop.permute.xlu0 %2654
        %2657 = vset.pattern.permute.xlu0 0
        %2658 = vperm.xlu0 %2657, %v2218
        %v2659 = vpop.permute.xlu0 %2658
        %2661 = vset.pattern.permute.xlu0 0
        %2662 = vperm.xlu0 %2661, %v2220
        %v2663 = vpop.permute.xlu0 %2662
        %2665 = vset.pattern.permute.xlu0 0
        %2666 = vperm.xlu0 %2665, %v2222
        %v2667 = vpop.permute.xlu0 %2666
        %2669 = vset.pattern.permute.xlu0 0
        %2670 = vperm.xlu0 %2669, %v2224
        %v2671 = vpop.permute.xlu0 %2670
        %v2673 = vmul.f32 %v2547, %v1080
        %v2674 = vmul.f32 %v2551, %v1083
        %v2675 = vmul.f32 %v2555, %v1086
        %v2676 = vmul.f32 %v2559, %v1089
        %v2677 = vmul.f32 %v2563, %v1092
        %v2678 = vmul.f32 %v2567, %v1095
        %v2679 = vmul.f32 %v2571, %v1098
        %v2680 = vmul.f32 %v2575, %v1101
        %v2681 = vmul.f32 %v2579, %v1104
        %v2682 = vmul.f32 %v2583, %v1107
        %v2683 = vmul.f32 %v2587, %v1110
        %v2684 = vmul.f32 %v2591, %v1113
        %v2685 = vmul.f32 %v2595, %v1116
        %v2686 = vmul.f32 %v2599, %v1119
        %v2687 = vmul.f32 %v2603, %v1122
        %v2688 = vmul.f32 %v2607, %v1125
        %v2689 = vmul.f32 %v2611, %v1128
        %v2690 = vmul.f32 %v2615, %v1131
        %v2691 = vmul.f32 %v2619, %v1134
        %v2692 = vmul.f32 %v2623, %v1137
        %v2693 = vmul.f32 %v2627, %v1140
        %v2694 = vmul.f32 %v2631, %v1143
        %v2695 = vmul.f32 %v2635, %v1146
        %v2696 = vmul.f32 %v2639, %v1149
        %v2697 = vmul.f32 %v2643, %v1152
        %v2698 = vmul.f32 %v2647, %v1155
        %v2699 = vmul.f32 %v2651, %v1158
        %v2700 = vmul.f32 %v2655, %v1161
        %v2701 = vmul.f32 %v2659, %v1164
        %v2702 = vmul.f32 %v2663, %v1167
        %v2703 = vmul.f32 %v2667, %v1170
        %v2704 = vmul.f32 %v2671, %v1173
        %2705 = vset.pattern.permute.xlu0 1
        %2706 = vperm.xlu0 %2705, %v2162
        %v2707 = vpop.permute.xlu0 %2706
        %2709 = vset.pattern.permute.xlu0 1
        %2710 = vperm.xlu0 %2709, %v2164
        %v2711 = vpop.permute.xlu0 %2710
        %2713 = vset.pattern.permute.xlu0 1
        %2714 = vperm.xlu0 %2713, %v2166
        %v2715 = vpop.permute.xlu0 %2714
        %2717 = vset.pattern.permute.xlu0 1
        %2718 = vperm.xlu0 %2717, %v2168
        %v2719 = vpop.permute.xlu0 %2718
        %2721 = vset.pattern.permute.xlu0 1
        %2722 = vperm.xlu0 %2721, %v2170
        %v2723 = vpop.permute.xlu0 %2722
        %2725 = vset.pattern.permute.xlu0 1
        %2726 = vperm.xlu0 %2725, %v2172
        %v2727 = vpop.permute.xlu0 %2726
        %2729 = vset.pattern.permute.xlu0 1
        %2730 = vperm.xlu0 %2729, %v2174
        %v2731 = vpop.permute.xlu0 %2730
        %2733 = vset.pattern.permute.xlu0 1
        %2734 = vperm.xlu0 %2733, %v2176
        %v2735 = vpop.permute.xlu0 %2734
        %2737 = vset.pattern.permute.xlu0 1
        %2738 = vperm.xlu0 %2737, %v2178
        %v2739 = vpop.permute.xlu0 %2738
        %2741 = vset.pattern.permute.xlu0 1
        %2742 = vperm.xlu0 %2741, %v2180
        %v2743 = vpop.permute.xlu0 %2742
        %2745 = vset.pattern.permute.xlu0 1
        %2746 = vperm.xlu0 %2745, %v2182
        %v2747 = vpop.permute.xlu0 %2746
        %2749 = vset.pattern.permute.xlu0 1
        %2750 = vperm.xlu0 %2749, %v2184
        %v2751 = vpop.permute.xlu0 %2750
        %2753 = vset.pattern.permute.xlu0 1
        %2754 = vperm.xlu0 %2753, %v2186
        %v2755 = vpop.permute.xlu0 %2754
        %2757 = vset.pattern.permute.xlu0 1
        %2758 = vperm.xlu0 %2757, %v2188
        %v2759 = vpop.permute.xlu0 %2758
        %2761 = vset.pattern.permute.xlu0 1
        %2762 = vperm.xlu0 %2761, %v2190
        %v2763 = vpop.permute.xlu0 %2762
        %2765 = vset.pattern.permute.xlu0 1
        %2766 = vperm.xlu0 %2765, %v2192
        %v2767 = vpop.permute.xlu0 %2766
        %2769 = vset.pattern.permute.xlu0 1
        %2770 = vperm.xlu0 %2769, %v2194
        %v2771 = vpop.permute.xlu0 %2770
        %2773 = vset.pattern.permute.xlu0 1
        %2774 = vperm.xlu0 %2773, %v2196
        %v2775 = vpop.permute.xlu0 %2774
        %2777 = vset.pattern.permute.xlu0 1
        %2778 = vperm.xlu0 %2777, %v2198
        %v2779 = vpop.permute.xlu0 %2778
        %2781 = vset.pattern.permute.xlu0 1
        %2782 = vperm.xlu0 %2781, %v2200
        %v2783 = vpop.permute.xlu0 %2782
        %2785 = vset.pattern.permute.xlu0 1
        %2786 = vperm.xlu0 %2785, %v2202
        %v2787 = vpop.permute.xlu0 %2786
        %2789 = vset.pattern.permute.xlu0 1
        %2790 = vperm.xlu0 %2789, %v2204
        %v2791 = vpop.permute.xlu0 %2790
        %2793 = vset.pattern.permute.xlu0 1
        %2794 = vperm.xlu0 %2793, %v2206
        %v2795 = vpop.permute.xlu0 %2794
        %2797 = vset.pattern.permute.xlu0 1
        %2798 = vperm.xlu0 %2797, %v2208
        %v2799 = vpop.permute.xlu0 %2798
        %2801 = vset.pattern.permute.xlu0 1
        %2802 = vperm.xlu0 %2801, %v2210
        %v2803 = vpop.permute.xlu0 %2802
        %2805 = vset.pattern.permute.xlu0 1
        %2806 = vperm.xlu0 %2805, %v2212
        %v2807 = vpop.permute.xlu0 %2806
        %2809 = vset.pattern.permute.xlu0 1
        %2810 = vperm.xlu0 %2809, %v2214
        %v2811 = vpop.permute.xlu0 %2810
        %2813 = vset.pattern.permute.xlu0 1
        %2814 = vperm.xlu0 %2813, %v2216
        %v2815 = vpop.permute.xlu0 %2814
        %2817 = vset.pattern.permute.xlu0 1
        %2818 = vperm.xlu0 %2817, %v2218
        %v2819 = vpop.permute.xlu0 %2818
        %2821 = vset.pattern.permute.xlu0 1
        %2822 = vperm.xlu0 %2821, %v2220
        %v2823 = vpop.permute.xlu0 %2822
        %2825 = vset.pattern.permute.xlu0 1
        %2826 = vperm.xlu0 %2825, %v2222
        %v2827 = vpop.permute.xlu0 %2826
        %2829 = vset.pattern.permute.xlu0 1
        %2830 = vperm.xlu0 %2829, %v2224
        %v2831 = vpop.permute.xlu0 %2830
        %v2833 = vmul.f32 %v2707, %v1081
        %v2834 = vmul.f32 %v2711, %v1084
        %v2835 = vmul.f32 %v2715, %v1087
        %v2836 = vmul.f32 %v2719, %v1090
        %v2837 = vmul.f32 %v2723, %v1093
        %v2838 = vmul.f32 %v2727, %v1096
        %v2839 = vmul.f32 %v2731, %v1099
        %v2840 = vmul.f32 %v2735, %v1102
        %v2841 = vmul.f32 %v2739, %v1105
        %v2842 = vmul.f32 %v2743, %v1108
        %v2843 = vmul.f32 %v2747, %v1111
        %v2844 = vmul.f32 %v2751, %v1114
        %v2845 = vmul.f32 %v2755, %v1117
        %v2846 = vmul.f32 %v2759, %v1120
        %v2847 = vmul.f32 %v2763, %v1123
        %v2848 = vmul.f32 %v2767, %v1126
        %v2849 = vmul.f32 %v2771, %v1129
        %v2850 = vmul.f32 %v2775, %v1132
        %v2851 = vmul.f32 %v2779, %v1135
        %v2852 = vmul.f32 %v2783, %v1138
        %v2853 = vmul.f32 %v2787, %v1141
        %v2854 = vmul.f32 %v2791, %v1144
        %v2855 = vmul.f32 %v2795, %v1147
        %v2856 = vmul.f32 %v2799, %v1150
        %v2857 = vmul.f32 %v2803, %v1153
        %v2858 = vmul.f32 %v2807, %v1156
        %v2859 = vmul.f32 %v2811, %v1159
        %v2860 = vmul.f32 %v2815, %v1162
        %v2861 = vmul.f32 %v2819, %v1165
        %v2862 = vmul.f32 %v2823, %v1168
        %v2863 = vmul.f32 %v2827, %v1171
        %v2864 = vmul.f32 %v2831, %v1174
        %v2865 = vadd.f32 %v2673, %v2833
        %v2866 = vadd.f32 %v2674, %v2834
        %v2867 = vadd.f32 %v2675, %v2835
        %v2868 = vadd.f32 %v2676, %v2836
        %v2869 = vadd.f32 %v2677, %v2837
        %v2870 = vadd.f32 %v2678, %v2838
        %v2871 = vadd.f32 %v2679, %v2839
        %v2872 = vadd.f32 %v2680, %v2840
        %v2873 = vadd.f32 %v2681, %v2841
        %v2874 = vadd.f32 %v2682, %v2842
        %v2875 = vadd.f32 %v2683, %v2843
        %v2876 = vadd.f32 %v2684, %v2844
        %v2877 = vadd.f32 %v2685, %v2845
        %v2878 = vadd.f32 %v2686, %v2846
        %v2879 = vadd.f32 %v2687, %v2847
        %v2880 = vadd.f32 %v2688, %v2848
        %v2881 = vadd.f32 %v2689, %v2849
        %v2882 = vadd.f32 %v2690, %v2850
        %v2883 = vadd.f32 %v2691, %v2851
        %v2884 = vadd.f32 %v2692, %v2852
        %v2885 = vadd.f32 %v2693, %v2853
        %v2886 = vadd.f32 %v2694, %v2854
        %v2887 = vadd.f32 %v2695, %v2855
        %v2888 = vadd.f32 %v2696, %v2856
        %v2889 = vadd.f32 %v2697, %v2857
        %v2890 = vadd.f32 %v2698, %v2858
        %v2891 = vadd.f32 %v2699, %v2859
        %v2892 = vadd.f32 %v2700, %v2860
        %v2893 = vadd.f32 %v2701, %v2861
        %v2894 = vadd.f32 %v2702, %v2862
        %v2895 = vadd.f32 %v2703, %v2863
        %v2896 = vadd.f32 %v2704, %v2864
        %2897 = vset.pattern.permute.xlu0 2
        %2898 = vperm.xlu0 %2897, %v2162
        %v2899 = vpop.permute.xlu0 %2898
        %2901 = vset.pattern.permute.xlu0 2
        %2902 = vperm.xlu0 %2901, %v2164
        %v2903 = vpop.permute.xlu0 %2902
        %2905 = vset.pattern.permute.xlu0 2
        %2906 = vperm.xlu0 %2905, %v2166
        %v2907 = vpop.permute.xlu0 %2906
        %2909 = vset.pattern.permute.xlu0 2
        %2910 = vperm.xlu0 %2909, %v2168
        %v2911 = vpop.permute.xlu0 %2910
        %2913 = vset.pattern.permute.xlu0 2
        %2914 = vperm.xlu0 %2913, %v2170
        %v2915 = vpop.permute.xlu0 %2914
        %2917 = vset.pattern.permute.xlu0 2
        %2918 = vperm.xlu0 %2917, %v2172
        %v2919 = vpop.permute.xlu0 %2918
        %2921 = vset.pattern.permute.xlu0 2
        %2922 = vperm.xlu0 %2921, %v2174
        %v2923 = vpop.permute.xlu0 %2922
        %2925 = vset.pattern.permute.xlu0 2
        %2926 = vperm.xlu0 %2925, %v2176
        %v2927 = vpop.permute.xlu0 %2926
        %2929 = vset.pattern.permute.xlu0 2
        %2930 = vperm.xlu0 %2929, %v2178
        %v2931 = vpop.permute.xlu0 %2930
        %2933 = vset.pattern.permute.xlu0 2
        %2934 = vperm.xlu0 %2933, %v2180
        %v2935 = vpop.permute.xlu0 %2934
        %2937 = vset.pattern.permute.xlu0 2
        %2938 = vperm.xlu0 %2937, %v2182
        %v2939 = vpop.permute.xlu0 %2938
        %2941 = vset.pattern.permute.xlu0 2
        %2942 = vperm.xlu0 %2941, %v2184
        %v2943 = vpop.permute.xlu0 %2942
        %2945 = vset.pattern.permute.xlu0 2
        %2946 = vperm.xlu0 %2945, %v2186
        %v2947 = vpop.permute.xlu0 %2946
        %2949 = vset.pattern.permute.xlu0 2
        %2950 = vperm.xlu0 %2949, %v2188
        %v2951 = vpop.permute.xlu0 %2950
        %2953 = vset.pattern.permute.xlu0 2
        %2954 = vperm.xlu0 %2953, %v2190
        %v2955 = vpop.permute.xlu0 %2954
        %2957 = vset.pattern.permute.xlu0 2
        %2958 = vperm.xlu0 %2957, %v2192
        %v2959 = vpop.permute.xlu0 %2958
        %2961 = vset.pattern.permute.xlu0 2
        %2962 = vperm.xlu0 %2961, %v2194
        %v2963 = vpop.permute.xlu0 %2962
        %2965 = vset.pattern.permute.xlu0 2
        %2966 = vperm.xlu0 %2965, %v2196
        %v2967 = vpop.permute.xlu0 %2966
        %2969 = vset.pattern.permute.xlu0 2
        %2970 = vperm.xlu0 %2969, %v2198
        %v2971 = vpop.permute.xlu0 %2970
        %2973 = vset.pattern.permute.xlu0 2
        %2974 = vperm.xlu0 %2973, %v2200
        %v2975 = vpop.permute.xlu0 %2974
        %2977 = vset.pattern.permute.xlu0 2
        %2978 = vperm.xlu0 %2977, %v2202
        %v2979 = vpop.permute.xlu0 %2978
        %2981 = vset.pattern.permute.xlu0 2
        %2982 = vperm.xlu0 %2981, %v2204
        %v2983 = vpop.permute.xlu0 %2982
        %2985 = vset.pattern.permute.xlu0 2
        %2986 = vperm.xlu0 %2985, %v2206
        %v2987 = vpop.permute.xlu0 %2986
        %2989 = vset.pattern.permute.xlu0 2
        %2990 = vperm.xlu0 %2989, %v2208
        %v2991 = vpop.permute.xlu0 %2990
        %2993 = vset.pattern.permute.xlu0 2
        %2994 = vperm.xlu0 %2993, %v2210
        %v2995 = vpop.permute.xlu0 %2994
        %2997 = vset.pattern.permute.xlu0 2
        %2998 = vperm.xlu0 %2997, %v2212
        %v2999 = vpop.permute.xlu0 %2998
        %3001 = vset.pattern.permute.xlu0 2
        %3002 = vperm.xlu0 %3001, %v2214
        %v3003 = vpop.permute.xlu0 %3002
        %3005 = vset.pattern.permute.xlu0 2
        %3006 = vperm.xlu0 %3005, %v2216
        %v3007 = vpop.permute.xlu0 %3006
        %3009 = vset.pattern.permute.xlu0 2
        %3010 = vperm.xlu0 %3009, %v2218
        %v3011 = vpop.permute.xlu0 %3010
        %3013 = vset.pattern.permute.xlu0 2
        %3014 = vperm.xlu0 %3013, %v2220
        %v3015 = vpop.permute.xlu0 %3014
        %3017 = vset.pattern.permute.xlu0 2
        %3018 = vperm.xlu0 %3017, %v2222
        %v3019 = vpop.permute.xlu0 %3018
        %3021 = vset.pattern.permute.xlu0 2
        %3022 = vperm.xlu0 %3021, %v2224
        %v3023 = vpop.permute.xlu0 %3022
        %v3025 = vmul.f32 %v2899, %v1082
        %v3026 = vmul.f32 %v2903, %v1085
        %v3027 = vmul.f32 %v2907, %v1088
        %v3028 = vmul.f32 %v2911, %v1091
        %v3029 = vmul.f32 %v2915, %v1094
        %v3030 = vmul.f32 %v2919, %v1097
        %v3031 = vmul.f32 %v2923, %v1100
        %v3032 = vmul.f32 %v2927, %v1103
        %v3033 = vmul.f32 %v2931, %v1106
        %v3034 = vmul.f32 %v2935, %v1109
        %v3035 = vmul.f32 %v2939, %v1112
        %v3036 = vmul.f32 %v2943, %v1115
        %v3037 = vmul.f32 %v2947, %v1118
        %v3038 = vmul.f32 %v2951, %v1121
        %v3039 = vmul.f32 %v2955, %v1124
        %v3040 = vmul.f32 %v2959, %v1127
        %v3041 = vmul.f32 %v2963, %v1130
        %v3042 = vmul.f32 %v2967, %v1133
        %v3043 = vmul.f32 %v2971, %v1136
        %v3044 = vmul.f32 %v2975, %v1139
        %v3045 = vmul.f32 %v2979, %v1142
        %v3046 = vmul.f32 %v2983, %v1145
        %v3047 = vmul.f32 %v2987, %v1148
        %v3048 = vmul.f32 %v2991, %v1151
        %v3049 = vmul.f32 %v2995, %v1154
        %v3050 = vmul.f32 %v2999, %v1157
        %v3051 = vmul.f32 %v3003, %v1160
        %v3052 = vmul.f32 %v3007, %v1163
        %v3053 = vmul.f32 %v3011, %v1166
        %v3054 = vmul.f32 %v3015, %v1169
        %v3055 = vmul.f32 %v3019, %v1172
        %v3056 = vmul.f32 %v3023, %v1175
        %v3057 = vadd.f32 %v2865, %v3025
        %v3058 = vadd.f32 %v2866, %v3026
        %v3059 = vadd.f32 %v2867, %v3027
        %v3060 = vadd.f32 %v2868, %v3028
        %v3061 = vadd.f32 %v2869, %v3029
        %v3062 = vadd.f32 %v2870, %v3030
        %v3063 = vadd.f32 %v2871, %v3031
        %v3064 = vadd.f32 %v2872, %v3032
        %v3065 = vadd.f32 %v2873, %v3033
        %v3066 = vadd.f32 %v2874, %v3034
        %v3067 = vadd.f32 %v2875, %v3035
        %v3068 = vadd.f32 %v2876, %v3036
        %v3069 = vadd.f32 %v2877, %v3037
        %v3070 = vadd.f32 %v2878, %v3038
        %v3071 = vadd.f32 %v2879, %v3039
        %v3072 = vadd.f32 %v2880, %v3040
        %v3073 = vadd.f32 %v2881, %v3041
        %v3074 = vadd.f32 %v2882, %v3042
        %v3075 = vadd.f32 %v2883, %v3043
        %v3076 = vadd.f32 %v2884, %v3044
        %v3077 = vadd.f32 %v2885, %v3045
        %v3078 = vadd.f32 %v2886, %v3046
        %v3079 = vadd.f32 %v2887, %v3047
        %v3080 = vadd.f32 %v2888, %v3048
        %v3081 = vadd.f32 %v2889, %v3049
        %v3082 = vadd.f32 %v2890, %v3050
        %v3083 = vadd.f32 %v2891, %v3051
        %v3084 = vadd.f32 %v2892, %v3052
        %v3085 = vadd.f32 %v2893, %v3053
        %v3086 = vadd.f32 %v2894, %v3054
        %v3087 = vadd.f32 %v2895, %v3055
        %v3088 = vadd.f32 %v2896, %v3056
        %3090 = vset.pattern.permute.xlu0 0
        %3091 = vperm.xlu0 %3090, %v2513
        %v3092 = vpop.permute.xlu0 %3091
        %3095 = vset.pattern.permute.xlu0 0
        %3096 = vperm.xlu0 %3095, %v2514
        %v3097 = vpop.permute.xlu0 %3096
        %3100 = vset.pattern.permute.xlu0 0
        %3101 = vperm.xlu0 %3100, %v2515
        %v3102 = vpop.permute.xlu0 %3101
        %3105 = vset.pattern.permute.xlu0 0
        %3106 = vperm.xlu0 %3105, %v2516
        %v3107 = vpop.permute.xlu0 %3106
        %3110 = vset.pattern.permute.xlu0 0
        %3111 = vperm.xlu0 %3110, %v2517
        %v3112 = vpop.permute.xlu0 %3111
        %3115 = vset.pattern.permute.xlu0 0
        %3116 = vperm.xlu0 %3115, %v2518
        %v3117 = vpop.permute.xlu0 %3116
        %3120 = vset.pattern.permute.xlu0 0
        %3121 = vperm.xlu0 %3120, %v2519
        %v3122 = vpop.permute.xlu0 %3121
        %3125 = vset.pattern.permute.xlu0 0
        %3126 = vperm.xlu0 %3125, %v2520
        %v3127 = vpop.permute.xlu0 %3126
        %3130 = vset.pattern.permute.xlu0 0
        %3131 = vperm.xlu0 %3130, %v2521
        %v3132 = vpop.permute.xlu0 %3131
        %3135 = vset.pattern.permute.xlu0 0
        %3136 = vperm.xlu0 %3135, %v2522
        %v3137 = vpop.permute.xlu0 %3136
        %3140 = vset.pattern.permute.xlu0 0
        %3141 = vperm.xlu0 %3140, %v2523
        %v3142 = vpop.permute.xlu0 %3141
        %3145 = vset.pattern.permute.xlu0 0
        %3146 = vperm.xlu0 %3145, %v2524
        %v3147 = vpop.permute.xlu0 %3146
        %3150 = vset.pattern.permute.xlu0 0
        %3151 = vperm.xlu0 %3150, %v2525
        %v3152 = vpop.permute.xlu0 %3151
        %3155 = vset.pattern.permute.xlu0 0
        %3156 = vperm.xlu0 %3155, %v2526
        %v3157 = vpop.permute.xlu0 %3156
        %3160 = vset.pattern.permute.xlu0 0
        %3161 = vperm.xlu0 %3160, %v2527
        %v3162 = vpop.permute.xlu0 %3161
        %3165 = vset.pattern.permute.xlu0 0
        %3166 = vperm.xlu0 %3165, %v2528
        %v3167 = vpop.permute.xlu0 %3166
        %3170 = vset.pattern.permute.xlu0 0
        %3171 = vperm.xlu0 %3170, %v2529
        %v3172 = vpop.permute.xlu0 %3171
        %3175 = vset.pattern.permute.xlu0 0
        %3176 = vperm.xlu0 %3175, %v2530
        %v3177 = vpop.permute.xlu0 %3176
        %3180 = vset.pattern.permute.xlu0 0
        %3181 = vperm.xlu0 %3180, %v2531
        %v3182 = vpop.permute.xlu0 %3181
        %3185 = vset.pattern.permute.xlu0 0
        %3186 = vperm.xlu0 %3185, %v2532
        %v3187 = vpop.permute.xlu0 %3186
        %3190 = vset.pattern.permute.xlu0 0
        %3191 = vperm.xlu0 %3190, %v2533
        %v3192 = vpop.permute.xlu0 %3191
        %3195 = vset.pattern.permute.xlu0 0
        %3196 = vperm.xlu0 %3195, %v2534
        %v3197 = vpop.permute.xlu0 %3196
        %3200 = vset.pattern.permute.xlu0 0
        %3201 = vperm.xlu0 %3200, %v2535
        %v3202 = vpop.permute.xlu0 %3201
        %3205 = vset.pattern.permute.xlu0 0
        %3206 = vperm.xlu0 %3205, %v2536
        %v3207 = vpop.permute.xlu0 %3206
        %3210 = vset.pattern.permute.xlu0 0
        %3211 = vperm.xlu0 %3210, %v2537
        %v3212 = vpop.permute.xlu0 %3211
        %3215 = vset.pattern.permute.xlu0 0
        %3216 = vperm.xlu0 %3215, %v2538
        %v3217 = vpop.permute.xlu0 %3216
        %3220 = vset.pattern.permute.xlu0 0
        %3221 = vperm.xlu0 %3220, %v2539
        %v3222 = vpop.permute.xlu0 %3221
        %3225 = vset.pattern.permute.xlu0 0
        %3226 = vperm.xlu0 %3225, %v2540
        %v3227 = vpop.permute.xlu0 %3226
        %3230 = vset.pattern.permute.xlu0 0
        %3231 = vperm.xlu0 %3230, %v2541
        %v3232 = vpop.permute.xlu0 %3231
        %3235 = vset.pattern.permute.xlu0 0
        %3236 = vperm.xlu0 %3235, %v2542
        %v3237 = vpop.permute.xlu0 %3236
        %3240 = vset.pattern.permute.xlu0 0
        %3241 = vperm.xlu0 %3240, %v2543
        %v3242 = vpop.permute.xlu0 %3241
        %3245 = vset.pattern.permute.xlu0 0
        %3246 = vperm.xlu0 %3245, %v2544
        %v3247 = vpop.permute.xlu0 %3246
        %v3249 = vmul.f32 %v3057, %v3092
        %v3250 = vmul.f32 %v3058, %v3097
        %v3251 = vmul.f32 %v3059, %v3102
        %v3252 = vmul.f32 %v3060, %v3107
        %v3253 = vmul.f32 %v3061, %v3112
        %v3254 = vmul.f32 %v3062, %v3117
        %v3255 = vmul.f32 %v3063, %v3122
        %v3256 = vmul.f32 %v3064, %v3127
        %v3257 = vmul.f32 %v3065, %v3132
        %v3258 = vmul.f32 %v3066, %v3137
        %v3259 = vmul.f32 %v3067, %v3142
        %v3260 = vmul.f32 %v3068, %v3147
        %v3261 = vmul.f32 %v3069, %v3152
        %v3262 = vmul.f32 %v3070, %v3157
        %v3263 = vmul.f32 %v3071, %v3162
        %v3264 = vmul.f32 %v3072, %v3167
        %v3265 = vmul.f32 %v3073, %v3172
        %v3266 = vmul.f32 %v3074, %v3177
        %v3267 = vmul.f32 %v3075, %v3182
        %v3268 = vmul.f32 %v3076, %v3187
        %v3269 = vmul.f32 %v3077, %v3192
        %v3270 = vmul.f32 %v3078, %v3197
        %v3271 = vmul.f32 %v3079, %v3202
        %v3272 = vmul.f32 %v3080, %v3207
        %v3273 = vmul.f32 %v3081, %v3212
        %v3274 = vmul.f32 %v3082, %v3217
        %v3275 = vmul.f32 %v3083, %v3222
        %v3276 = vmul.f32 %v3084, %v3227
        %v3277 = vmul.f32 %v3085, %v3232
        %v3278 = vmul.f32 %v3086, %v3237
        %v3279 = vmul.f32 %v3087, %v3242
        %v3280 = vmul.f32 %v3088, %v3247
        %v3281 = vadd.f32 %v3249, %v3250
        %v3282 = vadd.f32 %v3281, %v3251
        %v3283 = vadd.f32 %v3282, %v3252
        %v3284 = vadd.f32 %v3283, %v3253
        %v3285 = vadd.f32 %v3284, %v3254
        %v3286 = vadd.f32 %v3285, %v3255
        %v3287 = vadd.f32 %v3286, %v3256
        %v3288 = vadd.f32 %v3287, %v3257
        %v3289 = vadd.f32 %v3288, %v3258
        %v3290 = vadd.f32 %v3289, %v3259
        %v3291 = vadd.f32 %v3290, %v3260
        %v3292 = vadd.f32 %v3291, %v3261
        %v3293 = vadd.f32 %v3292, %v3262
        %v3294 = vadd.f32 %v3293, %v3263
        %v3295 = vadd.f32 %v3294, %v3264
        %v3296 = vadd.f32 %v3295, %v3265
        %v3297 = vadd.f32 %v3296, %v3266
        %v3298 = vadd.f32 %v3297, %v3267
        %v3299 = vadd.f32 %v3298, %v3268
        %v3300 = vadd.f32 %v3299, %v3269
        %v3301 = vadd.f32 %v3300, %v3270
        %v3302 = vadd.f32 %v3301, %v3271
        %v3303 = vadd.f32 %v3302, %v3272
        %v3304 = vadd.f32 %v3303, %v3273
        %v3305 = vadd.f32 %v3304, %v3274
        %v3306 = vadd.f32 %v3305, %v3275
        %v3307 = vadd.f32 %v3306, %v3276
        %v3308 = vadd.f32 %v3307, %v3277
        %v3309 = vadd.f32 %v3308, %v3278
        %v3310 = vadd.f32 %v3309, %v3279
        %v3311 = vadd.f32 %v3310, %v3280
        %v3312 = vrot.slane %v3311, 4
        %v3313 = vadd.f32 %v3311, %v3312
        %v3314 = vrot.slane %v3313, 2
        %v3315 = vadd.f32 %v3313, %v3314
        %v3316 = vrot.slane %v3315, 1
        %v3317 = vadd.f32 %v3315, %v3316
        %v3318 = vmul.f32 %v3317, 0.00390625
        %v3319 = vmax.f32 %v3249, %v3253
        %v3320 = vmax.f32 %v3250, %v3254
        %v3321 = vmax.f32 %v3251, %v3255
        %v3322 = vmax.f32 %v3252, %v3256
        %v3323 = vmax.f32 %v3319, %v3257
        %v3324 = vmax.f32 %v3320, %v3258
        %v3325 = vmax.f32 %v3321, %v3259
        %v3326 = vmax.f32 %v3322, %v3260
        %v3327 = vmax.f32 %v3323, %v3261
        %v3328 = vmax.f32 %v3324, %v3262
        %v3329 = vmax.f32 %v3325, %v3263
        %v3330 = vmax.f32 %v3326, %v3264
        %v3331 = vmax.f32 %v3327, %v3265
        %v3332 = vmax.f32 %v3328, %v3266
        %v3333 = vmax.f32 %v3329, %v3267
        %v3334 = vmax.f32 %v3330, %v3268
        %v3335 = vmax.f32 %v3331, %v3269
        %v3336 = vmax.f32 %v3332, %v3270
        %v3337 = vmax.f32 %v3333, %v3271
        %v3338 = vmax.f32 %v3334, %v3272
        %v3339 = vmax.f32 %v3335, %v3273
        %v3340 = vmax.f32 %v3336, %v3274
        %v3341 = vmax.f32 %v3337, %v3275
        %v3342 = vmax.f32 %v3338, %v3276
        %v3343 = vmax.f32 %v3339, %v3277
        %v3344 = vmax.f32 %v3340, %v3278
        %v3345 = vmax.f32 %v3341, %v3279
        %v3346 = vmax.f32 %v3342, %v3280
        %v3347 = vmax.f32 %v3343, %v3344
        %v3348 = vmax.f32 %v3345, %v3346
        %v3349 = vmax.f32 %v3347, %v3348
        %v3350 = vrot.slane %v3349, 4
        %v3351 = vmax.f32 %v3349, %v3350
        %v3352 = vrot.slane %v3351, 2
        %v3353 = vmax.f32 %v3351, %v3352
        %v3354 = vrot.slane %v3353, 1
        %v3355 = vmax.f32 %v3353, %v3354
        %vm3356 = vcmask 1040384
        %v3357 = vsel %vm3356, %v3318, %v3355
        %v3358 = vld [vmem:[#allocation11] sm:$0xff]
        %v3359 = vld [vmem:[#allocation11 + $0x8] sm:$0xff]
        %v3360 = vld [vmem:[#allocation11 + $0x10] sm:$0xff]
        %v3361 = vld [vmem:[#allocation11 + $0x18] sm:$0xff]
        %v3362 = vld [vmem:[#allocation11 + $0x20] sm:$0xff]
        %v3363 = vld [vmem:[#allocation11 + $0x28] sm:$0xff]
        %v3364 = vld [vmem:[#allocation11 + $0x30] sm:$0xff]
        %v3365 = vld [vmem:[#allocation11 + $0x38] sm:$0xff]
        %v3366 = vld [vmem:[#allocation11 + $0x40] sm:$0xff]
        %v3367 = vld [vmem:[#allocation11 + $0x48] sm:$0xff]
        %v3368 = vld [vmem:[#allocation11 + $0x50] sm:$0xff]
        %v3369 = vld [vmem:[#allocation11 + $0x58] sm:$0xff]
        %v3370 = vld [vmem:[#allocation11 + $0x60] sm:$0xff]
        %v3371 = vld [vmem:[#allocation11 + $0x68] sm:$0xff]
        %v3372 = vld [vmem:[#allocation11 + $0x70] sm:$0xff]
        %v3373 = vld [vmem:[#allocation11 + $0x78] sm:$0xff]
        %3374 = vmatprep.subr.mxu0 0.0
        %3375 = vmatpush1.msra.mxu0 %v3358
        %3376 = vmatprep.subr.mxu0 0.0
        %3377 = vmatpush1.msra.mxu0 %v3359
        %3378 = vmatprep.subr.mxu0 0.0
        %3379 = vmatpush1.msra.mxu0 %v3360
        %3380 = vmatprep.subr.mxu0 0.0
        %3381 = vmatpush1.msra.mxu0 %v3361
        %3382 = vmatprep.subr.mxu0 0.0
        %3383 = vmatpush1.msra.mxu0 %v3362
        %3384 = vmatprep.subr.mxu0 0.0
        %3385 = vmatpush1.msra.mxu0 %v3363
        %3386 = vmatprep.subr.mxu0 0.0
        %3387 = vmatpush1.msra.mxu0 %v3364
        %3388 = vmatprep.subr.mxu0 0.0
        %3389 = vmatpush1.msra.mxu0 %v3365
        %3390 = vmatprep.subr.mxu0 0.0
        %3391 = vmatpush1.msra.mxu0 %v3366
        %3392 = vmatprep.subr.mxu0 0.0
        %3393 = vmatpush1.msra.mxu0 %v3367
        %3394 = vmatprep.subr.mxu0 0.0
        %3395 = vmatpush1.msra.mxu0 %v3368
        %3396 = vmatprep.subr.mxu0 0.0
        %3397 = vmatpush1.msra.mxu0 %v3369
        %3398 = vmatprep.subr.mxu0 0.0
        %3399 = vmatpush1.msra.mxu0 %v3370
        %3400 = vmatprep.subr.mxu0 0.0
        %3401 = vmatpush1.msra.mxu0 %v3371
        %3402 = vmatprep.subr.mxu0 0.0
        %3403 = vmatpush1.msra.mxu0 %v3372
        %3404 = vmatprep.subr.mxu0 0.0
        %3405 = vmatpush1.msra.mxu0 %v3373
        %3406 = vmatprep.subr.mxu0 0.0
        %3407 = vmatpush1.msra.mxu0 0.0
        %3408 = vmatprep.subr.mxu0 0.0
        %3409 = vmatpush1.msra.mxu0 0.0
        %3410 = vmatprep.subr.mxu0 0.0
        %3411 = vmatpush1.msra.mxu0 0.0
        %3412 = vmatprep.subr.mxu0 0.0
        %3413 = vmatpush1.msra.mxu0 0.0
        %3414 = vmatprep.subr.mxu0 0.0
        %3415 = vmatpush1.msra.mxu0 0.0
        %3416 = vmatprep.subr.mxu0 0.0
        %3417 = vmatpush1.msra.mxu0 0.0
        %3418 = vmatprep.subr.mxu0 0.0
        %3419 = vmatpush1.msra.mxu0 0.0
        %3420 = vmatprep.subr.mxu0 0.0
        %3421 = vmatpush1.msra.mxu0 0.0
        %3422 = vmatprep.subr.mxu0 0.0
        %3423 = vmatpush1.msra.mxu0 0.0
        %3424 = vmatprep.subr.mxu0 0.0
        %3425 = vmatpush1.msra.mxu0 0.0
        %3426 = vmatprep.subr.mxu0 0.0
        %3427 = vmatpush1.msra.mxu0 0.0
        %3428 = vmatprep.subr.mxu0 0.0
        %3429 = vmatpush1.msra.mxu0 0.0
        %3430 = vmatprep.subr.mxu0 0.0
        %3431 = vmatpush1.msra.mxu0 0.0
        %3432 = vmatprep.subr.mxu0 0.0
        %3433 = vmatpush1.msra.mxu0 0.0
        %3434 = vmatprep.subr.mxu0 0.0
        %3435 = vmatpush1.msra.mxu0 0.0
        %3436 = vmatprep.subr.mxu0 0.0
        %3437 = vmatpush1.msra.mxu0 0.0
        %3438 = vmatprep.mubr.f32.mxu0 0.0
        %3439 = vmatmul.mubr.f32.gmra.mrb[0].mxu0 %v3357
        %v3440 = vpop.f32.mrb[0].mxu0
        %v3441 = vadd.f32 0.0, %v3440
        %v3442 = vpop.f32.mrb[0].mxu0
        %3443 = vdwg.mxu0
        %v3444 = vmax.f32 %v3441, 0.0
        %v3445 = vld [vmem:[#allocation13] sm:$0xff]
        %vm3446 = vcmask 64512
        %v3448 = vsel %vm3446, %v3444, 0
        %3450 = vmatprep.subr.mxu0 0.0
        %3451 = vmatpush1.msra.mxu0 %v3445
        %3452 = vmatprep.subr.mxu0 0.0
        %3453 = vmatpush1.msra.mxu0 0.0
        %3454 = vmatprep.subr.mxu0 0.0
        %3455 = vmatpush1.msra.mxu0 0.0
        %3456 = vmatprep.subr.mxu0 0.0
        %3457 = vmatpush1.msra.mxu0 0.0
        %3458 = vmatprep.subr.mxu0 0.0
        %3459 = vmatpush1.msra.mxu0 0.0
        %3460 = vmatprep.subr.mxu0 0.0
        %3461 = vmatpush1.msra.mxu0 0.0
        %3462 = vmatprep.subr.mxu0 0.0
        %3463 = vmatpush1.msra.mxu0 0.0
        %3464 = vmatprep.subr.mxu0 0.0
        %3465 = vmatpush1.msra.mxu0 0.0
        %3466 = vmatprep.subr.mxu0 0.0
        %3467 = vmatpush1.msra.mxu0 0.0
        %3468 = vmatprep.subr.mxu0 0.0
        %3469 = vmatpush1.msra.mxu0 0.0
        %3470 = vmatprep.subr.mxu0 0.0
        %3471 = vmatpush1.msra.mxu0 0.0
        %3472 = vmatprep.subr.mxu0 0.0
        %3473 = vmatpush1.msra.mxu0 0.0
        %3474 = vmatprep.subr.mxu0 0.0
        %3475 = vmatpush1.msra.mxu0 0.0
        %3476 = vmatprep.subr.mxu0 0.0
        %3477 = vmatpush1.msra.mxu0 0.0
        %3478 = vmatprep.subr.mxu0 0.0
        %3479 = vmatpush1.msra.mxu0 0.0
        %3480 = vmatprep.subr.mxu0 0.0
        %3481 = vmatpush1.msra.mxu0 0.0
        %3482 = vmatprep.subr.mxu0 0.0
        %3483 = vmatpush1.msra.mxu0 0.0
        %3484 = vmatprep.subr.mxu0 0.0
        %3485 = vmatpush1.msra.mxu0 0.0
        %3486 = vmatprep.subr.mxu0 0.0
        %3487 = vmatpush1.msra.mxu0 0.0
        %3488 = vmatprep.subr.mxu0 0.0
        %3489 = vmatpush1.msra.mxu0 0.0
        %3490 = vmatprep.subr.mxu0 0.0
        %3491 = vmatpush1.msra.mxu0 0.0
        %3492 = vmatprep.subr.mxu0 0.0
        %3493 = vmatpush1.msra.mxu0 0.0
        %3494 = vmatprep.subr.mxu0 0.0
        %3495 = vmatpush1.msra.mxu0 0.0
        %3496 = vmatprep.subr.mxu0 0.0
        %3497 = vmatpush1.msra.mxu0 0.0
        %3498 = vmatprep.subr.mxu0 0.0
        %3499 = vmatpush1.msra.mxu0 0.0
        %3500 = vmatprep.subr.mxu0 0.0
        %3501 = vmatpush1.msra.mxu0 0.0
        %3502 = vmatprep.subr.mxu0 0.0
        %3503 = vmatpush1.msra.mxu0 0.0
        %3504 = vmatprep.subr.mxu0 0.0
        %3505 = vmatpush1.msra.mxu0 0.0
        %3506 = vmatprep.subr.mxu0 0.0
        %3507 = vmatpush1.msra.mxu0 0.0
        %3508 = vmatprep.subr.mxu0 0.0
        %3509 = vmatpush1.msra.mxu0 0.0
        %3510 = vmatprep.subr.mxu0 0.0
        %3511 = vmatpush1.msra.mxu0 0.0
        %3512 = vmatprep.subr.mxu0 0.0
        %3513 = vmatpush1.msra.mxu0 0.0
        %3514 = vmatprep.mubr.f32.mxu0 0.0
        %3515 = vmatmul.mubr.f32.gmra.mrb[0].mxu0 %v3448
        %v3516 = vpop.f32.mrb[0].mxu0
        %v3517 = vadd.f32 0.0, %v3516
        %v3518 = vpop.f32.mrb[0].mxu0
        %3519 = vdwg.mxu0
        %v3521 = vrot.slane %v3517, 1
        %v3523 = vadd.f32 %v3517, %v3521
        %v3524 = vsub.f32 0.0, %v3523
        %v3525 = vmul.f32 %v3524, 1.442695
        %v3526 = vpow.pop %v3525
        %v3527 = vadd.f32 %v3526, 1.0
        %v3528 = vrcp.pop %v3527
        %v3529 = vlaneseq
        %v3530 = vshrl.u32 %v3529, 7
        %v3531 = vsub.s32 0, %v3530
        %v3532 = vrot.slane %v3528, %v3531
        %v3533 = vmul.f32 %v3249, %v3532
        %v3534 = vmul.f32 %v3250, %v3532
        %v3535 = vmul.f32 %v3251, %v3532
        %v3536 = vmul.f32 %v3252, %v3532
        %v3537 = vmul.f32 %v3253, %v3532
        %v3538 = vmul.f32 %v3254, %v3532
        %v3539 = vmul.f32 %v3255, %v3532
        %v3540 = vmul.f32 %v3256, %v3532
        %v3541 = vmul.f32 %v3257, %v3532
        %v3542 = vmul.f32 %v3258, %v3532
        %v3543 = vmul.f32 %v3259, %v3532
        %v3544 = vmul.f32 %v3260, %v3532
        %v3545 = vmul.f32 %v3261, %v3532
        %v3546 = vmul.f32 %v3262, %v3532
        %v3547 = vmul.f32 %v3263, %v3532
        %v3548 = vmul.f32 %v3264, %v3532
        %v3549 = vmul.f32 %v3265, %v3532
        %v3550 = vmul.f32 %v3266, %v3532
        %v3551 = vmul.f32 %v3267, %v3532
        %v3552 = vmul.f32 %v3268, %v3532
        %v3553 = vmul.f32 %v3269, %v3532
        %v3554 = vmul.f32 %v3270, %v3532
        %v3555 = vmul.f32 %v3271, %v3532
        %v3556 = vmul.f32 %v3272, %v3532
        %v3557 = vmul.f32 %v3273, %v3532
        %v3558 = vmul.f32 %v3274, %v3532
        %v3559 = vmul.f32 %v3275, %v3532
        %v3560 = vmul.f32 %v3276, %v3532
        %v3561 = vmul.f32 %v3277, %v3532
        %v3562 = vmul.f32 %v3278, %v3532
        %v3563 = vmul.f32 %v3279, %v3532
        %v3564 = vmul.f32 %v3280, %v3532
        %3565 = vxpose.xlu0.b32.start [1/16] %v3533, 128
        %3566 = vxpose.xlu0.b32.cont [2/16] %v3534, 128
        %3567 = vxpose.xlu0.b32.cont [3/16] %v3535, 128
        %3568 = vxpose.xlu0.b32.cont [4/16] %v3536, 128
        %3569 = vxpose.xlu0.b32.cont [5/16] %v3537, 128
        %3570 = vxpose.xlu0.b32.cont [6/16] %v3538, 128
        %3571 = vxpose.xlu0.b32.cont [7/16] %v3539, 128
        %3572 = vxpose.xlu0.b32.cont [8/16] %v3540, 128
        %3573 = vxpose.xlu0.b32.cont [9/16] %v3541, 128
        %3574 = vxpose.xlu0.b32.cont [10/16] %v3542, 128
        %3575 = vxpose.xlu0.b32.cont [11/16] %v3543, 128
        %3576 = vxpose.xlu0.b32.cont [12/16] %v3544, 128
        %3577 = vxpose.xlu0.b32.cont [13/16] %v3545, 128
        %3578 = vxpose.xlu0.b32.cont [14/16] %v3546, 128
        %3579 = vxpose.xlu0.b32.cont [15/16] %v3547, 128
        %3580 = vxpose.xlu0.b32.end [16/16] %v3548, 128
        %v3581 = vpop.trf.xlu0
        %v3582 = vpop.trf.xlu0
        %v3583 = vpop.trf.xlu0
        %v3584 = vpop.trf.xlu0
        %v3585 = vpop.trf.xlu0
        %v3586 = vpop.trf.xlu0
        %v3587 = vpop.trf.xlu0
        %v3588 = vpop.trf.xlu0
        %v3589 = vpop.trf.xlu0
        %v3590 = vpop.trf.xlu0
        %v3591 = vpop.trf.xlu0
        %v3592 = vpop.trf.xlu0
        %v3593 = vpop.trf.xlu0
        %v3594 = vpop.trf.xlu0
        %v3595 = vpop.trf.xlu0
        %v3596 = vpop.trf.xlu0
        %3597 = vxpose.xlu0.b32.start [1/16] %v3549, 128
        %3598 = vxpose.xlu0.b32.cont [2/16] %v3550, 128
        %3599 = vxpose.xlu0.b32.cont [3/16] %v3551, 128
        %3600 = vxpose.xlu0.b32.cont [4/16] %v3552, 128
        %3601 = vxpose.xlu0.b32.cont [5/16] %v3553, 128
        %3602 = vxpose.xlu0.b32.cont [6/16] %v3554, 128
        %3603 = vxpose.xlu0.b32.cont [7/16] %v3555, 128
        %3604 = vxpose.xlu0.b32.cont [8/16] %v3556, 128
        %3605 = vxpose.xlu0.b32.cont [9/16] %v3557, 128
        %3606 = vxpose.xlu0.b32.cont [10/16] %v3558, 128
        %3607 = vxpose.xlu0.b32.cont [11/16] %v3559, 128
        %3608 = vxpose.xlu0.b32.cont [12/16] %v3560, 128
        %3609 = vxpose.xlu0.b32.cont [13/16] %v3561, 128
        %3610 = vxpose.xlu0.b32.cont [14/16] %v3562, 128
        %3611 = vxpose.xlu0.b32.cont [15/16] %v3563, 128
        %3612 = vxpose.xlu0.b32.end [16/16] %v3564, 128
        %v3613 = vpop.trf.xlu0
        %v3614 = vpop.trf.xlu0
        %v3615 = vpop.trf.xlu0
        %v3616 = vpop.trf.xlu0
        %v3617 = vpop.trf.xlu0
        %v3618 = vpop.trf.xlu0
        %v3619 = vpop.trf.xlu0
        %v3620 = vpop.trf.xlu0
        %v3621 = vpop.trf.xlu0
        %v3622 = vpop.trf.xlu0
        %v3623 = vpop.trf.xlu0
        %v3624 = vpop.trf.xlu0
        %v3625 = vpop.trf.xlu0
        %v3626 = vpop.trf.xlu0
        %v3627 = vpop.trf.xlu0
        %v3628 = vpop.trf.xlu0
        %v3629 = vadd.f32 %v3581, %v3582
        %v3630 = vadd.f32 %v3629, %v3583
        %v3631 = vadd.f32 %v3630, %v3584
        %v3632 = vadd.f32 %v3631, %v3585
        %v3633 = vadd.f32 %v3632, %v3586
        %v3634 = vadd.f32 %v3633, %v3587
        %v3635 = vadd.f32 %v3634, %v3588
        %v3636 = vadd.f32 %v3635, %v3589
        %v3637 = vadd.f32 %v3636, %v3590
        %v3638 = vadd.f32 %v3637, %v3591
        %v3639 = vadd.f32 %v3638, %v3592
        %v3640 = vadd.f32 %v3639, %v3593
        %v3641 = vadd.f32 %v3640, %v3594
        %v3642 = vadd.f32 %v3641, %v3595
        %v3643 = vadd.f32 %v3642, %v3596
        %v3644 = vrot.slane %v3643, 4
        %v3645 = vadd.f32 %v3643, %v3644
        %v3646 = vrot.slane %v3645, 2
        %v3647 = vadd.f32 %v3645, %v3646
        %v3648 = vrot.slane %v3647, 1
        %v3649 = vadd.f32 %v3647, %v3648
        %v3650 = vadd.f32 %v3613, %v3614
        %v3651 = vadd.f32 %v3650, %v3615
        %v3652 = vadd.f32 %v3651, %v3616
        %v3653 = vadd.f32 %v3652, %v3617
        %v3654 = vadd.f32 %v3653, %v3618
        %v3655 = vadd.f32 %v3654, %v3619
        %v3656 = vadd.f32 %v3655, %v3620
        %v3657 = vadd.f32 %v3656, %v3621
        %v3658 = vadd.f32 %v3657, %v3622
        %v3659 = vadd.f32 %v3658, %v3623
        %v3660 = vadd.f32 %v3659, %v3624
        %v3661 = vadd.f32 %v3660, %v3625
        %v3662 = vadd.f32 %v3661, %v3626
        %v3663 = vadd.f32 %v3662, %v3627
        %v3664 = vadd.f32 %v3663, %v3628
        %v3665 = vrot.slane %v3664, 4
        %v3666 = vadd.f32 %v3664, %v3665
        %v3667 = vrot.slane %v3666, 2
        %v3668 = vadd.f32 %v3666, %v3667
        %v3669 = vrot.slane %v3668, 1
        %v3670 = vadd.f32 %v3668, %v3669
        %v3671 = vmax.f32 %v3581, %v3583
        %v3672 = vmax.f32 %v3582, %v3584
        %v3673 = vmax.f32 %v3671, %v3585
        %v3674 = vmax.f32 %v3672, %v3586
        %v3675 = vmax.f32 %v3673, %v3587
        %v3676 = vmax.f32 %v3674, %v3588
        %v3677 = vmax.f32 %v3675, %v3589
        %v3678 = vmax.f32 %v3676, %v3590
        %v3679 = vmax.f32 %v3677, %v3591
        %v3680 = vmax.f32 %v3678, %v3592
        %v3681 = vmax.f32 %v3679, %v3593
        %v3682 = vmax.f32 %v3680, %v3594
        %v3683 = vmax.f32 %v3681, %v3595
        %v3684 = vmax.f32 %v3682, %v3596
        %v3685 = vmax.f32 %v3683, %v3684
        %v3686 = vrot.slane %v3685, 4
        %v3687 = vmax.f32 %v3685, %v3686
        %v3688 = vrot.slane %v3687, 2
        %v3689 = vmax.f32 %v3687, %v3688
        %v3690 = vrot.slane %v3689, 1
        %v3691 = vmax.f32 %v3689, %v3690
        %v3692 = vmax.f32 %v3613, %v3615
        %v3693 = vmax.f32 %v3614, %v3616
        %v3694 = vmax.f32 %v3692, %v3617
        %v3695 = vmax.f32 %v3693, %v3618
        %v3696 = vmax.f32 %v3694, %v3619
        %v3697 = vmax.f32 %v3695, %v3620
        %v3698 = vmax.f32 %v3696, %v3621
        %v3699 = vmax.f32 %v3697, %v3622
        %v3700 = vmax.f32 %v3698, %v3623
        %v3701 = vmax.f32 %v3699, %v3624
        %v3702 = vmax.f32 %v3700, %v3625
        %v3703 = vmax.f32 %v3701, %v3626
        %v3704 = vmax.f32 %v3702, %v3627
        %v3705 = vmax.f32 %v3703, %v3628
        %v3706 = vmax.f32 %v3704, %v3705
        %v3707 = vrot.slane %v3706, 4
        %v3708 = vmax.f32 %v3706, %v3707
        %v3709 = vrot.slane %v3708, 2
        %v3710 = vmax.f32 %v3708, %v3709
        %v3711 = vrot.slane %v3710, 1
        %v3712 = vmax.f32 %v3710, %v3711
        %v3713 = vpack.c.bf16 %v3649, %v3649
        %v3714 = vpack.c.bf16 %v3670, %v3670
        %v3715 = vpack.c.bf16 %v3691, %v3691
        %v3716 = vpack.c.bf16 %v3712, %v3712
        %v3717 = vld [vmem:[#allocation14] sm:$0xff]
        %v3718 = vld [vmem:[#allocation14 + $0x8] sm:$0xff]
        %v3719 = vld [vmem:[#allocation14 + $0x10] sm:$0xff]
        %v3720 = vld [vmem:[#allocation14 + $0x18] sm:$0xff]
        %v3721 = vld [vmem:[#allocation14 + $0x20] sm:$0xff]
        %v3722 = vld [vmem:[#allocation14 + $0x28] sm:$0xff]
        %v3723 = vld [vmem:[#allocation14 + $0x30] sm:$0xff]
        %v3724 = vld [vmem:[#allocation14 + $0x38] sm:$0xff]
        %v3725 = vld [vmem:[#allocation14 + $0x40] sm:$0xff]
        %v3726 = vld [vmem:[#allocation14 + $0x48] sm:$0xff]
        %v3727 = vld [vmem:[#allocation14 + $0x50] sm:$0xff]
        %v3728 = vld [vmem:[#allocation14 + $0x58] sm:$0xff]
        %v3729 = vld [vmem:[#allocation14 + $0x60] sm:$0xff]
        %v3730 = vld [vmem:[#allocation14 + $0x68] sm:$0xff]
        %v3731 = vld [vmem:[#allocation14 + $0x70] sm:$0xff]
        %v3732 = vld [vmem:[#allocation14 + $0x78] sm:$0xff]
        %v3733 = vld [vmem:[#allocation14 + $0x80] sm:$0xff]
        %v3734 = vld [vmem:[#allocation14 + $0x88] sm:$0xff]
        %v3735 = vld [vmem:[#allocation14 + $0x90] sm:$0xff]
        %v3736 = vld [vmem:[#allocation14 + $0x98] sm:$0xff]
        %v3737 = vld [vmem:[#allocation14 + $0xa0] sm:$0xff]
        %v3738 = vld [vmem:[#allocation14 + $0xa8] sm:$0xff]
        %v3739 = vld [vmem:[#allocation14 + $0xb0] sm:$0xff]
        %v3740 = vld [vmem:[#allocation14 + $0xb8] sm:$0xff]
        %v3741 = vld [vmem:[#allocation14 + $0xc0] sm:$0xff]
        %v3742 = vld [vmem:[#allocation14 + $0xc8] sm:$0xff]
        %v3743 = vld [vmem:[#allocation14 + $0xd0] sm:$0xff]
        %v3744 = vld [vmem:[#allocation14 + $0xd8] sm:$0xff]
        %v3745 = vld [vmem:[#allocation14 + $0xe0] sm:$0xff]
        %v3746 = vld [vmem:[#allocation14 + $0xe8] sm:$0xff]
        %v3747 = vld [vmem:[#allocation14 + $0xf0] sm:$0xff]
        %v3748 = vld [vmem:[#allocation14 + $0xf8] sm:$0xff]
        %v3749 = vld [vmem:[#allocation14 + $0x100] sm:$0xff]
        %v3750 = vld [vmem:[#allocation14 + $0x108] sm:$0xff]
        %v3751 = vld [vmem:[#allocation14 + $0x110] sm:$0xff]
        %v3752 = vld [vmem:[#allocation14 + $0x118] sm:$0xff]
        %v3753 = vld [vmem:[#allocation14 + $0x120] sm:$0xff]
        %v3754 = vld [vmem:[#allocation14 + $0x128] sm:$0xff]
        %v3755 = vld [vmem:[#allocation14 + $0x130] sm:$0xff]
        %v3756 = vld [vmem:[#allocation14 + $0x138] sm:$0xff]
        %v3757 = vld [vmem:[#allocation14 + $0x140] sm:$0xff]
        %v3758 = vld [vmem:[#allocation14 + $0x148] sm:$0xff]
        %v3759 = vld [vmem:[#allocation14 + $0x150] sm:$0xff]
        %v3760 = vld [vmem:[#allocation14 + $0x158] sm:$0xff]
        %v3761 = vld [vmem:[#allocation14 + $0x160] sm:$0xff]
        %v3762 = vld [vmem:[#allocation14 + $0x168] sm:$0xff]
        %v3763 = vld [vmem:[#allocation14 + $0x170] sm:$0xff]
        %v3764 = vld [vmem:[#allocation14 + $0x178] sm:$0xff]
        %v3765 = vld [vmem:[#allocation14 + $0x180] sm:$0xff]
        %v3766 = vld [vmem:[#allocation14 + $0x188] sm:$0xff]
        %v3767 = vld [vmem:[#allocation14 + $0x190] sm:$0xff]
        %v3768 = vld [vmem:[#allocation14 + $0x198] sm:$0xff]
        %v3769 = vld [vmem:[#allocation14 + $0x1a0] sm:$0xff]
        %v3770 = vld [vmem:[#allocation14 + $0x1a8] sm:$0xff]
        %v3771 = vld [vmem:[#allocation14 + $0x1b0] sm:$0xff]
        %v3772 = vld [vmem:[#allocation14 + $0x1b8] sm:$0xff]
        %v3773 = vld [vmem:[#allocation14 + $0x1c0] sm:$0xff]
        %v3774 = vld [vmem:[#allocation14 + $0x1c8] sm:$0xff]
        %v3775 = vld [vmem:[#allocation14 + $0x1d0] sm:$0xff]
        %v3776 = vld [vmem:[#allocation14 + $0x1d8] sm:$0xff]
        %v3777 = vld [vmem:[#allocation14 + $0x1e0] sm:$0xff]
        %v3778 = vld [vmem:[#allocation14 + $0x1e8] sm:$0xff]
        %v3779 = vld [vmem:[#allocation14 + $0x1f0] sm:$0xff]
        %v3780 = vld [vmem:[#allocation14 + $0x1f8] sm:$0xff]
        %v3845 = vunpack.c.l.b16 %v3717
        %v3846 = vunpack.c.h.b16 %v3717
        %v3847 = vunpack.c.l.b16 %v3718
        %v3848 = vunpack.c.h.b16 %v3718
        %v3849 = vunpack.c.l.b16 %v3719
        %v3850 = vunpack.c.h.b16 %v3719
        %v3851 = vunpack.c.l.b16 %v3720
        %v3852 = vunpack.c.h.b16 %v3720
        %v3853 = vunpack.c.l.b16 %v3721
        %v3854 = vunpack.c.h.b16 %v3721
        %v3855 = vunpack.c.l.b16 %v3722
        %v3856 = vunpack.c.h.b16 %v3722
        %v3857 = vunpack.c.l.b16 %v3723
        %v3858 = vunpack.c.h.b16 %v3723
        %v3859 = vunpack.c.l.b16 %v3724
        %v3860 = vunpack.c.h.b16 %v3724
        %v3861 = vunpack.c.l.b16 %v3725
        %v3862 = vunpack.c.h.b16 %v3725
        %v3863 = vunpack.c.l.b16 %v3726
        %v3864 = vunpack.c.h.b16 %v3726
        %v3865 = vunpack.c.l.b16 %v3727
        %v3866 = vunpack.c.h.b16 %v3727
        %v3867 = vunpack.c.l.b16 %v3728
        %v3868 = vunpack.c.h.b16 %v3728
        %v3869 = vunpack.c.l.b16 %v3729
        %v3870 = vunpack.c.h.b16 %v3729
        %v3871 = vunpack.c.l.b16 %v3730
        %v3872 = vunpack.c.h.b16 %v3730
        %v3873 = vunpack.c.l.b16 %v3731
        %v3874 = vunpack.c.h.b16 %v3731
        %v3875 = vunpack.c.l.b16 %v3732
        %v3876 = vunpack.c.h.b16 %v3732
        %v3877 = vunpack.c.l.b16 %v3733
        %v3878 = vunpack.c.h.b16 %v3733
        %v3879 = vunpack.c.l.b16 %v3734
        %v3880 = vunpack.c.h.b16 %v3734
        %v3881 = vunpack.c.l.b16 %v3735
        %v3882 = vunpack.c.h.b16 %v3735
        %v3883 = vunpack.c.l.b16 %v3736
        %v3884 = vunpack.c.h.b16 %v3736
        %v3885 = vunpack.c.l.b16 %v3737
        %v3886 = vunpack.c.h.b16 %v3737
        %v3887 = vunpack.c.l.b16 %v3738
        %v3888 = vunpack.c.h.b16 %v3738
        %v3889 = vunpack.c.l.b16 %v3739
        %v3890 = vunpack.c.h.b16 %v3739
        %v3891 = vunpack.c.l.b16 %v3740
        %v3892 = vunpack.c.h.b16 %v3740
        %v3893 = vunpack.c.l.b16 %v3741
        %v3894 = vunpack.c.h.b16 %v3741
        %v3895 = vunpack.c.l.b16 %v3742
        %v3896 = vunpack.c.h.b16 %v3742
        %v3897 = vunpack.c.l.b16 %v3743
        %v3898 = vunpack.c.h.b16 %v3743
        %v3899 = vunpack.c.l.b16 %v3744
        %v3900 = vunpack.c.h.b16 %v3744
        %v3901 = vunpack.c.l.b16 %v3745
        %v3902 = vunpack.c.h.b16 %v3745
        %v3903 = vunpack.c.l.b16 %v3746
        %v3904 = vunpack.c.h.b16 %v3746
        %v3905 = vunpack.c.l.b16 %v3747
        %v3906 = vunpack.c.h.b16 %v3747
        %v3907 = vunpack.c.l.b16 %v3748
        %v3908 = vunpack.c.h.b16 %v3748
        %v3909 = vunpack.c.l.b16 %v3749
        %v3910 = vunpack.c.h.b16 %v3749
        %v3911 = vunpack.c.l.b16 %v3750
        %v3912 = vunpack.c.h.b16 %v3750
        %v3913 = vunpack.c.l.b16 %v3751
        %v3914 = vunpack.c.h.b16 %v3751
        %v3915 = vunpack.c.l.b16 %v3752
        %v3916 = vunpack.c.h.b16 %v3752
        %v3917 = vunpack.c.l.b16 %v3753
        %v3918 = vunpack.c.h.b16 %v3753
        %v3919 = vunpack.c.l.b16 %v3754
        %v3920 = vunpack.c.h.b16 %v3754
        %v3921 = vunpack.c.l.b16 %v3755
        %v3922 = vunpack.c.h.b16 %v3755
        %v3923 = vunpack.c.l.b16 %v3756
        %v3924 = vunpack.c.h.b16 %v3756
        %v3925 = vunpack.c.l.b16 %v3757
        %v3926 = vunpack.c.h.b16 %v3757
        %v3927 = vunpack.c.l.b16 %v3758
        %v3928 = vunpack.c.h.b16 %v3758
        %v3929 = vunpack.c.l.b16 %v3759
        %v3930 = vunpack.c.h.b16 %v3759
        %v3931 = vunpack.c.l.b16 %v3760
        %v3932 = vunpack.c.h.b16 %v3760
        %v3933 = vunpack.c.l.b16 %v3761
        %v3934 = vunpack.c.h.b16 %v3761
        %v3935 = vunpack.c.l.b16 %v3762
        %v3936 = vunpack.c.h.b16 %v3762
        %v3937 = vunpack.c.l.b16 %v3763
        %v3938 = vunpack.c.h.b16 %v3763
        %v3939 = vunpack.c.l.b16 %v3764
        %v3940 = vunpack.c.h.b16 %v3764
        %v3941 = vunpack.c.l.b16 %v3765
        %v3942 = vunpack.c.h.b16 %v3765
        %v3943 = vunpack.c.l.b16 %v3766
        %v3944 = vunpack.c.h.b16 %v3766
        %v3945 = vunpack.c.l.b16 %v3767
        %v3946 = vunpack.c.h.b16 %v3767
        %v3947 = vunpack.c.l.b16 %v3768
        %v3948 = vunpack.c.h.b16 %v3768
        %v3949 = vunpack.c.l.b16 %v3769
        %v3950 = vunpack.c.h.b16 %v3769
        %v3951 = vunpack.c.l.b16 %v3770
        %v3952 = vunpack.c.h.b16 %v3770
        %v3953 = vunpack.c.l.b16 %v3771
        %v3954 = vunpack.c.h.b16 %v3771
        %v3955 = vunpack.c.l.b16 %v3772
        %v3956 = vunpack.c.h.b16 %v3772
        %v3957 = vunpack.c.l.b16 %v3773
        %v3958 = vunpack.c.h.b16 %v3773
        %v3959 = vunpack.c.l.b16 %v3774
        %v3960 = vunpack.c.h.b16 %v3774
        %v3961 = vunpack.c.l.b16 %v3775
        %v3962 = vunpack.c.h.b16 %v3775
        %v3963 = vunpack.c.l.b16 %v3776
        %v3964 = vunpack.c.h.b16 %v3776
        %v3965 = vunpack.c.l.b16 %v3777
        %v3966 = vunpack.c.h.b16 %v3777
        %v3967 = vunpack.c.l.b16 %v3778
        %v3968 = vunpack.c.h.b16 %v3778
        %v3969 = vunpack.c.l.b16 %v3779
        %v3970 = vunpack.c.h.b16 %v3779
        %v3971 = vunpack.c.l.b16 %v3780
        %v3972 = vunpack.c.h.b16 %v3780
        %v3973 = vpack.c.b16 %v3847, %v3845
        %v3974 = vpack.c.b16 %v3848, %v3846
        %v3975 = vpack.c.b16 %v3851, %v3849
        %v3976 = vpack.c.b16 %v3852, %v3850
        %v3977 = vpack.c.b16 %v3855, %v3853
        %v3978 = vpack.c.b16 %v3856, %v3854
        %v3979 = vpack.c.b16 %v3859, %v3857
        %v3980 = vpack.c.b16 %v3860, %v3858
        %v3981 = vpack.c.b16 %v3863, %v3861
        %v3982 = vpack.c.b16 %v3864, %v3862
        %v3983 = vpack.c.b16 %v3867, %v3865
        %v3984 = vpack.c.b16 %v3868, %v3866
        %v3985 = vpack.c.b16 %v3871, %v3869
        %v3986 = vpack.c.b16 %v3872, %v3870
        %v3987 = vpack.c.b16 %v3875, %v3873
        %v3988 = vpack.c.b16 %v3876, %v3874
        %v3989 = vpack.c.b16 %v3879, %v3877
        %v3990 = vpack.c.b16 %v3880, %v3878
        %v3991 = vpack.c.b16 %v3883, %v3881
        %v3992 = vpack.c.b16 %v3884, %v3882
        %v3993 = vpack.c.b16 %v3887, %v3885
        %v3994 = vpack.c.b16 %v3888, %v3886
        %v3995 = vpack.c.b16 %v3891, %v3889
        %v3996 = vpack.c.b16 %v3892, %v3890
        %v3997 = vpack.c.b16 %v3895, %v3893
        %v3998 = vpack.c.b16 %v3896, %v3894
        %v3999 = vpack.c.b16 %v3899, %v3897
        %v4000 = vpack.c.b16 %v3900, %v3898
        %v4001 = vpack.c.b16 %v3903, %v3901
        %v4002 = vpack.c.b16 %v3904, %v3902
        %v4003 = vpack.c.b16 %v3907, %v3905
        %v4004 = vpack.c.b16 %v3908, %v3906
        %v4005 = vpack.c.b16 %v3911, %v3909
        %v4006 = vpack.c.b16 %v3912, %v3910
        %v4007 = vpack.c.b16 %v3915, %v3913
        %v4008 = vpack.c.b16 %v3916, %v3914
        %v4009 = vpack.c.b16 %v3919, %v3917
        %v4010 = vpack.c.b16 %v3920, %v3918
        %v4011 = vpack.c.b16 %v3923, %v3921
        %v4012 = vpack.c.b16 %v3924, %v3922
        %v4013 = vpack.c.b16 %v3927, %v3925
        %v4014 = vpack.c.b16 %v3928, %v3926
        %v4015 = vpack.c.b16 %v3931, %v3929
        %v4016 = vpack.c.b16 %v3932, %v3930
        %v4017 = vpack.c.b16 %v3935, %v3933
        %v4018 = vpack.c.b16 %v3936, %v3934
        %v4019 = vpack.c.b16 %v3939, %v3937
        %v4020 = vpack.c.b16 %v3940, %v3938
        %v4021 = vpack.c.b16 %v3943, %v3941
        %v4022 = vpack.c.b16 %v3944, %v3942
        %v4023 = vpack.c.b16 %v3947, %v3945
        %v4024 = vpack.c.b16 %v3948, %v3946
        %v4025 = vpack.c.b16 %v3951, %v3949
        %v4026 = vpack.c.b16 %v3952, %v3950
        %v4027 = vpack.c.b16 %v3955, %v3953
        %v4028 = vpack.c.b16 %v3956, %v3954
        %v4029 = vpack.c.b16 %v3959, %v3957
        %v4030 = vpack.c.b16 %v3960, %v3958
        %v4031 = vpack.c.b16 %v3963, %v3961
        %v4032 = vpack.c.b16 %v3964, %v3962
        %v4033 = vpack.c.b16 %v3967, %v3965
        %v4034 = vpack.c.b16 %v3968, %v3966
        %v4035 = vpack.c.b16 %v3971, %v3969
        %v4036 = vpack.c.b16 %v3972, %v3970
        %4101 = vmatprep.subr.bf16.mxu0 %v3974
        %4102 = vmatpush1.bf16.msra.mxu0 %v3973
        %4103 = vmatprep.subr.bf16.mxu0 %v3976
        %4104 = vmatpush1.bf16.msra.mxu0 %v3975
        %4105 = vmatprep.subr.bf16.mxu0 %v3978
        %4106 = vmatpush1.bf16.msra.mxu0 %v3977
        %4107 = vmatprep.subr.bf16.mxu0 %v3980
        %4108 = vmatpush1.bf16.msra.mxu0 %v3979
        %4109 = vmatprep.subr.bf16.mxu0 %v3982
        %4110 = vmatpush1.bf16.msra.mxu0 %v3981
        %4111 = vmatprep.subr.bf16.mxu0 %v3984
        %4112 = vmatpush1.bf16.msra.mxu0 %v3983
        %4113 = vmatprep.subr.bf16.mxu0 %v3986
        %4114 = vmatpush1.bf16.msra.mxu0 %v3985
        %4115 = vmatprep.subr.bf16.mxu0 %v3988
        %4116 = vmatpush1.bf16.msra.mxu0 %v3987
        %4117 = vmatprep.subr.bf16.mxu0 %v3990
        %4118 = vmatpush1.bf16.msra.mxu0 %v3989
        %4119 = vmatprep.subr.bf16.mxu0 %v3992
        %4120 = vmatpush1.bf16.msra.mxu0 %v3991
        %4121 = vmatprep.subr.bf16.mxu0 %v3994
        %4122 = vmatpush1.bf16.msra.mxu0 %v3993
        %4123 = vmatprep.subr.bf16.mxu0 %v3996
        %4124 = vmatpush1.bf16.msra.mxu0 %v3995
        %4125 = vmatprep.subr.bf16.mxu0 %v3998
        %4126 = vmatpush1.bf16.msra.mxu0 %v3997
        %4127 = vmatprep.subr.bf16.mxu0 %v4000
        %4128 = vmatpush1.bf16.msra.mxu0 %v3999
        %4129 = vmatprep.subr.bf16.mxu0 %v4002
        %4130 = vmatpush1.bf16.msra.mxu0 %v4001
        %4131 = vmatprep.subr.bf16.mxu0 %v4004
        %4132 = vmatpush1.bf16.msra.mxu0 %v4003
        %4133 = vmatprep.mubr.bf16.mxu0 %v3714
        %4134 = vmatmul.mubr.bf16.gmra.mrb[0].mxu0 %v3713
        %v4135 = vpop.f32.mrb[0].mxu0
        %v4136 = vadd.f32 0.0, %v4135
        %v4137 = vpop.f32.mrb[0].mxu0
        %v4138 = vadd.f32 0.0, %v4137
        %v4139 = vpop.f32.mrb[0].mxu0
        %v4140 = vpop.f32.mrb[0].mxu0
        %4141 = vdwg.mxu0
        %4142 = vmatprep.subr.bf16.mxu0 %v4006
        %4143 = vmatpush1.bf16.msra.mxu0 %v4005
        %4144 = vmatprep.subr.bf16.mxu0 %v4008
        %4145 = vmatpush1.bf16.msra.mxu0 %v4007
        %4146 = vmatprep.subr.bf16.mxu0 %v4010
        %4147 = vmatpush1.bf16.msra.mxu0 %v4009
        %4148 = vmatprep.subr.bf16.mxu0 %v4012
        %4149 = vmatpush1.bf16.msra.mxu0 %v4011
        %4150 = vmatprep.subr.bf16.mxu0 %v4014
        %4151 = vmatpush1.bf16.msra.mxu0 %v4013
        %4152 = vmatprep.subr.bf16.mxu0 %v4016
        %4153 = vmatpush1.bf16.msra.mxu0 %v4015
        %4154 = vmatprep.subr.bf16.mxu0 %v4018
        %4155 = vmatpush1.bf16.msra.mxu0 %v4017
        %4156 = vmatprep.subr.bf16.mxu0 %v4020
        %4157 = vmatpush1.bf16.msra.mxu0 %v4019
        %4158 = vmatprep.subr.bf16.mxu0 %v4022
        %4159 = vmatpush1.bf16.msra.mxu0 %v4021
        %4160 = vmatprep.subr.bf16.mxu0 %v4024
        %4161 = vmatpush1.bf16.msra.mxu0 %v4023
        %4162 = vmatprep.subr.bf16.mxu0 %v4026
        %4163 = vmatpush1.bf16.msra.mxu0 %v4025
        %4164 = vmatprep.subr.bf16.mxu0 %v4028
        %4165 = vmatpush1.bf16.msra.mxu0 %v4027
        %4166 = vmatprep.subr.bf16.mxu0 %v4030
        %4167 = vmatpush1.bf16.msra.mxu0 %v4029
        %4168 = vmatprep.subr.bf16.mxu0 %v4032
        %4169 = vmatpush1.bf16.msra.mxu0 %v4031
        %4170 = vmatprep.subr.bf16.mxu0 %v4034
        %4171 = vmatpush1.bf16.msra.mxu0 %v4033
        %4172 = vmatprep.subr.bf16.mxu0 %v4036
        %4173 = vmatpush1.bf16.msra.mxu0 %v4035
        %4174 = vmatprep.mubr.bf16.mxu0 %v3716
        %4175 = vmatmul.mubr.bf16.gmra.mrb[0].mxu0 %v3715
        %v4176 = vpop.f32.mrb[0].mxu0
        %v4177 = vadd.f32 %v4136, %v4176
        %v4178 = vpop.f32.mrb[0].mxu0
        %v4179 = vadd.f32 %v4138, %v4178
        %v4180 = vpop.f32.mrb[0].mxu0
        %v4181 = vpop.f32.mrb[0].mxu0
        %4182 = vdwg.mxu0
        %v4183 = vsub.f32 0.0, %v4177
        %v4184 = vsub.f32 0.0, %v4179
        %v4185 = vmul.f32 %v4183, 1.442695
        %v4186 = vpow.pop %v4185
        %v4187 = vmul.f32 %v4184, 1.442695
        %v4188 = vpow.pop %v4187
        %v4189 = vadd.f32 %v4186, 1.0
        %v4190 = vadd.f32 %v4188, 1.0
        %v4191 = vrcp.pop %v4189
        %v4192 = vrcp.pop %v4190
        %v4193 = vlaneseq
        %v4194 = vshrl.u32 %v4193, 7
        %v4195 = vsub.s32 0, %v4194
        %v4196 = vrot.slane %v4191, %v4195
        %v4197 = vlaneseq
        %v4198 = vshrl.u32 %v4197, 7
        %v4199 = vsub.s32 0, %v4198
        %v4200 = vrot.slane %v4192, %v4199
        %v4201 = vmul.f32 %v3581, %v4196
        %v4202 = vmul.f32 %v3613, %v4200
        %v4203 = vmul.f32 %v3582, %v4196
        %v4204 = vmul.f32 %v3614, %v4200
        %v4205 = vmul.f32 %v3583, %v4196
        %v4206 = vmul.f32 %v3615, %v4200
        %v4207 = vmul.f32 %v3584, %v4196
        %v4208 = vmul.f32 %v3616, %v4200
        %4209 = vst [vmem:[%s419] sm:$0xff] %v4201
        %4210 = vst [vmem:[%s419 + $0x8] sm:$0xff] %v4202
        %4211 = vst [vmem:[%s419 + $0x10] sm:$0xff] %v4203
        %4212 = vst [vmem:[%s419 + $0x18] sm:$0xff] %v4204
        %4213 = vst [vmem:[%s419 + $0x20] sm:$0xff] %v4205
        %4214 = vst [vmem:[%s419 + $0x28] sm:$0xff] %v4206
        %4215 = vst [vmem:[%s419 + $0x30] sm:$0xff] %v4207
        %4216 = vst [vmem:[%s419 + $0x38] sm:$0xff] %v4208
        %s4217 = sand.u32 %s210, 1
        %s4218 = scalar_lea.sflag [#allocation4], %s4217
        %s4219 = sand.u32 %s210, 1
        %s4220 = smul.addr %s4219, 64
        %s4221 = scalar_lea.vmem [#allocation16], %s4220
        // Predicated region
        $region85: #{adaptive_edge_connector.1} parent=51 // pred_check
          %p4222 = pneg %p220
        $region86: #{adaptive_edge_connector.1} parent=51 // pred_check_branch
          %4224 = sbr.rel (%p4222) target = $region88
        $region87: #{adaptive_edge_connector.1} parent=51 // pred_region
          %s4226 = ssub.s32 1024, 1024
          %4227 = vsyncadd %s4218, %s4226
          %s4228 = smul.addr %s29, 8
          %s4229 = smul.addr %s4228, 128
          %s4230 = scalar_lea.hbm %s8, %s4229
          %s4231 = sshll.u32 %s4221, 4
          %s4232 = int_to_ptr.vmem [resolvable:$true] %s4231
          %4237 = dma.vmem_to_hbm [thread:$0]  %s4232, 1024, %s4230, %s4218, 256, 256, 16
        $region88: #{adaptive_edge_connector.1} parent=51 // pred_fallthru
          _
      $region52: #{adaptive_edge_connector.1} parent=5 // pred_fallthru
        _
      %p4238 = scmp.le.s32.totalorder 2, %s24
      // Predicated region
      $region89: #{adaptive_edge_connector.1} parent=5 // pred_check
        %p4239 = pneg %p4238
      $region90: #{adaptive_edge_connector.1} parent=5 // pred_check_branch
        %4241 = sbr.rel (%p4239) target = $region92
      $region91: #{adaptive_edge_connector.1} parent=5 // pred_region
        %s4242 = ssub.s32 %s24, 2
        // Predicated region
        $region93: #{adaptive_edge_connector.1} parent=91 // pred_check
          %p4243 = pneg %p226
        $region94: #{adaptive_edge_connector.1} parent=91 // pred_check_branch
          %4245 = sbr.rel (%p4243) target = $region96
        $region95: #{adaptive_edge_connector.1} parent=91 // pred_region
          %s4246 = sand.u32 %s211, 1
          %s4247 = scalar_lea.sflag [#allocation4], %s4246
          %s4248 = sand.u32 %s211, 1
          %s4249 = smul.addr %s4248, 64
          %s4250 = scalar_lea.vmem [#allocation16], %s4249
          %4251 = dma.done %s4247, 1024
        $region96: #{adaptive_edge_connector.1} parent=91 // pred_fallthru
          _
      $region92: #{adaptive_edge_connector.1} parent=5 // pred_fallthru
        _
    $region6: #{adaptive_edge_connector.1} parent=1 // loop_footer
      %s28 = sadd.s32 1, %s24
    $region7: #{adaptive_edge_connector.1} parent=1 // loop_footer_branch
      %23 = sbr.rel target = $region3
    $region8: #{adaptive_edge_connector.1} parent=1 // loop_exit
      _
    %4252 = vsyncpa [#allocation3], 1
    %s4253 = scalar_lea.sflag [#allocation3], 1
    %4254 = vsyncpa %s4253, 1
    %4255 = vsyncpa [#allocation6], 1
    %4256 = vsyncpa [#allocation9], 1
    %4257 = vsyncpa [#allocation12], 1
    %4258 = vsyncpa [#allocation15], 1
    %4259 = vsyncpa [#allocation4], 1
    %s4260 = scalar_lea.sflag [#allocation4], 1
    %4261 = vsyncpa %s4260, 1

</llo_original>
